<compile_context>
chip_gen: v7x
topology: tpu7x:2x2x1
jax: 0.10.0
libtpu: 0.0.40
codegen_flags: <defaults>
</compile_context>

<pallas_src>
import jax
import jax.numpy as jnp
from jax.experimental import pallas as pl
from jax.experimental.pallas import tpu as pltpu

SC_PAD = 128   # scalar features padded to one full lane group


# ----------------------------------------------------------------------------
# Fused kernel: conv1..3 (+ReLU+2x2 maxpool), flatten, fc1+ReLU, fc2+sigmoid
# ----------------------------------------------------------------------------
def fused_cnn_kernel(p1_ref, sc_ref,
                     w1_ref, b1_ref, w2_ref, b2_ref, w3_ref, b3_ref,
                     wf1_ref, bf1_ref, wf2_ref, bf2_ref,
                     o_ref, col2, col3):

    def bias_relu_pool(acc, b_ref, n, H, W, Cout):
        # acc: (n*H*W, Cout) f32 conv output (rows in n-major, h, w order)
        acc = jnp.maximum(acc + b_ref[...], 0.0)            # bias + ReLU (f32)
        Ho, Wo = H // 2, W // 2
        # 2x2 max pool, stride 2 (elementwise maxima, lane dim untouched).
        y = acc.reshape(n * Ho, 2, W, Cout)
        y = jnp.maximum(y[:, 0, :, :], y[:, 1, :, :])        # (n*Ho, W, Cout)
        y = y.reshape(n * Ho, Wo, 2, Cout)
        y = jnp.maximum(y[:, :, 0, :], y[:, :, 1, :])        # (n*Ho, Wo, Cout)
        return y.reshape(n, Ho, Wo, Cout)

    def im2col(col_ref, x):
        # Every element of col_ref is written exactly once: the in-bounds
        # window per tap plus the 1-pixel strips that tap leaves uncovered.
        # (No full zero-init pass -> roughly half the store traffic.)
        n, H, W, C = x.shape
        for ky in range(3):
            for kx in range(3):
                dy, dx = ky - 1, kx - 1
                h0, h1 = max(0, -dy), H - max(0, dy)
                w0, w1 = max(0, -dx), W - max(0, dx)
                t = ky * 3 + kx
                lane = slice(t * C, (t + 1) * C)
                if h0 > 0:
                    col_ref[:, 0:h0, :, lane] = jnp.zeros((n, h0, W, C), col_ref.dtype)
                if h1 < H:
                    col_ref[:, h1:H, :, lane] = jnp.zeros((n, H - h1, W, C), col_ref.dtype)
                if w0 > 0:
                    col_ref[:, h0:h1, 0:w0, lane] = jnp.zeros((n, h1 - h0, w0, C), col_ref.dtype)
                if w1 < W:
                    col_ref[:, h0:h1, w1:W, lane] = jnp.zeros((n, h1 - h0, W - w1, C), col_ref.dtype)
                col_ref[:, h0:h1, w0:w1, lane] = x[:, h0 + dy:h1 + dy, w0 + dx:w1 + dx, :]

    # ---- conv1 (+ReLU+pool): patch slab built lane-dense in the XLA wrapper.
    nb, H, W, K1 = p1_ref.shape                               # K1 = 9*Cin
    acc1 = jnp.dot(p1_ref[...].reshape(nb * H * W, K1), w1_ref[...],
                   preferred_element_type=jnp.float32)
    x = bias_relu_pool(acc1, b1_ref, nb, H, W, 32)            # (nb, H/2, W/2, 32)

    # ---- conv2 (+ReLU+pool): single matmul, K = 9*32.
    _, H2, W2, _ = x.shape
    im2col(col2, x)
    acc2 = jnp.dot(col2[...].reshape(nb * H2 * W2, 9 * 32).astype(jnp.bfloat16),
                   w2_ref[...], preferred_element_type=jnp.float32)
    x = bias_relu_pool(acc2, b2_ref, nb, H2, W2, 64)          # (nb, H/4, W/4, 64)

    # ---- conv3 (+ReLU+pool): single matmul, K = 9*64.
    _, H4, W4, _ = x.shape
    im2col(col3, x)
    acc3 = jnp.dot(col3[...].reshape(nb * H4 * W4, 9 * 64).astype(jnp.bfloat16),
                   w3_ref[...], preferred_element_type=jnp.float32)
    x = bias_relu_pool(acc3, b3_ref, nb, H4, W4, 128)         # (nb, H/8, W/8, 128)

    # ---- flatten (NHWC order; fc1 image-weight rows pre-permuted to match)
    #      and fold the padded scalars in via a lane-aligned concat -> ONE fc1 matmul.
    _, Ho, Wo, C = x.shape
    pieces = [x[:, hh, ww, :] for hh in range(Ho) for ww in range(Wo)]   # (nb, 128) each
    pieces.append(sc_ref[...])                                           # (nb, SC_PAD)
    x_comb = jnp.concatenate(pieces, axis=-1).astype(jnp.bfloat16)       # (nb, flat+SC_PAD)

    h1 = jnp.dot(x_comb, wf1_ref[...], preferred_element_type=jnp.float32)
    h1 = jnp.maximum(h1 + bf1_ref[...], 0.0)                  # fc1 + ReLU
    y = jnp.dot(h1.astype(jnp.bfloat16), wf2_ref[...],
                preferred_element_type=jnp.float32) + bf2_ref[...]
    o_ref[...] = (1.0 / (1.0 + jnp.exp(-y))).astype(o_ref.dtype)         # sigmoid


# ----------------------------------------------------------------------------
# Forward wrapper: one pallas_call, batch-parallel grid, everything else VMEM-resident
# ----------------------------------------------------------------------------
def cnn_with_scalars_forward(kp, x_img_nchw, x_scalars):
    x = jnp.transpose(x_img_nchw, (0, 2, 3, 1)).astype(jnp.float32)      # NHWC
    N, H, W, Cin = x.shape
    assert H % 8 == 0 and W % 8 == 0, "three 2x2 pools need H, W divisible by 8"
    n_sc = x_scalars.shape[1]
    assert n_sc <= SC_PAD

    # conv1 im2col hoisted to XLA: lane-dense bf16 slab, row order (ky*3+kx)*Cin + c.
    xp = jnp.pad(x, ((0, 0), (1, 1), (1, 1), (0, 0)))
    p1 = jnp.concatenate(
        [xp[:, ky:ky + H, kx:kx + W, :] for ky in range(3) for kx in range(3)],
        axis=-1).astype(jnp.bfloat16)                                    # (N, H, W, 9*Cin)

    # Scalars zero-padded to a full 128-lane block (fc1 weight rows padded to match).
    sc = jnp.zeros((N, SC_PAD), jnp.float32).at[:, :n_sc].set(x_scalars.astype(jnp.float32))

    # Batch-parallel grid: NB = N for small batches (full blocks, always legal),
    # otherwise aligned 8-row batch blocks.
    NB = N if N <= 8 else 8
    grid = (pl.cdiv(N, NB),)
    H2, W2, H4, W4 = H // 2, W // 2, H // 4, W // 4

    def full(a):  # whole-array block, constant index map (weights / biases)
        return pl.BlockSpec(a.shape, lambda i, _nd=a.ndim: (0,) * _nd)

    return pl.pallas_call(
        fused_cnn_kernel,
        out_shape=jax.ShapeDtypeStruct((N, 1), jnp.float32),
        grid=grid,
        in_specs=[
            pl.BlockSpec((NB, H, W, 9 * Cin), lambda i: (i, 0, 0, 0)),   # conv1 patches
            pl.BlockSpec((NB, SC_PAD), lambda i: (i, 0)),                # padded scalars
            full(kp["w1"]), full(kp["b1"]),
            full(kp["w2"]), full(kp["b2"]),
            full(kp["w3"]), full(kp["b3"]),
            full(kp["wf1"]), full(kp["bf1"]),
            full(kp["wf2"]), full(kp["bf2"]),
        ],
        out_specs=pl.BlockSpec((NB, 1), lambda i: (i, 0)),
        scratch_shapes=[
            pltpu.VMEM((NB, H2, W2, 9 * 32), jnp.float32),   # conv2 im2col
            pltpu.VMEM((NB, H4, W4, 9 * 64), jnp.float32),   # conv3 im2col
        ],
        compiler_params=pltpu.CompilerParams(
            dimension_semantics=("parallel",),
            vmem_limit_bytes=64 * 1024 * 1024),
    )(p1, sc, kp["w1"], kp["b1"], kp["w2"], kp["b2"], kp["w3"], kp["b3"],
      kp["wf1"], kp["bf1"], kp["wf2"], kp["bf2"])


# ----------------------------------------------------------------------------
# Parameter construction (PyTorch layout) and one-time kernel-layout prep
# ----------------------------------------------------------------------------
def init_params(img_shape, n_scalars, key):
    c_in, h, w = img_shape
    flat = 128 * (h // 8) * (w // 8)
    ks = jax.random.split(key, 10)

    def conv_w(k, cout, cin):
        return jax.random.normal(k, (cout, cin, 3, 3), jnp.float32) / jnp.sqrt(cin * 9.0)

    def lin_w(k, cout, cin):
        return jax.random.normal(k, (cout, cin), jnp.float32) / jnp.sqrt(float(cin))

    p = {
        "c1w": conv_w(ks[0], 32, c_in), "c1b": jax.random.normal(ks[1], (32,)) * 0.01,
        "c2w": conv_w(ks[2], 64, 32),   "c2b": jax.random.normal(ks[3], (64,)) * 0.01,
        "c3w": conv_w(ks[4], 128, 64),  "c3b": jax.random.normal(ks[5], (128,)) * 0.01,
        "f1w": lin_w(ks[6], 64, flat + n_scalars),
        "f1b": jax.random.normal(ks[7], (64,)) * 0.01,
        "f2w": lin_w(ks[8], 1, 64),
        "f2b": jax.random.normal(ks[9], (1,)) * 0.01,
    }
    return p, flat


def prepare_kernel_params(p, img_shape, n_scalars):
    """One-time conversion from PyTorch layouts to the fused-kernel layouts."""
    _, h, w = img_shape
    ho, wo, c3 = h // 8, w // 8, 128
    flat = c3 * ho * wo

    def conv_w(wt):   # (Cout, Cin, 3, 3) -> (9*Cin, Cout), row = (ky*3+kx)*Cin + c
        cout, cin = wt.shape[0], wt.shape[1]
        return jnp.transpose(wt, (2, 3, 1, 0)).reshape(9 * cin, cout).astype(jnp.bfloat16)

    # fc1: permute image rows from PyTorch's NCHW flatten order (c*Ho*Wo + h*Wo + w)
    # to the kernel's NHWC order ((h*Wo+w)*C + c), then stack the (zero-padded)
    # scalar rows underneath -> a single merged fc1 weight matrix.
    f1w = p["f1w"]                                                # (64, flat + n_scalars)
    w_img = f1w[:, :flat].reshape(-1, c3, ho, wo)                 # (64, C, Ho, Wo)
    w_img = jnp.transpose(w_img, (2, 3, 1, 0)).reshape(flat, -1)  # (flat, 64)
    w_sc = jnp.transpose(f1w[:, flat:])                           # (n_scalars, 64)
    w_sc = jnp.pad(w_sc, ((0, SC_PAD - n_scalars), (0, 0)))       # (SC_PAD, 64)
    wf1 = jnp.concatenate([w_img, w_sc], axis=0)                  # (flat + SC_PAD, 64)

    return {
        "w1": conv_w(p["c1w"]), "b1": p["c1b"][None, :].astype(jnp.float32),
        "w2": conv_w(p["c2w"]), "b2": p["c2b"][None, :].astype(jnp.float32),
        "w3": conv_w(p["c3w"]), "b3": p["c3b"][None, :].astype(jnp.float32),
        "wf1": wf1.astype(jnp.bfloat16),
        "bf1": p["f1b"][None, :].astype(jnp.float32),
        "wf2": jnp.transpose(p["f2w"]).astype(jnp.bfloat16),
        "bf2": p["f2b"][None, :].astype(jnp.float32),
    }


if __name__ == "__main__":
    img_shape = (4, 16, 16)   # (C, H, W)
    n_scalars = 5
    batch = 2

    key = jax.random.PRNGKey(0)
    k_param, k_img, k_sc = jax.random.split(key, 3)

    params, _flat = init_params(img_shape, n_scalars, k_param)
    kparams = prepare_kernel_params(params, img_shape, n_scalars)

    x_img = jax.random.normal(k_img, (batch,) + img_shape, jnp.float32)   # NCHW
    x_scalars = jax.random.normal(k_sc, (batch, n_scalars), jnp.float32)

    fwd = jax.jit(cnn_with_scalars_forward)
    out = jax.block_until_ready(fwd(kparams, x_img, x_scalars))
    assert out.shape == (batch, 1)
    assert bool(jnp.all(jnp.isfinite(out)))
    assert bool(jnp.all((out >= 0.0) & (out <= 1.0)))
    print("KERNEL_OK")
</pallas_src>

<mosaic_0001>
module attributes {stable_mosaic.version = 11 : i64} {
  func.func @fused_cnn_kernel(%arg0: i32, %arg1: memref<2x16x16x36xbf16, #tpu.memory_space<vmem>>, %arg2: memref<2x128xf32, #tpu.memory_space<vmem>>, %arg3: memref<36x32xbf16, #tpu.memory_space<vmem>>, %arg4: memref<1x32xf32, #tpu.memory_space<vmem>>, %arg5: memref<288x64xbf16, #tpu.memory_space<vmem>>, %arg6: memref<1x64xf32, #tpu.memory_space<vmem>>, %arg7: memref<576x128xbf16, #tpu.memory_space<vmem>>, %arg8: memref<1x128xf32, #tpu.memory_space<vmem>>, %arg9: memref<640x64xbf16, #tpu.memory_space<vmem>>, %arg10: memref<1x64xf32, #tpu.memory_space<vmem>>, %arg11: memref<64x1xbf16, #tpu.memory_space<vmem>>, %arg12: memref<1x1xf32, #tpu.memory_space<vmem>>, %arg13: memref<2x1xf32, #tpu.memory_space<vmem>>, %arg14: memref<2x8x8x288xf32, #tpu.memory_space<vmem>>, %arg15: memref<2x4x4x576xf32, #tpu.memory_space<vmem>>) attributes {dimension_semantics = [#tpu.dimension_semantics<parallel>], iteration_bounds = array<i64: 1>, scalar_prefetch = 0 : i64, scratch_operands = 2 : i64, tpu.core_type = #tpu.core_type<tc>, window_params = [{transform_indices = @transform_0, window_bounds = array<i64: 2, 16, 16, 36>}, {transform_indices = @transform_1, window_bounds = array<i64: 2, 128>}, {pipeline_mode = #tpu.pipeline_mode<synchronous>, transform_indices = @transform_2, window_bounds = array<i64: 36, 32>}, {pipeline_mode = #tpu.pipeline_mode<synchronous>, transform_indices = @transform_3, window_bounds = array<i64: 1, 32>}, {pipeline_mode = #tpu.pipeline_mode<synchronous>, transform_indices = @transform_4, window_bounds = array<i64: 288, 64>}, {pipeline_mode = #tpu.pipeline_mode<synchronous>, transform_indices = @transform_5, window_bounds = array<i64: 1, 64>}, {pipeline_mode = #tpu.pipeline_mode<synchronous>, transform_indices = @transform_6, window_bounds = array<i64: 576, 128>}, {pipeline_mode = #tpu.pipeline_mode<synchronous>, transform_indices = @transform_7, window_bounds = array<i64: 1, 128>}, {pipeline_mode = #tpu.pipeline_mode<synchronous>, transform_indices = @transform_8, window_bounds = array<i64: 640, 64>}, {pipeline_mode = #tpu.pipeline_mode<synchronous>, transform_indices = @transform_9, window_bounds = array<i64: 1, 64>}, {pipeline_mode = #tpu.pipeline_mode<synchronous>, transform_indices = @transform_10, window_bounds = array<i64: 64, 1>}, {pipeline_mode = #tpu.pipeline_mode<synchronous>, transform_indices = @transform_11, window_bounds = array<i64: 1, 1>}, {transform_indices = @transform_12, window_bounds = array<i64: 2, 1>}]} {
    %c0 = arith.constant 0 : index
    %c0_0 = arith.constant 0 : index
    %c0_1 = arith.constant 0 : index
    %c0_2 = arith.constant 0 : index
    %0 = vector.load %arg1[%c0, %c0_0, %c0_1, %c0_2] : memref<2x16x16x36xbf16, #tpu.memory_space<vmem>>, vector<2x16x16x36xbf16>
    %1 = vector.shape_cast %0 : vector<2x16x16x36xbf16> to vector<512x36xbf16>
    %c0_3 = arith.constant 0 : index
    %c0_4 = arith.constant 0 : index
    %2 = vector.load %arg3[%c0_3, %c0_4] : memref<36x32xbf16, #tpu.memory_space<vmem>>, vector<36x32xbf16>
    %cst = arith.constant dense<0.000000e+00> : vector<512x32xf32>
    %3 = tpu.matmul %1, %2, %cst {dimension_numbers = #tpu.dot_dimension_numbers<[1], [0], [0], [1], [0, 0, 1, 1], [], []>} : vector<512x36xbf16>, vector<36x32xbf16>, vector<512x32xf32> -> vector<512x32xf32>
    %c0_5 = arith.constant 0 : index
    %c0_6 = arith.constant 0 : index
    %4 = vector.load %arg4[%c0_5, %c0_6] : memref<1x32xf32, #tpu.memory_space<vmem>>, vector<1x32xf32>
    %5 = vector.broadcast %4 : vector<1x32xf32> to vector<512x32xf32>
    %6 = arith.addf %3, %5 : vector<512x32xf32>
    %cst_7 = arith.constant 0.000000e+00 : f32
    %7 = vector.broadcast %cst_7 : f32 to vector<512x32xf32>
    %8 = arith.maximumf %6, %7 : vector<512x32xf32>
    %9 = vector.shape_cast %8 : vector<512x32xf32> to vector<16x2x16x32xf32>
    %10 = vector.extract_strided_slice %9 {offsets = [0, 0, 0, 0], sizes = [16, 1, 16, 32], strides = [1, 1, 1, 1]} : vector<16x2x16x32xf32> to vector<16x1x16x32xf32>
    %11 = vector.shape_cast %10 : vector<16x1x16x32xf32> to vector<16x16x32xf32>
    %12 = vector.extract_strided_slice %9 {offsets = [0, 1, 0, 0], sizes = [16, 1, 16, 32], strides = [1, 1, 1, 1]} : vector<16x2x16x32xf32> to vector<16x1x16x32xf32>
    %13 = vector.shape_cast %12 : vector<16x1x16x32xf32> to vector<16x16x32xf32>
    %14 = arith.maximumf %11, %13 : vector<16x16x32xf32>
    %15 = vector.shape_cast %14 : vector<16x16x32xf32> to vector<16x8x2x32xf32>
    %16 = vector.extract_strided_slice %15 {offsets = [0, 0, 0, 0], sizes = [16, 8, 1, 32], strides = [1, 1, 1, 1]} : vector<16x8x2x32xf32> to vector<16x8x1x32xf32>
    %17 = vector.shape_cast %16 : vector<16x8x1x32xf32> to vector<16x8x32xf32>
    %18 = vector.extract_strided_slice %15 {offsets = [0, 0, 1, 0], sizes = [16, 8, 1, 32], strides = [1, 1, 1, 1]} : vector<16x8x2x32xf32> to vector<16x8x1x32xf32>
    %19 = vector.shape_cast %18 : vector<16x8x1x32xf32> to vector<16x8x32xf32>
    %20 = arith.maximumf %17, %19 : vector<16x8x32xf32>
    %21 = vector.shape_cast %20 : vector<16x8x32xf32> to vector<2x8x8x32xf32>
    %cst_8 = arith.constant 0.000000e+00 : f32
    %22 = vector.broadcast %cst_8 : f32 to vector<2x1x8x32xf32>
    %c0_9 = arith.constant 0 : index
    %c0_10 = arith.constant 0 : index
    %c0_11 = arith.constant 0 : index
    %c0_12 = arith.constant 0 : index
    %23 = vector.load %arg14[%c0_9, %c0_10, %c0_11, %c0_12] : memref<2x8x8x288xf32, #tpu.memory_space<vmem>>, vector<2x1x8x32xf32>
    tpu.vector_store %arg14[%c0_9, %c0_10, %c0_11, %c0_12], %22 {strides = array<i32>} : memref<2x8x8x288xf32, #tpu.memory_space<vmem>>, vector<2x1x8x32xf32>,
    %cst_13 = arith.constant 0.000000e+00 : f32
    %24 = vector.broadcast %cst_13 : f32 to vector<2x7x1x32xf32>
    %c0_14 = arith.constant 0 : index
    %c1 = arith.constant 1 : index
    %c0_15 = arith.constant 0 : index
    %c0_16 = arith.constant 0 : index
    %25 = vector.load %arg14[%c0_14, %c1, %c0_15, %c0_16] : memref<2x8x8x288xf32, #tpu.memory_space<vmem>>, vector<2x7x1x32xf32>
    tpu.vector_store %arg14[%c0_14, %c1, %c0_15, %c0_16], %24 {strides = array<i32>} : memref<2x8x8x288xf32, #tpu.memory_space<vmem>>, vector<2x7x1x32xf32>,
    %26 = vector.extract_strided_slice %21 {offsets = [0, 0, 0, 0], sizes = [2, 7, 7, 32], strides = [1, 1, 1, 1]} : vector<2x8x8x32xf32> to vector<2x7x7x32xf32>
    %c0_17 = arith.constant 0 : index
    %c1_18 = arith.constant 1 : index
    %c1_19 = arith.constant 1 : index
    %c0_20 = arith.constant 0 : index
    %27 = vector.load %arg14[%c0_17, %c1_18, %c1_19, %c0_20] : memref<2x8x8x288xf32, #tpu.memory_space<vmem>>, vector<2x7x7x32xf32>
    tpu.vector_store %arg14[%c0_17, %c1_18, %c1_19, %c0_20], %26 {strides = array<i32>} : memref<2x8x8x288xf32, #tpu.memory_space<vmem>>, vector<2x7x7x32xf32>,
    %cst_21 = arith.constant 0.000000e+00 : f32
    %28 = vector.broadcast %cst_21 : f32 to vector<2x1x8x32xf32>
    %c0_22 = arith.constant 0 : index
    %c0_23 = arith.constant 0 : index
    %c0_24 = arith.constant 0 : index
    %c32 = arith.constant 32 : index
    %29 = vector.load %arg14[%c0_22, %c0_23, %c0_24, %c32] : memref<2x8x8x288xf32, #tpu.memory_space<vmem>>, vector<2x1x8x32xf32>
    tpu.vector_store %arg14[%c0_22, %c0_23, %c0_24, %c32], %28 {strides = array<i32>} : memref<2x8x8x288xf32, #tpu.memory_space<vmem>>, vector<2x1x8x32xf32>,
    %30 = vector.extract_strided_slice %21 {offsets = [0, 0, 0, 0], sizes = [2, 7, 8, 32], strides = [1, 1, 1, 1]} : vector<2x8x8x32xf32> to vector<2x7x8x32xf32>
    %c0_25 = arith.constant 0 : index
    %c1_26 = arith.constant 1 : index
    %c0_27 = arith.constant 0 : index
    %c32_28 = arith.constant 32 : index
    %31 = vector.load %arg14[%c0_25, %c1_26, %c0_27, %c32_28] : memref<2x8x8x288xf32, #tpu.memory_space<vmem>>, vector<2x7x8x32xf32>
    tpu.vector_store %arg14[%c0_25, %c1_26, %c0_27, %c32_28], %30 {strides = array<i32>} : memref<2x8x8x288xf32, #tpu.memory_space<vmem>>, vector<2x7x8x32xf32>,
    %cst_29 = arith.constant 0.000000e+00 : f32
    %32 = vector.broadcast %cst_29 : f32 to vector<2x1x8x32xf32>
    %c0_30 = arith.constant 0 : index
    %c0_31 = arith.constant 0 : index
    %c0_32 = arith.constant 0 : index
    %c64 = arith.constant 64 : index
    %33 = vector.load %arg14[%c0_30, %c0_31, %c0_32, %c64] : memref<2x8x8x288xf32, #tpu.memory_space<vmem>>, vector<2x1x8x32xf32>
    tpu.vector_store %arg14[%c0_30, %c0_31, %c0_32, %c64], %32 {strides = array<i32>} : memref<2x8x8x288xf32, #tpu.memory_space<vmem>>, vector<2x1x8x32xf32>,
    %cst_33 = arith.constant 0.000000e+00 : f32
    %34 = vector.broadcast %cst_33 : f32 to vector<2x7x1x32xf32>
    %c0_34 = arith.constant 0 : index
    %c1_35 = arith.constant 1 : index
    %c7 = arith.constant 7 : index
    %c64_36 = arith.constant 64 : index
    %35 = vector.load %arg14[%c0_34, %c1_35, %c7, %c64_36] : memref<2x8x8x288xf32, #tpu.memory_space<vmem>>, vector<2x7x1x32xf32>
    tpu.vector_store %arg14[%c0_34, %c1_35, %c7, %c64_36], %34 {strides = array<i32>} : memref<2x8x8x288xf32, #tpu.memory_space<vmem>>, vector<2x7x1x32xf32>,
    %36 = vector.extract_strided_slice %21 {offsets = [0, 0, 1, 0], sizes = [2, 7, 7, 32], strides = [1, 1, 1, 1]} : vector<2x8x8x32xf32> to vector<2x7x7x32xf32>
    %c0_37 = arith.constant 0 : index
    %c1_38 = arith.constant 1 : index
    %c0_39 = arith.constant 0 : index
    %c64_40 = arith.constant 64 : index
    %37 = vector.load %arg14[%c0_37, %c1_38, %c0_39, %c64_40] : memref<2x8x8x288xf32, #tpu.memory_space<vmem>>, vector<2x7x7x32xf32>
    tpu.vector_store %arg14[%c0_37, %c1_38, %c0_39, %c64_40], %36 {strides = array<i32>} : memref<2x8x8x288xf32, #tpu.memory_space<vmem>>, vector<2x7x7x32xf32>,
    %cst_41 = arith.constant 0.000000e+00 : f32
    %38 = vector.broadcast %cst_41 : f32 to vector<2x8x1x32xf32>
    %c0_42 = arith.constant 0 : index
    %c0_43 = arith.constant 0 : index
    %c0_44 = arith.constant 0 : index
    %c96 = arith.constant 96 : index
    %39 = vector.load %arg14[%c0_42, %c0_43, %c0_44, %c96] : memref<2x8x8x288xf32, #tpu.memory_space<vmem>>, vector<2x8x1x32xf32>
    tpu.vector_store %arg14[%c0_42, %c0_43, %c0_44, %c96], %38 {strides = array<i32>} : memref<2x8x8x288xf32, #tpu.memory_space<vmem>>, vector<2x8x1x32xf32>,
    %40 = vector.extract_strided_slice %21 {offsets = [0, 0, 0, 0], sizes = [2, 8, 7, 32], strides = [1, 1, 1, 1]} : vector<2x8x8x32xf32> to vector<2x8x7x32xf32>
    %c0_45 = arith.constant 0 : index
    %c0_46 = arith.constant 0 : index
    %c1_47 = arith.constant 1 : index
    %c96_48 = arith.constant 96 : index
    %41 = vector.load %arg14[%c0_45, %c0_46, %c1_47, %c96_48] : memref<2x8x8x288xf32, #tpu.memory_space<vmem>>, vector<2x8x7x32xf32>
    tpu.vector_store %arg14[%c0_45, %c0_46, %c1_47, %c96_48], %40 {strides = array<i32>} : memref<2x8x8x288xf32, #tpu.memory_space<vmem>>, vector<2x8x7x32xf32>,
    %c0_49 = arith.constant 0 : index
    %c0_50 = arith.constant 0 : index
    %c0_51 = arith.constant 0 : index
    %c128 = arith.constant 128 : index
    %42 = vector.load %arg14[%c0_49, %c0_50, %c0_51, %c128] : memref<2x8x8x288xf32, #tpu.memory_space<vmem>>, vector<2x8x8x32xf32>
    tpu.vector_store %arg14[%c0_49, %c0_50, %c0_51, %c128], %21 {strides = array<i32>} : memref<2x8x8x288xf32, #tpu.memory_space<vmem>>, vector<2x8x8x32xf32>,
    %cst_52 = arith.constant 0.000000e+00 : f32
    %43 = vector.broadcast %cst_52 : f32 to vector<2x8x1x32xf32>
    %c0_53 = arith.constant 0 : index
    %c0_54 = arith.constant 0 : index
    %c7_55 = arith.constant 7 : index
    %c160 = arith.constant 160 : index
    %44 = vector.load %arg14[%c0_53, %c0_54, %c7_55, %c160] : memref<2x8x8x288xf32, #tpu.memory_space<vmem>>, vector<2x8x1x32xf32>
    tpu.vector_store %arg14[%c0_53, %c0_54, %c7_55, %c160], %43 {strides = array<i32>} : memref<2x8x8x288xf32, #tpu.memory_space<vmem>>, vector<2x8x1x32xf32>,
    %45 = vector.extract_strided_slice %21 {offsets = [0, 0, 1, 0], sizes = [2, 8, 7, 32], strides = [1, 1, 1, 1]} : vector<2x8x8x32xf32> to vector<2x8x7x32xf32>
    %c0_56 = arith.constant 0 : index
    %c0_57 = arith.constant 0 : index
    %c0_58 = arith.constant 0 : index
    %c160_59 = arith.constant 160 : index
    %46 = vector.load %arg14[%c0_56, %c0_57, %c0_58, %c160_59] : memref<2x8x8x288xf32, #tpu.memory_space<vmem>>, vector<2x8x7x32xf32>
    tpu.vector_store %arg14[%c0_56, %c0_57, %c0_58, %c160_59], %45 {strides = array<i32>} : memref<2x8x8x288xf32, #tpu.memory_space<vmem>>, vector<2x8x7x32xf32>,
    %cst_60 = arith.constant 0.000000e+00 : f32
    %47 = vector.broadcast %cst_60 : f32 to vector<2x1x8x32xf32>
    %c0_61 = arith.constant 0 : index
    %c7_62 = arith.constant 7 : index
    %c0_63 = arith.constant 0 : index
    %c192 = arith.constant 192 : index
    %48 = vector.load %arg14[%c0_61, %c7_62, %c0_63, %c192] : memref<2x8x8x288xf32, #tpu.memory_space<vmem>>, vector<2x1x8x32xf32>
    tpu.vector_store %arg14[%c0_61, %c7_62, %c0_63, %c192], %47 {strides = array<i32>} : memref<2x8x8x288xf32, #tpu.memory_space<vmem>>, vector<2x1x8x32xf32>,
    %cst_64 = arith.constant 0.000000e+00 : f32
    %49 = vector.broadcast %cst_64 : f32 to vector<2x7x1x32xf32>
    %c0_65 = arith.constant 0 : index
    %c0_66 = arith.constant 0 : index
    %c0_67 = arith.constant 0 : index
    %c192_68 = arith.constant 192 : index
    %50 = vector.load %arg14[%c0_65, %c0_66, %c0_67, %c192_68] : memref<2x8x8x288xf32, #tpu.memory_space<vmem>>, vector<2x7x1x32xf32>
    tpu.vector_store %arg14[%c0_65, %c0_66, %c0_67, %c192_68], %49 {strides = array<i32>} : memref<2x8x8x288xf32, #tpu.memory_space<vmem>>, vector<2x7x1x32xf32>,
    %51 = vector.extract_strided_slice %21 {offsets = [0, 1, 0, 0], sizes = [2, 7, 7, 32], strides = [1, 1, 1, 1]} : vector<2x8x8x32xf32> to vector<2x7x7x32xf32>
    %c0_69 = arith.constant 0 : index
    %c0_70 = arith.constant 0 : index
    %c1_71 = arith.constant 1 : index
    %c192_72 = arith.constant 192 : index
    %52 = vector.load %arg14[%c0_69, %c0_70, %c1_71, %c192_72] : memref<2x8x8x288xf32, #tpu.memory_space<vmem>>, vector<2x7x7x32xf32>
    tpu.vector_store %arg14[%c0_69, %c0_70, %c1_71, %c192_72], %51 {strides = array<i32>} : memref<2x8x8x288xf32, #tpu.memory_space<vmem>>, vector<2x7x7x32xf32>,
    %cst_73 = arith.constant 0.000000e+00 : f32
    %53 = vector.broadcast %cst_73 : f32 to vector<2x1x8x32xf32>
    %c0_74 = arith.constant 0 : index
    %c7_75 = arith.constant 7 : index
    %c0_76 = arith.constant 0 : index
    %c224 = arith.constant 224 : index
    %54 = vector.load %arg14[%c0_74, %c7_75, %c0_76, %c224] : memref<2x8x8x288xf32, #tpu.memory_space<vmem>>, vector<2x1x8x32xf32>
    tpu.vector_store %arg14[%c0_74, %c7_75, %c0_76, %c224], %53 {strides = array<i32>} : memref<2x8x8x288xf32, #tpu.memory_space<vmem>>, vector<2x1x8x32xf32>,
    %55 = vector.extract_strided_slice %21 {offsets = [0, 1, 0, 0], sizes = [2, 7, 8, 32], strides = [1, 1, 1, 1]} : vector<2x8x8x32xf32> to vector<2x7x8x32xf32>
    %c0_77 = arith.constant 0 : index
    %c0_78 = arith.constant 0 : index
    %c0_79 = arith.constant 0 : index
    %c224_80 = arith.constant 224 : index
    %56 = vector.load %arg14[%c0_77, %c0_78, %c0_79, %c224_80] : memref<2x8x8x288xf32, #tpu.memory_space<vmem>>, vector<2x7x8x32xf32>
    tpu.vector_store %arg14[%c0_77, %c0_78, %c0_79, %c224_80], %55 {strides = array<i32>} : memref<2x8x8x288xf32, #tpu.memory_space<vmem>>, vector<2x7x8x32xf32>,
    %cst_81 = arith.constant 0.000000e+00 : f32
    %57 = vector.broadcast %cst_81 : f32 to vector<2x1x8x32xf32>
    %c0_82 = arith.constant 0 : index
    %c7_83 = arith.constant 7 : index
    %c0_84 = arith.constant 0 : index
    %c256 = arith.constant 256 : index
    %58 = vector.load %arg14[%c0_82, %c7_83, %c0_84, %c256] : memref<2x8x8x288xf32, #tpu.memory_space<vmem>>, vector<2x1x8x32xf32>
    tpu.vector_store %arg14[%c0_82, %c7_83, %c0_84, %c256], %57 {strides = array<i32>} : memref<2x8x8x288xf32, #tpu.memory_space<vmem>>, vector<2x1x8x32xf32>,
    %cst_85 = arith.constant 0.000000e+00 : f32
    %59 = vector.broadcast %cst_85 : f32 to vector<2x7x1x32xf32>
    %c0_86 = arith.constant 0 : index
    %c0_87 = arith.constant 0 : index
    %c7_88 = arith.constant 7 : index
    %c256_89 = arith.constant 256 : index
    %60 = vector.load %arg14[%c0_86, %c0_87, %c7_88, %c256_89] : memref<2x8x8x288xf32, #tpu.memory_space<vmem>>, vector<2x7x1x32xf32>
    tpu.vector_store %arg14[%c0_86, %c0_87, %c7_88, %c256_89], %59 {strides = array<i32>} : memref<2x8x8x288xf32, #tpu.memory_space<vmem>>, vector<2x7x1x32xf32>,
    %61 = vector.extract_strided_slice %21 {offsets = [0, 1, 1, 0], sizes = [2, 7, 7, 32], strides = [1, 1, 1, 1]} : vector<2x8x8x32xf32> to vector<2x7x7x32xf32>
    %c0_90 = arith.constant 0 : index
    %c0_91 = arith.constant 0 : index
    %c0_92 = arith.constant 0 : index
    %c256_93 = arith.constant 256 : index
    %62 = vector.load %arg14[%c0_90, %c0_91, %c0_92, %c256_93] : memref<2x8x8x288xf32, #tpu.memory_space<vmem>>, vector<2x7x7x32xf32>
    tpu.vector_store %arg14[%c0_90, %c0_91, %c0_92, %c256_93], %61 {strides = array<i32>} : memref<2x8x8x288xf32, #tpu.memory_space<vmem>>, vector<2x7x7x32xf32>,
    %c0_94 = arith.constant 0 : index
    %c0_95 = arith.constant 0 : index
    %c0_96 = arith.constant 0 : index
    %c0_97 = arith.constant 0 : index
    %63 = vector.load %arg14[%c0_94, %c0_95, %c0_96, %c0_97] : memref<2x8x8x288xf32, #tpu.memory_space<vmem>>, vector<2x8x8x288xf32>
    %64 = vector.shape_cast %63 : vector<2x8x8x288xf32> to vector<128x288xf32>
    %65 = arith.truncf %64 : vector<128x288xf32> to vector<128x288xbf16>
    %c0_98 = arith.constant 0 : index
    %c0_99 = arith.constant 0 : index
    %66 = vector.load %arg5[%c0_98, %c0_99] : memref<288x64xbf16, #tpu.memory_space<vmem>>, vector<288x64xbf16>
    %cst_100 = arith.constant dense<0.000000e+00> : vector<128x64xf32>
    %67 = tpu.matmul %65, %66, %cst_100 {dimension_numbers = #tpu.dot_dimension_numbers<[1], [0], [0], [1], [0, 0, 1, 1], [], []>} : vector<128x288xbf16>, vector<288x64xbf16>, vector<128x64xf32> -> vector<128x64xf32>
    %c0_101 = arith.constant 0 : index
    %c0_102 = arith.constant 0 : index
    %68 = vector.load %arg6[%c0_101, %c0_102] : memref<1x64xf32, #tpu.memory_space<vmem>>, vector<1x64xf32>
    %69 = vector.broadcast %68 : vector<1x64xf32> to vector<128x64xf32>
    %70 = arith.addf %67, %69 : vector<128x64xf32>
    %cst_103 = arith.constant 0.000000e+00 : f32
    %71 = vector.broadcast %cst_103 : f32 to vector<128x64xf32>
    %72 = arith.maximumf %70, %71 : vector<128x64xf32>
    %73 = vector.shape_cast %72 : vector<128x64xf32> to vector<8x2x8x64xf32>
    %74 = vector.extract_strided_slice %73 {offsets = [0, 0, 0, 0], sizes = [8, 1, 8, 64], strides = [1, 1, 1, 1]} : vector<8x2x8x64xf32> to vector<8x1x8x64xf32>
    %75 = vector.shape_cast %74 : vector<8x1x8x64xf32> to vector<8x8x64xf32>
    %76 = vector.extract_strided_slice %73 {offsets = [0, 1, 0, 0], sizes = [8, 1, 8, 64], strides = [1, 1, 1, 1]} : vector<8x2x8x64xf32> to vector<8x1x8x64xf32>
    %77 = vector.shape_cast %76 : vector<8x1x8x64xf32> to vector<8x8x64xf32>
    %78 = arith.maximumf %75, %77 : vector<8x8x64xf32>
    %79 = vector.shape_cast %78 : vector<8x8x64xf32> to vector<8x4x2x64xf32>
    %80 = vector.extract_strided_slice %79 {offsets = [0, 0, 0, 0], sizes = [8, 4, 1, 64], strides = [1, 1, 1, 1]} : vector<8x4x2x64xf32> to vector<8x4x1x64xf32>
    %81 = vector.shape_cast %80 : vector<8x4x1x64xf32> to vector<8x4x64xf32>
    %82 = vector.extract_strided_slice %79 {offsets = [0, 0, 1, 0], sizes = [8, 4, 1, 64], strides = [1, 1, 1, 1]} : vector<8x4x2x64xf32> to vector<8x4x1x64xf32>
    %83 = vector.shape_cast %82 : vector<8x4x1x64xf32> to vector<8x4x64xf32>
    %84 = arith.maximumf %81, %83 : vector<8x4x64xf32>
    %85 = vector.shape_cast %84 : vector<8x4x64xf32> to vector<2x4x4x64xf32>
    %cst_104 = arith.constant 0.000000e+00 : f32
    %86 = vector.broadcast %cst_104 : f32 to vector<2x1x4x64xf32>
    %c0_105 = arith.constant 0 : index
    %c0_106 = arith.constant 0 : index
    %c0_107 = arith.constant 0 : index
    %c0_108 = arith.constant 0 : index
    %87 = vector.load %arg15[%c0_105, %c0_106, %c0_107, %c0_108] : memref<2x4x4x576xf32, #tpu.memory_space<vmem>>, vector<2x1x4x64xf32>
    tpu.vector_store %arg15[%c0_105, %c0_106, %c0_107, %c0_108], %86 {strides = array<i32>} : memref<2x4x4x576xf32, #tpu.memory_space<vmem>>, vector<2x1x4x64xf32>,
    %cst_109 = arith.constant 0.000000e+00 : f32
    %88 = vector.broadcast %cst_109 : f32 to vector<2x3x1x64xf32>
    %c0_110 = arith.constant 0 : index
    %c1_111 = arith.constant 1 : index
    %c0_112 = arith.constant 0 : index
    %c0_113 = arith.constant 0 : index
    %89 = vector.load %arg15[%c0_110, %c1_111, %c0_112, %c0_113] : memref<2x4x4x576xf32, #tpu.memory_space<vmem>>, vector<2x3x1x64xf32>
    tpu.vector_store %arg15[%c0_110, %c1_111, %c0_112, %c0_113], %88 {strides = array<i32>} : memref<2x4x4x576xf32, #tpu.memory_space<vmem>>, vector<2x3x1x64xf32>,
    %90 = vector.extract_strided_slice %85 {offsets = [0, 0, 0, 0], sizes = [2, 3, 3, 64], strides = [1, 1, 1, 1]} : vector<2x4x4x64xf32> to vector<2x3x3x64xf32>
    %c0_114 = arith.constant 0 : index
    %c1_115 = arith.constant 1 : index
    %c1_116 = arith.constant 1 : index
    %c0_117 = arith.constant 0 : index
    %91 = vector.load %arg15[%c0_114, %c1_115, %c1_116, %c0_117] : memref<2x4x4x576xf32, #tpu.memory_space<vmem>>, vector<2x3x3x64xf32>
    tpu.vector_store %arg15[%c0_114, %c1_115, %c1_116, %c0_117], %90 {strides = array<i32>} : memref<2x4x4x576xf32, #tpu.memory_space<vmem>>, vector<2x3x3x64xf32>,
    %cst_118 = arith.constant 0.000000e+00 : f32
    %92 = vector.broadcast %cst_118 : f32 to vector<2x1x4x64xf32>
    %c0_119 = arith.constant 0 : index
    %c0_120 = arith.constant 0 : index
    %c0_121 = arith.constant 0 : index
    %c64_122 = arith.constant 64 : index
    %93 = vector.load %arg15[%c0_119, %c0_120, %c0_121, %c64_122] : memref<2x4x4x576xf32, #tpu.memory_space<vmem>>, vector<2x1x4x64xf32>
    tpu.vector_store %arg15[%c0_119, %c0_120, %c0_121, %c64_122], %92 {strides = array<i32>} : memref<2x4x4x576xf32, #tpu.memory_space<vmem>>, vector<2x1x4x64xf32>,
    %94 = vector.extract_strided_slice %85 {offsets = [0, 0, 0, 0], sizes = [2, 3, 4, 64], strides = [1, 1, 1, 1]} : vector<2x4x4x64xf32> to vector<2x3x4x64xf32>
    %c0_123 = arith.constant 0 : index
    %c1_124 = arith.constant 1 : index
    %c0_125 = arith.constant 0 : index
    %c64_126 = arith.constant 64 : index
    %95 = vector.load %arg15[%c0_123, %c1_124, %c0_125, %c64_126] : memref<2x4x4x576xf32, #tpu.memory_space<vmem>>, vector<2x3x4x64xf32>
    tpu.vector_store %arg15[%c0_123, %c1_124, %c0_125, %c64_126], %94 {strides = array<i32>} : memref<2x4x4x576xf32, #tpu.memory_space<vmem>>, vector<2x3x4x64xf32>,
    %cst_127 = arith.constant 0.000000e+00 : f32
    %96 = vector.broadcast %cst_127 : f32 to vector<2x1x4x64xf32>
    %c0_128 = arith.constant 0 : index
    %c0_129 = arith.constant 0 : index
    %c0_130 = arith.constant 0 : index
    %c128_131 = arith.constant 128 : index
    %97 = vector.load %arg15[%c0_128, %c0_129, %c0_130, %c128_131] : memref<2x4x4x576xf32, #tpu.memory_space<vmem>>, vector<2x1x4x64xf32>
    tpu.vector_store %arg15[%c0_128, %c0_129, %c0_130, %c128_131], %96 {strides = array<i32>} : memref<2x4x4x576xf32, #tpu.memory_space<vmem>>, vector<2x1x4x64xf32>,
    %cst_132 = arith.constant 0.000000e+00 : f32
    %98 = vector.broadcast %cst_132 : f32 to vector<2x3x1x64xf32>
    %c0_133 = arith.constant 0 : index
    %c1_134 = arith.constant 1 : index
    %c3 = arith.constant 3 : index
    %c128_135 = arith.constant 128 : index
    %99 = vector.load %arg15[%c0_133, %c1_134, %c3, %c128_135] : memref<2x4x4x576xf32, #tpu.memory_space<vmem>>, vector<2x3x1x64xf32>
    tpu.vector_store %arg15[%c0_133, %c1_134, %c3, %c128_135], %98 {strides = array<i32>} : memref<2x4x4x576xf32, #tpu.memory_space<vmem>>, vector<2x3x1x64xf32>,
    %100 = vector.extract_strided_slice %85 {offsets = [0, 0, 1, 0], sizes = [2, 3, 3, 64], strides = [1, 1, 1, 1]} : vector<2x4x4x64xf32> to vector<2x3x3x64xf32>
    %c0_136 = arith.constant 0 : index
    %c1_137 = arith.constant 1 : index
    %c0_138 = arith.constant 0 : index
    %c128_139 = arith.constant 128 : index
    %101 = vector.load %arg15[%c0_136, %c1_137, %c0_138, %c128_139] : memref<2x4x4x576xf32, #tpu.memory_space<vmem>>, vector<2x3x3x64xf32>
    tpu.vector_store %arg15[%c0_136, %c1_137, %c0_138, %c128_139], %100 {strides = array<i32>} : memref<2x4x4x576xf32, #tpu.memory_space<vmem>>, vector<2x3x3x64xf32>,
    %cst_140 = arith.constant 0.000000e+00 : f32
    %102 = vector.broadcast %cst_140 : f32 to vector<2x4x1x64xf32>
    %c0_141 = arith.constant 0 : index
    %c0_142 = arith.constant 0 : index
    %c0_143 = arith.constant 0 : index
    %c192_144 = arith.constant 192 : index
    %103 = vector.load %arg15[%c0_141, %c0_142, %c0_143, %c192_144] : memref<2x4x4x576xf32, #tpu.memory_space<vmem>>, vector<2x4x1x64xf32>
    tpu.vector_store %arg15[%c0_141, %c0_142, %c0_143, %c192_144], %102 {strides = array<i32>} : memref<2x4x4x576xf32, #tpu.memory_space<vmem>>, vector<2x4x1x64xf32>,
    %104 = vector.extract_strided_slice %85 {offsets = [0, 0, 0, 0], sizes = [2, 4, 3, 64], strides = [1, 1, 1, 1]} : vector<2x4x4x64xf32> to vector<2x4x3x64xf32>
    %c0_145 = arith.constant 0 : index
    %c0_146 = arith.constant 0 : index
    %c1_147 = arith.constant 1 : index
    %c192_148 = arith.constant 192 : index
    %105 = vector.load %arg15[%c0_145, %c0_146, %c1_147, %c192_148] : memref<2x4x4x576xf32, #tpu.memory_space<vmem>>, vector<2x4x3x64xf32>
    tpu.vector_store %arg15[%c0_145, %c0_146, %c1_147, %c192_148], %104 {strides = array<i32>} : memref<2x4x4x576xf32, #tpu.memory_space<vmem>>, vector<2x4x3x64xf32>,
    %c0_149 = arith.constant 0 : index
    %c0_150 = arith.constant 0 : index
    %c0_151 = arith.constant 0 : index
    %c256_152 = arith.constant 256 : index
    %106 = vector.load %arg15[%c0_149, %c0_150, %c0_151, %c256_152] : memref<2x4x4x576xf32, #tpu.memory_space<vmem>>, vector<2x4x4x64xf32>
    tpu.vector_store %arg15[%c0_149, %c0_150, %c0_151, %c256_152], %85 {strides = array<i32>} : memref<2x4x4x576xf32, #tpu.memory_space<vmem>>, vector<2x4x4x64xf32>,
    %cst_153 = arith.constant 0.000000e+00 : f32
    %107 = vector.broadcast %cst_153 : f32 to vector<2x4x1x64xf32>
    %c0_154 = arith.constant 0 : index
    %c0_155 = arith.constant 0 : index
    %c3_156 = arith.constant 3 : index
    %c320 = arith.constant 320 : index
    %108 = vector.load %arg15[%c0_154, %c0_155, %c3_156, %c320] : memref<2x4x4x576xf32, #tpu.memory_space<vmem>>, vector<2x4x1x64xf32>
    tpu.vector_store %arg15[%c0_154, %c0_155, %c3_156, %c320], %107 {strides = array<i32>} : memref<2x4x4x576xf32, #tpu.memory_space<vmem>>, vector<2x4x1x64xf32>,
    %109 = vector.extract_strided_slice %85 {offsets = [0, 0, 1, 0], sizes = [2, 4, 3, 64], strides = [1, 1, 1, 1]} : vector<2x4x4x64xf32> to vector<2x4x3x64xf32>
    %c0_157 = arith.constant 0 : index
    %c0_158 = arith.constant 0 : index
    %c0_159 = arith.constant 0 : index
    %c320_160 = arith.constant 320 : index
    %110 = vector.load %arg15[%c0_157, %c0_158, %c0_159, %c320_160] : memref<2x4x4x576xf32, #tpu.memory_space<vmem>>, vector<2x4x3x64xf32>
    tpu.vector_store %arg15[%c0_157, %c0_158, %c0_159, %c320_160], %109 {strides = array<i32>} : memref<2x4x4x576xf32, #tpu.memory_space<vmem>>, vector<2x4x3x64xf32>,
    %cst_161 = arith.constant 0.000000e+00 : f32
    %111 = vector.broadcast %cst_161 : f32 to vector<2x1x4x64xf32>
    %c0_162 = arith.constant 0 : index
    %c3_163 = arith.constant 3 : index
    %c0_164 = arith.constant 0 : index
    %c384 = arith.constant 384 : index
    %112 = vector.load %arg15[%c0_162, %c3_163, %c0_164, %c384] : memref<2x4x4x576xf32, #tpu.memory_space<vmem>>, vector<2x1x4x64xf32>
    tpu.vector_store %arg15[%c0_162, %c3_163, %c0_164, %c384], %111 {strides = array<i32>} : memref<2x4x4x576xf32, #tpu.memory_space<vmem>>, vector<2x1x4x64xf32>,
    %cst_165 = arith.constant 0.000000e+00 : f32
    %113 = vector.broadcast %cst_165 : f32 to vector<2x3x1x64xf32>
    %c0_166 = arith.constant 0 : index
    %c0_167 = arith.constant 0 : index
    %c0_168 = arith.constant 0 : index
    %c384_169 = arith.constant 384 : index
    %114 = vector.load %arg15[%c0_166, %c0_167, %c0_168, %c384_169] : memref<2x4x4x576xf32, #tpu.memory_space<vmem>>, vector<2x3x1x64xf32>
    tpu.vector_store %arg15[%c0_166, %c0_167, %c0_168, %c384_169], %113 {strides = array<i32>} : memref<2x4x4x576xf32, #tpu.memory_space<vmem>>, vector<2x3x1x64xf32>,
    %115 = vector.extract_strided_slice %85 {offsets = [0, 1, 0, 0], sizes = [2, 3, 3, 64], strides = [1, 1, 1, 1]} : vector<2x4x4x64xf32> to vector<2x3x3x64xf32>
    %c0_170 = arith.constant 0 : index
    %c0_171 = arith.constant 0 : index
    %c1_172 = arith.constant 1 : index
    %c384_173 = arith.constant 384 : index
    %116 = vector.load %arg15[%c0_170, %c0_171, %c1_172, %c384_173] : memref<2x4x4x576xf32, #tpu.memory_space<vmem>>, vector<2x3x3x64xf32>
    tpu.vector_store %arg15[%c0_170, %c0_171, %c1_172, %c384_173], %115 {strides = array<i32>} : memref<2x4x4x576xf32, #tpu.memory_space<vmem>>, vector<2x3x3x64xf32>,
    %cst_174 = arith.constant 0.000000e+00 : f32
    %117 = vector.broadcast %cst_174 : f32 to vector<2x1x4x64xf32>
    %c0_175 = arith.constant 0 : index
    %c3_176 = arith.constant 3 : index
    %c0_177 = arith.constant 0 : index
    %c448 = arith.constant 448 : index
    %118 = vector.load %arg15[%c0_175, %c3_176, %c0_177, %c448] : memref<2x4x4x576xf32, #tpu.memory_space<vmem>>, vector<2x1x4x64xf32>
    tpu.vector_store %arg15[%c0_175, %c3_176, %c0_177, %c448], %117 {strides = array<i32>} : memref<2x4x4x576xf32, #tpu.memory_space<vmem>>, vector<2x1x4x64xf32>,
    %119 = vector.extract_strided_slice %85 {offsets = [0, 1, 0, 0], sizes = [2, 3, 4, 64], strides = [1, 1, 1, 1]} : vector<2x4x4x64xf32> to vector<2x3x4x64xf32>
    %c0_178 = arith.constant 0 : index
    %c0_179 = arith.constant 0 : index
    %c0_180 = arith.constant 0 : index
    %c448_181 = arith.constant 448 : index
    %120 = vector.load %arg15[%c0_178, %c0_179, %c0_180, %c448_181] : memref<2x4x4x576xf32, #tpu.memory_space<vmem>>, vector<2x3x4x64xf32>
    tpu.vector_store %arg15[%c0_178, %c0_179, %c0_180, %c448_181], %119 {strides = array<i32>} : memref<2x4x4x576xf32, #tpu.memory_space<vmem>>, vector<2x3x4x64xf32>,
    %cst_182 = arith.constant 0.000000e+00 : f32
    %121 = vector.broadcast %cst_182 : f32 to vector<2x1x4x64xf32>
    %c0_183 = arith.constant 0 : index
    %c3_184 = arith.constant 3 : index
    %c0_185 = arith.constant 0 : index
    %c512 = arith.constant 512 : index
    %122 = vector.load %arg15[%c0_183, %c3_184, %c0_185, %c512] : memref<2x4x4x576xf32, #tpu.memory_space<vmem>>, vector<2x1x4x64xf32>
    tpu.vector_store %arg15[%c0_183, %c3_184, %c0_185, %c512], %121 {strides = array<i32>} : memref<2x4x4x576xf32, #tpu.memory_space<vmem>>, vector<2x1x4x64xf32>,
    %cst_186 = arith.constant 0.000000e+00 : f32
    %123 = vector.broadcast %cst_186 : f32 to vector<2x3x1x64xf32>
    %c0_187 = arith.constant 0 : index
    %c0_188 = arith.constant 0 : index
    %c3_189 = arith.constant 3 : index
    %c512_190 = arith.constant 512 : index
    %124 = vector.load %arg15[%c0_187, %c0_188, %c3_189, %c512_190] : memref<2x4x4x576xf32, #tpu.memory_space<vmem>>, vector<2x3x1x64xf32>
    tpu.vector_store %arg15[%c0_187, %c0_188, %c3_189, %c512_190], %123 {strides = array<i32>} : memref<2x4x4x576xf32, #tpu.memory_space<vmem>>, vector<2x3x1x64xf32>,
    %125 = vector.extract_strided_slice %85 {offsets = [0, 1, 1, 0], sizes = [2, 3, 3, 64], strides = [1, 1, 1, 1]} : vector<2x4x4x64xf32> to vector<2x3x3x64xf32>
    %c0_191 = arith.constant 0 : index
    %c0_192 = arith.constant 0 : index
    %c0_193 = arith.constant 0 : index
    %c512_194 = arith.constant 512 : index
    %126 = vector.load %arg15[%c0_191, %c0_192, %c0_193, %c512_194] : memref<2x4x4x576xf32, #tpu.memory_space<vmem>>, vector<2x3x3x64xf32>
    tpu.vector_store %arg15[%c0_191, %c0_192, %c0_193, %c512_194], %125 {strides = array<i32>} : memref<2x4x4x576xf32, #tpu.memory_space<vmem>>, vector<2x3x3x64xf32>,
    %c0_195 = arith.constant 0 : index
    %c0_196 = arith.constant 0 : index
    %c0_197 = arith.constant 0 : index
    %c0_198 = arith.constant 0 : index
    %127 = vector.load %arg15[%c0_195, %c0_196, %c0_197, %c0_198] : memref<2x4x4x576xf32, #tpu.memory_space<vmem>>, vector<2x4x4x576xf32>
    %128 = vector.shape_cast %127 : vector<2x4x4x576xf32> to vector<32x576xf32>
    %129 = arith.truncf %128 : vector<32x576xf32> to vector<32x576xbf16>
    %c0_199 = arith.constant 0 : index
    %c0_200 = arith.constant 0 : index
    %130 = vector.load %arg7[%c0_199, %c0_200] : memref<576x128xbf16, #tpu.memory_space<vmem>>, vector<576x128xbf16>
    %cst_201 = arith.constant dense<0.000000e+00> : vector<32x128xf32>
    %131 = tpu.matmul %129, %130, %cst_201 {dimension_numbers = #tpu.dot_dimension_numbers<[1], [0], [0], [1], [0, 0, 1, 1], [], []>} : vector<32x576xbf16>, vector<576x128xbf16>, vector<32x128xf32> -> vector<32x128xf32>
    %c0_202 = arith.constant 0 : index
    %c0_203 = arith.constant 0 : index
    %132 = vector.load %arg8[%c0_202, %c0_203] : memref<1x128xf32, #tpu.memory_space<vmem>>, vector<1x128xf32>
    %133 = vector.broadcast %132 : vector<1x128xf32> to vector<32x128xf32>
    %134 = arith.addf %131, %133 : vector<32x128xf32>
    %cst_204 = arith.constant 0.000000e+00 : f32
    %135 = vector.broadcast %cst_204 : f32 to vector<32x128xf32>
    %136 = arith.maximumf %134, %135 : vector<32x128xf32>
    %137 = vector.shape_cast %136 : vector<32x128xf32> to vector<4x2x4x128xf32>
    %138 = vector.extract_strided_slice %137 {offsets = [0, 0, 0, 0], sizes = [4, 1, 4, 128], strides = [1, 1, 1, 1]} : vector<4x2x4x128xf32> to vector<4x1x4x128xf32>
    %139 = vector.shape_cast %138 : vector<4x1x4x128xf32> to vector<4x4x128xf32>
    %140 = vector.extract_strided_slice %137 {offsets = [0, 1, 0, 0], sizes = [4, 1, 4, 128], strides = [1, 1, 1, 1]} : vector<4x2x4x128xf32> to vector<4x1x4x128xf32>
    %141 = vector.shape_cast %140 : vector<4x1x4x128xf32> to vector<4x4x128xf32>
    %142 = arith.maximumf %139, %141 : vector<4x4x128xf32>
    %143 = vector.shape_cast %142 : vector<4x4x128xf32> to vector<4x2x2x128xf32>
    %144 = vector.extract_strided_slice %143 {offsets = [0, 0, 0, 0], sizes = [4, 2, 1, 128], strides = [1, 1, 1, 1]} : vector<4x2x2x128xf32> to vector<4x2x1x128xf32>
    %145 = vector.shape_cast %144 : vector<4x2x1x128xf32> to vector<4x2x128xf32>
    %146 = vector.extract_strided_slice %143 {offsets = [0, 0, 1, 0], sizes = [4, 2, 1, 128], strides = [1, 1, 1, 1]} : vector<4x2x2x128xf32> to vector<4x2x1x128xf32>
    %147 = vector.shape_cast %146 : vector<4x2x1x128xf32> to vector<4x2x128xf32>
    %148 = arith.maximumf %145, %147 : vector<4x2x128xf32>
    %149 = vector.shape_cast %148 : vector<4x2x128xf32> to vector<2x2x2x128xf32>
    %150 = vector.extract_strided_slice %149 {offsets = [0, 0, 0, 0], sizes = [2, 1, 1, 128], strides = [1, 1, 1, 1]} : vector<2x2x2x128xf32> to vector<2x1x1x128xf32>
    %151 = vector.shape_cast %150 : vector<2x1x1x128xf32> to vector<2x128xf32>
    %152 = vector.extract_strided_slice %149 {offsets = [0, 0, 1, 0], sizes = [2, 1, 1, 128], strides = [1, 1, 1, 1]} : vector<2x2x2x128xf32> to vector<2x1x1x128xf32>
    %153 = vector.shape_cast %152 : vector<2x1x1x128xf32> to vector<2x128xf32>
    %154 = vector.extract_strided_slice %149 {offsets = [0, 1, 0, 0], sizes = [2, 1, 1, 128], strides = [1, 1, 1, 1]} : vector<2x2x2x128xf32> to vector<2x1x1x128xf32>
    %155 = vector.shape_cast %154 : vector<2x1x1x128xf32> to vector<2x128xf32>
    %156 = vector.extract_strided_slice %149 {offsets = [0, 1, 1, 0], sizes = [2, 1, 1, 128], strides = [1, 1, 1, 1]} : vector<2x2x2x128xf32> to vector<2x1x1x128xf32>
    %157 = vector.shape_cast %156 : vector<2x1x1x128xf32> to vector<2x128xf32>
    %c0_205 = arith.constant 0 : index
    %c0_206 = arith.constant 0 : index
    %158 = vector.load %arg2[%c0_205, %c0_206] : memref<2x128xf32, #tpu.memory_space<vmem>>, vector<2x128xf32>
    %159 = tpu.concatenate %151, %153, %155, %157, %158 in 1 : vector<2x128xf32>, vector<2x128xf32>, vector<2x128xf32>, vector<2x128xf32>, vector<2x128xf32> -> vector<2x640xf32>
    %160 = arith.truncf %159 : vector<2x640xf32> to vector<2x640xbf16>
    %c0_207 = arith.constant 0 : index
    %c0_208 = arith.constant 0 : index
    %161 = vector.load %arg9[%c0_207, %c0_208] : memref<640x64xbf16, #tpu.memory_space<vmem>>, vector<640x64xbf16>
    %cst_209 = arith.constant dense<0.000000e+00> : vector<2x64xf32>
    %162 = tpu.matmul %160, %161, %cst_209 {dimension_numbers = #tpu.dot_dimension_numbers<[1], [0], [0], [1], [0, 0, 1, 1], [], []>} : vector<2x640xbf16>, vector<640x64xbf16>, vector<2x64xf32> -> vector<2x64xf32>
    %c0_210 = arith.constant 0 : index
    %c0_211 = arith.constant 0 : index
    %163 = vector.load %arg10[%c0_210, %c0_211] : memref<1x64xf32, #tpu.memory_space<vmem>>, vector<1x64xf32>
    %164 = vector.broadcast %163 : vector<1x64xf32> to vector<2x64xf32>
    %165 = arith.addf %162, %164 : vector<2x64xf32>
    %cst_212 = arith.constant 0.000000e+00 : f32
    %166 = vector.broadcast %cst_212 : f32 to vector<2x64xf32>
    %167 = arith.maximumf %165, %166 : vector<2x64xf32>
    %168 = arith.truncf %167 : vector<2x64xf32> to vector<2x64xbf16>
    %c0_213 = arith.constant 0 : index
    %c0_214 = arith.constant 0 : index
    %169 = vector.load %arg11[%c0_213, %c0_214] : memref<64x1xbf16, #tpu.memory_space<vmem>>, vector<64x1xbf16>
    %cst_215 = arith.constant dense<0.000000e+00> : vector<2x1xf32>
    %170 = tpu.matmul %168, %169, %cst_215 {dimension_numbers = #tpu.dot_dimension_numbers<[1], [0], [0], [1], [0, 0, 1, 1], [], []>} : vector<2x64xbf16>, vector<64x1xbf16>, vector<2x1xf32> -> vector<2x1xf32>
    %c0_216 = arith.constant 0 : index
    %c0_217 = arith.constant 0 : index
    %171 = vector.load %arg12[%c0_216, %c0_217] : memref<1x1xf32, #tpu.memory_space<vmem>>, vector<1x1xf32>
    %172 = vector.broadcast %171 : vector<1x1xf32> to vector<2x1xf32>
    %173 = arith.addf %170, %172 : vector<2x1xf32>
    %cst_218 = arith.constant 0.000000e+00 : f32
    %174 = vector.broadcast %cst_218 : f32 to vector<2x1xf32>
    %175 = arith.subf %174, %173 : vector<2x1xf32>
    %176 = math.exp %175 : vector<2x1xf32>
    %cst_219 = arith.constant 1.000000e+00 : f32
    %177 = vector.broadcast %cst_219 : f32 to vector<2x1xf32>
    %178 = arith.addf %177, %176 : vector<2x1xf32>
    %cst_220 = arith.constant 1.000000e+00 : f32
    %179 = vector.broadcast %cst_220 : f32 to vector<2x1xf32>
    %180 = arith.divf %179, %178 : vector<2x1xf32>
    %c0_221 = arith.constant 0 : index
    %c0_222 = arith.constant 0 : index
    %181 = vector.load %arg13[%c0_221, %c0_222] : memref<2x1xf32, #tpu.memory_space<vmem>>, vector<2x1xf32>
    tpu.vector_store %arg13[%c0_221, %c0_222], %180 {strides = array<i32>} : memref<2x1xf32, #tpu.memory_space<vmem>>, vector<2x1xf32>,
    return
  }
  func.func @transform_0(%arg0: i32) -> (i32, i32, i32, i32) {
    %c0_i32 = arith.constant 0 : i32
    %c0_i32_0 = arith.constant 0 : i32
    %c0_i32_1 = arith.constant 0 : i32
    %c0_i32_2 = arith.constant 0 : i32
    return %arg0, %c0_i32, %c0_i32_0, %c0_i32_1 : i32, i32, i32, i32
  }
  func.func @transform_1(%arg0: i32) -> (i32, i32) {
    %c0_i32 = arith.constant 0 : i32
    %c0_i32_0 = arith.constant 0 : i32
    return %arg0, %c0_i32 : i32, i32
  }
  func.func @transform_2(%arg0: i32) -> (i32, i32) {
    %c0_i32 = arith.constant 0 : i32
    %c0_i32_0 = arith.constant 0 : i32
    %c0_i32_1 = arith.constant 0 : i32
    return %c0_i32, %c0_i32_0 : i32, i32
  }
  func.func @transform_3(%arg0: i32) -> (i32, i32) {
    %c0_i32 = arith.constant 0 : i32
    %c0_i32_0 = arith.constant 0 : i32
    %c0_i32_1 = arith.constant 0 : i32
    return %c0_i32, %c0_i32_0 : i32, i32
  }
  func.func @transform_4(%arg0: i32) -> (i32, i32) {
    %c0_i32 = arith.constant 0 : i32
    %c0_i32_0 = arith.constant 0 : i32
    %c0_i32_1 = arith.constant 0 : i32
    return %c0_i32, %c0_i32_0 : i32, i32
  }
  func.func @transform_5(%arg0: i32) -> (i32, i32) {
    %c0_i32 = arith.constant 0 : i32
    %c0_i32_0 = arith.constant 0 : i32
    %c0_i32_1 = arith.constant 0 : i32
    return %c0_i32, %c0_i32_0 : i32, i32
  }
  func.func @transform_6(%arg0: i32) -> (i32, i32) {
    %c0_i32 = arith.constant 0 : i32
    %c0_i32_0 = arith.constant 0 : i32
    %c0_i32_1 = arith.constant 0 : i32
    return %c0_i32, %c0_i32_0 : i32, i32
  }
  func.func @transform_7(%arg0: i32) -> (i32, i32) {
    %c0_i32 = arith.constant 0 : i32
    %c0_i32_0 = arith.constant 0 : i32
    %c0_i32_1 = arith.constant 0 : i32
    return %c0_i32, %c0_i32_0 : i32, i32
  }
  func.func @transform_8(%arg0: i32) -> (i32, i32) {
    %c0_i32 = arith.constant 0 : i32
    %c0_i32_0 = arith.constant 0 : i32
    %c0_i32_1 = arith.constant 0 : i32
    return %c0_i32, %c0_i32_0 : i32, i32
  }
  func.func @transform_9(%arg0: i32) -> (i32, i32) {
    %c0_i32 = arith.constant 0 : i32
    %c0_i32_0 = arith.constant 0 : i32
    %c0_i32_1 = arith.constant 0 : i32
    return %c0_i32, %c0_i32_0 : i32, i32
  }
  func.func @transform_10(%arg0: i32) -> (i32, i32) {
    %c0_i32 = arith.constant 0 : i32
    %c0_i32_0 = arith.constant 0 : i32
    %c0_i32_1 = arith.constant 0 : i32
    return %c0_i32, %c0_i32_0 : i32, i32
  }
  func.func @transform_11(%arg0: i32) -> (i32, i32) {
    %c0_i32 = arith.constant 0 : i32
    %c0_i32_0 = arith.constant 0 : i32
    %c0_i32_1 = arith.constant 0 : i32
    return %c0_i32, %c0_i32_0 : i32, i32
  }
  func.func @transform_12(%arg0: i32) -> (i32, i32) {
    %c0_i32 = arith.constant 0 : i32
    %c0_i32_0 = arith.constant 0 : i32
    return %arg0, %c0_i32 : i32, i32
  }
}

</mosaic_0001>

<llo_original>
// kernel: cnn_with_scalars_forward.1
$region0: #{cnn_with_scalars_forward.1}
  #allocation0 [shape = 'u32[]', space=smem, size = 0x4, offset = 0x4, fixed_abs, tag = 'smem constant byte address 0x4 - core index']
  #allocation1 [shape = 'u32[144,128]{1,0:T(1,128)}', space=vmem, size = 0x12000, scoped, tag = 'internal scratch']
  #allocation2 [shape = 'f32[2,8,8,288]{3,2,1,0:T(8,128)}', space=vmem, size = 0x30000, scoped, tag = 'scratch operand']
  #allocation3 [shape = 'f32[2,4,4,576]{3,2,1,0:T(4,128)}', space=vmem, size = 0x14000, scoped, tag = 'scratch operand']
  #allocation4 [shape = 'f32[1,1]{1,0:T(1,128)S(1)}', space=vmem, size = 0x200, scoped, tag = 'scoped memory for cnn_with_scalars_forward.1']
  %s0 = inlined_call_operand.hbm [shape: bf16[2,16,16,36], index: 0, kind: input, shape index: {}]
  %s1 = inlined_call_operand.hbm [shape: f32[2,128], index: 1, kind: input, shape index: {}]
  %s2 = inlined_call_operand.hbm [shape: bf16[36,32], index: 2, kind: input, shape index: {}]
  %s3 = inlined_call_operand.hbm [shape: f32[1,32], index: 3, kind: input, shape index: {}]
  %s4 = inlined_call_operand.hbm [shape: bf16[288,64], index: 4, kind: input, shape index: {}]
  %s5 = inlined_call_operand.hbm [shape: f32[1,64], index: 5, kind: input, shape index: {}]
  %s6 = inlined_call_operand.hbm [shape: bf16[576,128], index: 6, kind: input, shape index: {}]
  %s7 = inlined_call_operand.hbm [shape: f32[1,128], index: 7, kind: input, shape index: {}]
  %s8 = inlined_call_operand.hbm [shape: bf16[640,64], index: 8, kind: input, shape index: {}]
  %s9 = inlined_call_operand.hbm [shape: f32[1,64], index: 9, kind: input, shape index: {}]
  %s10 = inlined_call_operand.hbm [shape: bf16[64,1], index: 10, kind: input, shape index: {}]
  %s11 = inlined_call_operand.<no memory space> [shape: f32[1,1], index: 11, kind: input, shape index: {}]
  %s12 = inlined_call_operand.hbm [shape: f32[2,1], index: 12, kind: output, shape index: {}]
  %s13 = sld [smem:[#allocation0]]
  $region102: #{cnn_with_scalars_forward.1} parent=0
    _
  %s15 = ssub.s32 1, %s13
  %s16 = scalar_select 0, %s15, %s13
  %v17 = vstv %s11
  %18 = vst [vmem:[#allocation4] sm:$0x1] %v17
  $region1: #{cnn_with_scalars_forward.1} parent=0
    #allocation5 [shape = 'u8[131072]{0}', space=vmem, size = 0x20000, scoped, tag = 'input window, operand 0, single buffered']
    #allocation6 [shape = 's32[1]{0}', space=sflag, size = 0x4, scoped, tag = 'scoped memory for cnn_with_scalars_forward.1']
    #allocation7 [shape = 's32[1]{0}', space=sflag, size = 0x4, scoped, tag = 'scoped memory for cnn_with_scalars_forward.1']
    #allocation8 [shape = 'u8[1024]{0}', space=vmem, size = 0x400, scoped, tag = 'input window, operand 1, single buffered']
    #allocation9 [shape = 's32[1]{0}', space=sflag, size = 0x4, scoped, tag = 'scoped memory for cnn_with_scalars_forward.1']
    #allocation10 [shape = 'u8[10240]{0}', space=vmem, size = 0x2800, scoped, tag = 'input window, operand 2, single buffered']
    #allocation11 [shape = 'u8[512]{0}', space=vmem, size = 0x400, scoped, tag = 'input window, operand 3, single buffered']
    #allocation12 [shape = 's32[1]{0}', space=sflag, size = 0x4, scoped, tag = 'scoped memory for cnn_with_scalars_forward.1']
    #allocation13 [shape = 'u8[73728]{0}', space=vmem, size = 0x12000, scoped, tag = 'input window, operand 4, single buffered']
    #allocation14 [shape = 'u8[512]{0}', space=vmem, size = 0x400, scoped, tag = 'input window, operand 5, single buffered']
    #allocation15 [shape = 's32[1]{0}', space=sflag, size = 0x4, scoped, tag = 'scoped memory for cnn_with_scalars_forward.1']
    #allocation16 [shape = 'u8[147456]{0}', space=vmem, size = 0x24000, scoped, tag = 'input window, operand 6, single buffered']
    #allocation17 [shape = 'u8[512]{0}', space=vmem, size = 0x400, scoped, tag = 'input window, operand 7, single buffered']
    #allocation18 [shape = 's32[1]{0}', space=sflag, size = 0x4, scoped, tag = 'scoped memory for cnn_with_scalars_forward.1']
    #allocation19 [shape = 'u8[163840]{0}', space=vmem, size = 0x28000, scoped, tag = 'input window, operand 8, single buffered']
    #allocation20 [shape = 'u8[512]{0}', space=vmem, size = 0x400, scoped, tag = 'input window, operand 9, single buffered']
    #allocation21 [shape = 's32[1]{0}', space=sflag, size = 0x4, scoped, tag = 'scoped memory for cnn_with_scalars_forward.1']
    #allocation22 [shape = 'u8[16384]{0}', space=vmem, size = 0x4000, scoped, tag = 'input window, operand 10, single buffered']
    #allocation23 [shape = 'u8[1024]{0}', space=vmem, size = 0x400, scoped, tag = 'output window, operand 0, single buffered']
    %19 = vsyncpa [#allocation6], 0
    %20 = vsyncpa [#allocation9], 0
    %21 = vsyncpa [#allocation12], 0
    %22 = vsyncpa [#allocation15], 0
    %23 = vsyncpa [#allocation18], 0
    %24 = vsyncpa [#allocation21], 0
    %25 = vsyncpa [#allocation7], 0
    // Predicated region
    $region2: #{cnn_with_scalars_forward.1} parent=1 // pred_check
      _
    $region3: #{cnn_with_scalars_forward.1} parent=1 // pred_check_branch
      %27 = sbr.rel (0) target = $region5
    $region4: #{cnn_with_scalars_forward.1} parent=1 // pred_region
      %s29 = ssub.s32 4096, 4096
      %30 = vsyncadd [#allocation6], %s29
      %s31 = sshll.u32 [#allocation5], 4
      %s32 = int_to_ptr.vmem [resolvable:$true] %s31
      %37 = dma.hbm_to_vmem [thread:$0]  %s0, 4096, %s32, [#allocation6], 64, 64, 4
    $region5: #{cnn_with_scalars_forward.1} parent=1 // pred_fallthru
      _
    // Predicated region
    $region6: #{cnn_with_scalars_forward.1} parent=1 // pred_check
      _
    $region7: #{cnn_with_scalars_forward.1} parent=1 // pred_check_branch
      %39 = sbr.rel (0) target = $region9
    $region8: #{cnn_with_scalars_forward.1} parent=1 // pred_region
      %s41 = ssub.s32 32, 32
      %42 = vsyncadd [#allocation9], %s41
      %s44 = sshll.u32 [#allocation8], 4
      %s45 = int_to_ptr.vmem [resolvable:$true] %s44
      %47 = dma.hbm_to_vmem [thread:$0]  %s1, 32, %s45, [#allocation9]
    $region9: #{cnn_with_scalars_forward.1} parent=1 // pred_fallthru
      _
    // Predicated region
    $region10: #{cnn_with_scalars_forward.1} parent=1 // pred_check
      _
    $region11: #{cnn_with_scalars_forward.1} parent=1 // pred_check_branch
      %49 = sbr.rel (0) target = $region13
    $region12: #{cnn_with_scalars_forward.1} parent=1 // pred_region
      %s51 = ssub.s32 320, 320
      %52 = vsyncadd [#allocation9], %s51
      %s53 = sshll.u32 [#allocation10], 4
      %s54 = int_to_ptr.vmem [resolvable:$true] %s53
      %59 = dma.hbm_to_vmem [thread:$0]  %s2, 320, %s54, [#allocation9], 64, 64, 4
    $region13: #{cnn_with_scalars_forward.1} parent=1 // pred_fallthru
      _
    // Predicated region
    $region14: #{cnn_with_scalars_forward.1} parent=1 // pred_check
      _
    $region15: #{cnn_with_scalars_forward.1} parent=1 // pred_check_branch
      %61 = sbr.rel (0) target = $region17
    $region16: #{cnn_with_scalars_forward.1} parent=1 // pred_region
      %s63 = ssub.s32 16, 16
      %64 = vsyncadd [#allocation12], %s63
      %s66 = sshll.u32 [#allocation11], 4
      %s67 = int_to_ptr.vmem [resolvable:$true] %s66
      %69 = dma.hbm_to_vmem [thread:$0]  %s3, 16, %s67, [#allocation12]
    $region17: #{cnn_with_scalars_forward.1} parent=1 // pred_fallthru
      _
    // Predicated region
    $region18: #{cnn_with_scalars_forward.1} parent=1 // pred_check
      _
    $region19: #{cnn_with_scalars_forward.1} parent=1 // pred_check_branch
      %71 = sbr.rel (0) target = $region21
    $region20: #{cnn_with_scalars_forward.1} parent=1 // pred_region
      %s73 = ssub.s32 2304, 2304
      %74 = vsyncadd [#allocation12], %s73
      %s75 = sshll.u32 [#allocation13], 4
      %s76 = int_to_ptr.vmem [resolvable:$true] %s75
      %81 = dma.hbm_to_vmem [thread:$0]  %s4, 2304, %s76, [#allocation12], 64, 64, 4
    $region21: #{cnn_with_scalars_forward.1} parent=1 // pred_fallthru
      _
    // Predicated region
    $region22: #{cnn_with_scalars_forward.1} parent=1 // pred_check
      _
    $region23: #{cnn_with_scalars_forward.1} parent=1 // pred_check_branch
      %83 = sbr.rel (0) target = $region25
    $region24: #{cnn_with_scalars_forward.1} parent=1 // pred_region
      %s85 = ssub.s32 16, 16
      %86 = vsyncadd [#allocation15], %s85
      %s88 = sshll.u32 [#allocation14], 4
      %s89 = int_to_ptr.vmem [resolvable:$true] %s88
      %91 = dma.hbm_to_vmem [thread:$0]  %s5, 16, %s89, [#allocation15]
    $region25: #{cnn_with_scalars_forward.1} parent=1 // pred_fallthru
      _
    // Predicated region
    $region26: #{cnn_with_scalars_forward.1} parent=1 // pred_check
      _
    $region27: #{cnn_with_scalars_forward.1} parent=1 // pred_check_branch
      %93 = sbr.rel (0) target = $region29
    $region28: #{cnn_with_scalars_forward.1} parent=1 // pred_region
      %s95 = ssub.s32 4608, 4608
      %96 = vsyncadd [#allocation15], %s95
      %s97 = sshll.u32 [#allocation16], 4
      %s98 = int_to_ptr.vmem [resolvable:$true] %s97
      %103 = dma.hbm_to_vmem [thread:$0]  %s6, 4608, %s98, [#allocation15], 64, 64, 4
    $region29: #{cnn_with_scalars_forward.1} parent=1 // pred_fallthru
      _
    // Predicated region
    $region30: #{cnn_with_scalars_forward.1} parent=1 // pred_check
      _
    $region31: #{cnn_with_scalars_forward.1} parent=1 // pred_check_branch
      %105 = sbr.rel (0) target = $region33
    $region32: #{cnn_with_scalars_forward.1} parent=1 // pred_region
      %s107 = ssub.s32 16, 16
      %108 = vsyncadd [#allocation18], %s107
      %s110 = sshll.u32 [#allocation17], 4
      %s111 = int_to_ptr.vmem [resolvable:$true] %s110
      %113 = dma.hbm_to_vmem [thread:$0]  %s7, 16, %s111, [#allocation18]
    $region33: #{cnn_with_scalars_forward.1} parent=1 // pred_fallthru
      _
    // Predicated region
    $region34: #{cnn_with_scalars_forward.1} parent=1 // pred_check
      _
    $region35: #{cnn_with_scalars_forward.1} parent=1 // pred_check_branch
      %115 = sbr.rel (0) target = $region37
    $region36: #{cnn_with_scalars_forward.1} parent=1 // pred_region
      %s117 = ssub.s32 5120, 5120
      %118 = vsyncadd [#allocation18], %s117
      %s119 = sshll.u32 [#allocation19], 4
      %s120 = int_to_ptr.vmem [resolvable:$true] %s119
      %125 = dma.hbm_to_vmem [thread:$0]  %s8, 5120, %s120, [#allocation18], 64, 64, 4
    $region37: #{cnn_with_scalars_forward.1} parent=1 // pred_fallthru
      _
    // Predicated region
    $region38: #{cnn_with_scalars_forward.1} parent=1 // pred_check
      _
    $region39: #{cnn_with_scalars_forward.1} parent=1 // pred_check_branch
      %127 = sbr.rel (0) target = $region41
    $region40: #{cnn_with_scalars_forward.1} parent=1 // pred_region
      %s129 = ssub.s32 16, 16
      %130 = vsyncadd [#allocation21], %s129
      %s132 = sshll.u32 [#allocation20], 4
      %s133 = int_to_ptr.vmem [resolvable:$true] %s132
      %135 = dma.hbm_to_vmem [thread:$0]  %s9, 16, %s133, [#allocation21]
    $region41: #{cnn_with_scalars_forward.1} parent=1 // pred_fallthru
      _
    // Predicated region
    $region42: #{cnn_with_scalars_forward.1} parent=1 // pred_check
      _
    $region43: #{cnn_with_scalars_forward.1} parent=1 // pred_check_branch
      %137 = sbr.rel (0) target = $region45
    $region44: #{cnn_with_scalars_forward.1} parent=1 // pred_region
      %s139 = ssub.s32 512, 512
      %140 = vsyncadd [#allocation21], %s139
      %s141 = sshll.u32 [#allocation22], 4
      %s142 = int_to_ptr.vmem [resolvable:$true] %s141
      %147 = dma.hbm_to_vmem [thread:$0]  %s10, 512, %s142, [#allocation21], 64, 64, 4
    $region45: #{cnn_with_scalars_forward.1} parent=1 // pred_fallthru
      _
    // Predicated region
    $region46: #{cnn_with_scalars_forward.1} parent=1 // pred_check
      _
    $region47: #{cnn_with_scalars_forward.1} parent=1 // pred_check_branch
      %149 = sbr.rel (0) target = $region49
    $region48: #{cnn_with_scalars_forward.1} parent=1 // pred_region
      _
    $region49: #{cnn_with_scalars_forward.1} parent=1 // pred_fallthru
      _
    // Predicated region
    $region50: #{cnn_with_scalars_forward.1} parent=1 // pred_check
      _
    $region51: #{cnn_with_scalars_forward.1} parent=1 // pred_check_branch
      %151 = sbr.rel (0) target = $region53
    $region52: #{cnn_with_scalars_forward.1} parent=1 // pred_region
      %152 = dma.done [#allocation6], 4096
    $region53: #{cnn_with_scalars_forward.1} parent=1 // pred_fallthru
      _
    // Predicated region
    $region54: #{cnn_with_scalars_forward.1} parent=1 // pred_check
      _
    $region55: #{cnn_with_scalars_forward.1} parent=1 // pred_check_branch
      %154 = sbr.rel (0) target = $region57
    $region56: #{cnn_with_scalars_forward.1} parent=1 // pred_region
      %155 = dma.done [#allocation9], 32
    $region57: #{cnn_with_scalars_forward.1} parent=1 // pred_fallthru
      _
    // Predicated region
    $region58: #{cnn_with_scalars_forward.1} parent=1 // pred_check
      _
    $region59: #{cnn_with_scalars_forward.1} parent=1 // pred_check_branch
      %157 = sbr.rel (0) target = $region61
    $region60: #{cnn_with_scalars_forward.1} parent=1 // pred_region
      %158 = dma.done [#allocation9], 320
    $region61: #{cnn_with_scalars_forward.1} parent=1 // pred_fallthru
      _
    // Predicated region
    $region62: #{cnn_with_scalars_forward.1} parent=1 // pred_check
      _
    $region63: #{cnn_with_scalars_forward.1} parent=1 // pred_check_branch
      %160 = sbr.rel (0) target = $region65
    $region64: #{cnn_with_scalars_forward.1} parent=1 // pred_region
      %161 = dma.done [#allocation12], 16
    $region65: #{cnn_with_scalars_forward.1} parent=1 // pred_fallthru
      _
    // Predicated region
    $region66: #{cnn_with_scalars_forward.1} parent=1 // pred_check
      _
    $region67: #{cnn_with_scalars_forward.1} parent=1 // pred_check_branch
      %163 = sbr.rel (0) target = $region69
    $region68: #{cnn_with_scalars_forward.1} parent=1 // pred_region
      %164 = dma.done [#allocation12], 2304
    $region69: #{cnn_with_scalars_forward.1} parent=1 // pred_fallthru
      _
    // Predicated region
    $region70: #{cnn_with_scalars_forward.1} parent=1 // pred_check
      _
    $region71: #{cnn_with_scalars_forward.1} parent=1 // pred_check_branch
      %166 = sbr.rel (0) target = $region73
    $region72: #{cnn_with_scalars_forward.1} parent=1 // pred_region
      %167 = dma.done [#allocation15], 16
    $region73: #{cnn_with_scalars_forward.1} parent=1 // pred_fallthru
      _
    // Predicated region
    $region74: #{cnn_with_scalars_forward.1} parent=1 // pred_check
      _
    $region75: #{cnn_with_scalars_forward.1} parent=1 // pred_check_branch
      %169 = sbr.rel (0) target = $region77
    $region76: #{cnn_with_scalars_forward.1} parent=1 // pred_region
      %170 = dma.done [#allocation15], 4608
    $region77: #{cnn_with_scalars_forward.1} parent=1 // pred_fallthru
      _
    // Predicated region
    $region78: #{cnn_with_scalars_forward.1} parent=1 // pred_check
      _
    $region79: #{cnn_with_scalars_forward.1} parent=1 // pred_check_branch
      %172 = sbr.rel (0) target = $region81
    $region80: #{cnn_with_scalars_forward.1} parent=1 // pred_region
      %173 = dma.done [#allocation18], 16
    $region81: #{cnn_with_scalars_forward.1} parent=1 // pred_fallthru
      _
    // Predicated region
    $region82: #{cnn_with_scalars_forward.1} parent=1 // pred_check
      _
    $region83: #{cnn_with_scalars_forward.1} parent=1 // pred_check_branch
      %175 = sbr.rel (0) target = $region85
    $region84: #{cnn_with_scalars_forward.1} parent=1 // pred_region
      %176 = dma.done [#allocation18], 5120
    $region85: #{cnn_with_scalars_forward.1} parent=1 // pred_fallthru
      _
    // Predicated region
    $region86: #{cnn_with_scalars_forward.1} parent=1 // pred_check
      _
    $region87: #{cnn_with_scalars_forward.1} parent=1 // pred_check_branch
      %178 = sbr.rel (0) target = $region89
    $region88: #{cnn_with_scalars_forward.1} parent=1 // pred_region
      %179 = dma.done [#allocation21], 16
    $region89: #{cnn_with_scalars_forward.1} parent=1 // pred_fallthru
      _
    // Predicated region
    $region90: #{cnn_with_scalars_forward.1} parent=1 // pred_check
      _
    $region91: #{cnn_with_scalars_forward.1} parent=1 // pred_check_branch
      %181 = sbr.rel (0) target = $region93
    $region92: #{cnn_with_scalars_forward.1} parent=1 // pred_region
      %182 = dma.done [#allocation21], 512
    $region93: #{cnn_with_scalars_forward.1} parent=1 // pred_fallthru
      _
    %v184 = vld [vmem:[#allocation5] sm:$0xf]
    %v185 = vld [vmem:[#allocation5 + $0x4] sm:$0xf]
    %v186 = vld [vmem:[#allocation5 + $0x8] sm:$0xf]
    %v187 = vld [vmem:[#allocation5 + $0xc] sm:$0xf]
    %v188 = vld [vmem:[#allocation5 + $0x10] sm:$0xf]
    %v189 = vld [vmem:[#allocation5 + $0x14] sm:$0xf]
    %v190 = vld [vmem:[#allocation5 + $0x18] sm:$0xf]
    %v191 = vld [vmem:[#allocation5 + $0x1c] sm:$0xf]
    %v192 = vld [vmem:[#allocation5 + $0x20] sm:$0xf]
    %v193 = vld [vmem:[#allocation5 + $0x24] sm:$0xf]
    %v194 = vld [vmem:[#allocation5 + $0x28] sm:$0xf]
    %v195 = vld [vmem:[#allocation5 + $0x2c] sm:$0xf]
    %v196 = vld [vmem:[#allocation5 + $0x30] sm:$0xf]
    %v197 = vld [vmem:[#allocation5 + $0x34] sm:$0xf]
    %v198 = vld [vmem:[#allocation5 + $0x38] sm:$0xf]
    %v199 = vld [vmem:[#allocation5 + $0x3c] sm:$0xf]
    %v200 = vld [vmem:[#allocation5 + $0x40] sm:$0xf]
    %v201 = vld [vmem:[#allocation5 + $0x44] sm:$0xf]
    %v202 = vld [vmem:[#allocation5 + $0x48] sm:$0xf]
    %v203 = vld [vmem:[#allocation5 + $0x4c] sm:$0xf]
    %v204 = vld [vmem:[#allocation5 + $0x50] sm:$0xf]
    %v205 = vld [vmem:[#allocation5 + $0x54] sm:$0xf]
    %v206 = vld [vmem:[#allocation5 + $0x58] sm:$0xf]
    %v207 = vld [vmem:[#allocation5 + $0x5c] sm:$0xf]
    %v208 = vld [vmem:[#allocation5 + $0x60] sm:$0xf]
    %v209 = vld [vmem:[#allocation5 + $0x64] sm:$0xf]
    %v210 = vld [vmem:[#allocation5 + $0x68] sm:$0xf]
    %v211 = vld [vmem:[#allocation5 + $0x6c] sm:$0xf]
    %v212 = vld [vmem:[#allocation5 + $0x70] sm:$0xf]
    %v213 = vld [vmem:[#allocation5 + $0x74] sm:$0xf]
    %v214 = vld [vmem:[#allocation5 + $0x78] sm:$0xf]
    %v215 = vld [vmem:[#allocation5 + $0x7c] sm:$0xf]
    %v216 = vld [vmem:[#allocation5 + $0x80] sm:$0xf]
    %v217 = vld [vmem:[#allocation5 + $0x84] sm:$0xf]
    %v218 = vld [vmem:[#allocation5 + $0x88] sm:$0xf]
    %v219 = vld [vmem:[#allocation5 + $0x8c] sm:$0xf]
    %v220 = vld [vmem:[#allocation5 + $0x90] sm:$0xf]
    %v221 = vld [vmem:[#allocation5 + $0x94] sm:$0xf]
    %v222 = vld [vmem:[#allocation5 + $0x98] sm:$0xf]
    %v223 = vld [vmem:[#allocation5 + $0x9c] sm:$0xf]
    %v224 = vld [vmem:[#allocation5 + $0xa0] sm:$0xf]
    %v225 = vld [vmem:[#allocation5 + $0xa4] sm:$0xf]
    %v226 = vld [vmem:[#allocation5 + $0xa8] sm:$0xf]
    %v227 = vld [vmem:[#allocation5 + $0xac] sm:$0xf]
    %v228 = vld [vmem:[#allocation5 + $0xb0] sm:$0xf]
    %v229 = vld [vmem:[#allocation5 + $0xb4] sm:$0xf]
    %v230 = vld [vmem:[#allocation5 + $0xb8] sm:$0xf]
    %v231 = vld [vmem:[#allocation5 + $0xbc] sm:$0xf]
    %v232 = vld [vmem:[#allocation5 + $0xc0] sm:$0xf]
    %v233 = vld [vmem:[#allocation5 + $0xc4] sm:$0xf]
    %v234 = vld [vmem:[#allocation5 + $0xc8] sm:$0xf]
    %v235 = vld [vmem:[#allocation5 + $0xcc] sm:$0xf]
    %v236 = vld [vmem:[#allocation5 + $0xd0] sm:$0xf]
    %v237 = vld [vmem:[#allocation5 + $0xd4] sm:$0xf]
    %v238 = vld [vmem:[#allocation5 + $0xd8] sm:$0xf]
    %v239 = vld [vmem:[#allocation5 + $0xdc] sm:$0xf]
    %v240 = vld [vmem:[#allocation5 + $0xe0] sm:$0xf]
    %v241 = vld [vmem:[#allocation5 + $0xe4] sm:$0xf]
    %v242 = vld [vmem:[#allocation5 + $0xe8] sm:$0xf]
    %v243 = vld [vmem:[#allocation5 + $0xec] sm:$0xf]
    %v244 = vld [vmem:[#allocation5 + $0xf0] sm:$0xf]
    %v245 = vld [vmem:[#allocation5 + $0xf4] sm:$0xf]
    %v246 = vld [vmem:[#allocation5 + $0xf8] sm:$0xf]
    %v247 = vld [vmem:[#allocation5 + $0xfc] sm:$0xf]
    %v248 = vld [vmem:[#allocation10] sm:$0xf]
    %v249 = vld [vmem:[#allocation10 + $0x4] sm:$0xf]
    %v250 = vld [vmem:[#allocation10 + $0x8] sm:$0xf]
    %v251 = vld [vmem:[#allocation10 + $0xc] sm:$0xf]
    %v252 = vld [vmem:[#allocation10 + $0x10] sm:$0x3]
    %v253 = vld [vmem:[#allocation11] sm:$0x1]
    %v255 = vlaneseq
    %v256 = vshrl.u32 %v255, 7
    %v257 = vsub.s32 0, %v256
    %v258 = vrot.slane %v253, %v257
    %v324 = vunpack.c.l.b16 %v184
    %v325 = vunpack.c.l.b16 %v185
    %v326 = vunpack.c.l.b16 %v186
    %v327 = vunpack.c.l.b16 %v187
    %v328 = vunpack.c.l.b16 %v188
    %v329 = vunpack.c.l.b16 %v189
    %v330 = vunpack.c.l.b16 %v190
    %v331 = vunpack.c.l.b16 %v191
    %v332 = vunpack.c.l.b16 %v192
    %v333 = vunpack.c.l.b16 %v193
    %v334 = vunpack.c.l.b16 %v194
    %v335 = vunpack.c.l.b16 %v195
    %v336 = vunpack.c.l.b16 %v196
    %v337 = vunpack.c.l.b16 %v197
    %v338 = vunpack.c.l.b16 %v198
    %v339 = vunpack.c.l.b16 %v199
    %v340 = vunpack.c.l.b16 %v200
    %v341 = vunpack.c.l.b16 %v201
    %v342 = vunpack.c.l.b16 %v202
    %v343 = vunpack.c.l.b16 %v203
    %v344 = vunpack.c.l.b16 %v204
    %v345 = vunpack.c.l.b16 %v205
    %v346 = vunpack.c.l.b16 %v206
    %v347 = vunpack.c.l.b16 %v207
    %v348 = vunpack.c.l.b16 %v208
    %v349 = vunpack.c.l.b16 %v209
    %v350 = vunpack.c.l.b16 %v210
    %v351 = vunpack.c.l.b16 %v211
    %v352 = vunpack.c.l.b16 %v212
    %v353 = vunpack.c.l.b16 %v213
    %v354 = vunpack.c.l.b16 %v214
    %v355 = vunpack.c.l.b16 %v215
    %v356 = vunpack.c.l.b16 %v216
    %v357 = vunpack.c.l.b16 %v217
    %v358 = vunpack.c.l.b16 %v218
    %v359 = vunpack.c.l.b16 %v219
    %v360 = vunpack.c.l.b16 %v220
    %v361 = vunpack.c.l.b16 %v221
    %v362 = vunpack.c.l.b16 %v222
    %v363 = vunpack.c.l.b16 %v223
    %v364 = vunpack.c.l.b16 %v224
    %v365 = vunpack.c.l.b16 %v225
    %v366 = vunpack.c.l.b16 %v226
    %v367 = vunpack.c.l.b16 %v227
    %v368 = vunpack.c.l.b16 %v228
    %v369 = vunpack.c.l.b16 %v229
    %v370 = vunpack.c.l.b16 %v230
    %v371 = vunpack.c.l.b16 %v231
    %v372 = vunpack.c.l.b16 %v232
    %v373 = vunpack.c.l.b16 %v233
    %v374 = vunpack.c.l.b16 %v234
    %v375 = vunpack.c.l.b16 %v235
    %v376 = vunpack.c.l.b16 %v236
    %v377 = vunpack.c.l.b16 %v237
    %v378 = vunpack.c.l.b16 %v238
    %v379 = vunpack.c.l.b16 %v239
    %v380 = vunpack.c.l.b16 %v240
    %v381 = vunpack.c.l.b16 %v241
    %v382 = vunpack.c.l.b16 %v242
    %v383 = vunpack.c.l.b16 %v243
    %v384 = vunpack.c.l.b16 %v244
    %v385 = vunpack.c.l.b16 %v245
    %v386 = vunpack.c.l.b16 %v246
    %v387 = vunpack.c.l.b16 %v247
    %v388 = vpack.c.b16 %v325, %v324
    %v389 = vpack.c.b16 %v327, %v326
    %v390 = vpack.c.b16 %v329, %v328
    %v391 = vpack.c.b16 %v331, %v330
    %v392 = vpack.c.b16 %v333, %v332
    %v393 = vpack.c.b16 %v335, %v334
    %v394 = vpack.c.b16 %v337, %v336
    %v395 = vpack.c.b16 %v339, %v338
    %v396 = vpack.c.b16 %v341, %v340
    %v397 = vpack.c.b16 %v343, %v342
    %v398 = vpack.c.b16 %v345, %v344
    %v399 = vpack.c.b16 %v347, %v346
    %v400 = vpack.c.b16 %v349, %v348
    %v401 = vpack.c.b16 %v351, %v350
    %v402 = vpack.c.b16 %v353, %v352
    %v403 = vpack.c.b16 %v355, %v354
    %v404 = vpack.c.b16 %v357, %v356
    %v405 = vpack.c.b16 %v359, %v358
    %v406 = vpack.c.b16 %v361, %v360
    %v407 = vpack.c.b16 %v363, %v362
    %v408 = vpack.c.b16 %v365, %v364
    %v409 = vpack.c.b16 %v367, %v366
    %v410 = vpack.c.b16 %v369, %v368
    %v411 = vpack.c.b16 %v371, %v370
    %v412 = vpack.c.b16 %v373, %v372
    %v413 = vpack.c.b16 %v375, %v374
    %v414 = vpack.c.b16 %v377, %v376
    %v415 = vpack.c.b16 %v379, %v378
    %v416 = vpack.c.b16 %v381, %v380
    %v417 = vpack.c.b16 %v383, %v382
    %v418 = vpack.c.b16 %v385, %v384
    %v419 = vpack.c.b16 %v387, %v386
    %v425 = vunpack.c.l.b16 %v248
    %v426 = vunpack.c.l.b16 %v249
    %v427 = vunpack.c.l.b16 %v250
    %v428 = vunpack.c.l.b16 %v251
    %v429 = vunpack.c.l.b16 %v252
    %v430 = vpack.c.b16 %v426, %v425
    %v431 = vpack.c.b16 %v428, %v427
    %v432 = vpack.c.b16 %v429, %v429
    %vm435 = vcmask 293888
    %v437 = vsel %vm435, %v388, 0
    %v440 = vsel %vm435, %v389, 0
    %v443 = vsel %vm435, %v390, 0
    %v446 = vsel %vm435, %v391, 0
    %v449 = vsel %vm435, %v392, 0
    %v452 = vsel %vm435, %v393, 0
    %v455 = vsel %vm435, %v394, 0
    %v458 = vsel %vm435, %v395, 0
    %v461 = vsel %vm435, %v396, 0
    %v464 = vsel %vm435, %v397, 0
    %v467 = vsel %vm435, %v398, 0
    %v470 = vsel %vm435, %v399, 0
    %v473 = vsel %vm435, %v400, 0
    %v476 = vsel %vm435, %v401, 0
    %v479 = vsel %vm435, %v402, 0
    %v482 = vsel %vm435, %v403, 0
    %v485 = vsel %vm435, %v404, 0
    %v488 = vsel %vm435, %v405, 0
    %v491 = vsel %vm435, %v406, 0
    %v494 = vsel %vm435, %v407, 0
    %v497 = vsel %vm435, %v408, 0
    %v500 = vsel %vm435, %v409, 0
    %v503 = vsel %vm435, %v410, 0
    %v506 = vsel %vm435, %v411, 0
    %v509 = vsel %vm435, %v412, 0
    %v512 = vsel %vm435, %v413, 0
    %v515 = vsel %vm435, %v414, 0
    %v518 = vsel %vm435, %v415, 0
    %v521 = vsel %vm435, %v416, 0
    %v524 = vsel %vm435, %v417, 0
    %v527 = vsel %vm435, %v418, 0
    %v530 = vsel %vm435, %v419, 0
    %vm532 = vcmask 1041408
    %v534 = vsel %vm532, %v432, 0
    %536 = vmatprep.subr.bf16.mxu0 0
    %537 = vmatpush1.bf16.msra.mxu0 %v430
    %538 = vmatprep.subr.bf16.mxu0 0
    %539 = vmatpush1.bf16.msra.mxu0 %v431
    %540 = vmatprep.subr.bf16.mxu0 0
    %541 = vmatpush1.bf16.msra.mxu0 %v534
    %542 = vmatprep.subr.bf16.mxu0 0
    %543 = vmatpush1.bf16.msra.mxu0 0
    %544 = vmatprep.subr.bf16.mxu0 0
    %545 = vmatpush1.bf16.msra.mxu0 0
    %546 = vmatprep.subr.bf16.mxu0 0
    %547 = vmatpush1.bf16.msra.mxu0 0
    %548 = vmatprep.subr.bf16.mxu0 0
    %549 = vmatpush1.bf16.msra.mxu0 0
    %550 = vmatprep.subr.bf16.mxu0 0
    %551 = vmatpush1.bf16.msra.mxu0 0
    %552 = vmatprep.subr.bf16.mxu0 0
    %553 = vmatpush1.bf16.msra.mxu0 0
    %554 = vmatprep.subr.bf16.mxu0 0
    %555 = vmatpush1.bf16.msra.mxu0 0
    %556 = vmatprep.subr.bf16.mxu0 0
    %557 = vmatpush1.bf16.msra.mxu0 0
    %558 = vmatprep.subr.bf16.mxu0 0
    %559 = vmatpush1.bf16.msra.mxu0 0
    %560 = vmatprep.subr.bf16.mxu0 0
    %561 = vmatpush1.bf16.msra.mxu0 0
    %562 = vmatprep.subr.bf16.mxu0 0
    %563 = vmatpush1.bf16.msra.mxu0 0
    %564 = vmatprep.subr.bf16.mxu0 0
    %565 = vmatpush1.bf16.msra.mxu0 0
    %566 = vmatprep.subr.bf16.mxu0 0
    %567 = vmatpush1.bf16.msra.mxu0 0
    %568 = vmatprep.mubr.bf16.mxu0 0
    %569 = vmatmul.mubr.bf16.gmra.mrb[0].mxu0 %v437
    %v570 = vpop.f32.mrb[0].mxu0
    %v571 = vadd.f32 %v258, %v570
    %v572 = vpop.f32.mrb[0].mxu0
    %v573 = vpop.f32.mrb[0].mxu0
    %v574 = vadd.f32 %v258, %v573
    %v575 = vpop.f32.mrb[0].mxu0
    %576 = vmatprep.mubr.bf16.mxu0 0
    %577 = vmatmul.mubr.bf16.gmra.mrb[0].mxu0 %v440
    %v578 = vpop.f32.mrb[0].mxu0
    %v579 = vadd.f32 %v258, %v578
    %v580 = vpop.f32.mrb[0].mxu0
    %v581 = vpop.f32.mrb[0].mxu0
    %v582 = vadd.f32 %v258, %v581
    %v583 = vpop.f32.mrb[0].mxu0
    %584 = vmatprep.mubr.bf16.mxu0 0
    %585 = vmatmul.mubr.bf16.gmra.mrb[0].mxu0 %v443
    %v586 = vpop.f32.mrb[0].mxu0
    %v587 = vadd.f32 %v258, %v586
    %v588 = vpop.f32.mrb[0].mxu0
    %v589 = vpop.f32.mrb[0].mxu0
    %v590 = vadd.f32 %v258, %v589
    %v591 = vpop.f32.mrb[0].mxu0
    %592 = vmatprep.mubr.bf16.mxu0 0
    %593 = vmatmul.mubr.bf16.gmra.mrb[0].mxu0 %v446
    %v594 = vpop.f32.mrb[0].mxu0
    %v595 = vadd.f32 %v258, %v594
    %v596 = vpop.f32.mrb[0].mxu0
    %v597 = vpop.f32.mrb[0].mxu0
    %v598 = vadd.f32 %v258, %v597
    %v599 = vpop.f32.mrb[0].mxu0
    %600 = vmatprep.mubr.bf16.mxu0 0
    %601 = vmatmul.mubr.bf16.gmra.mrb[0].mxu0 %v449
    %v602 = vpop.f32.mrb[0].mxu0
    %v603 = vadd.f32 %v258, %v602
    %v604 = vpop.f32.mrb[0].mxu0
    %v605 = vpop.f32.mrb[0].mxu0
    %v606 = vadd.f32 %v258, %v605
    %v607 = vpop.f32.mrb[0].mxu0
    %608 = vmatprep.mubr.bf16.mxu0 0
    %609 = vmatmul.mubr.bf16.gmra.mrb[0].mxu0 %v452
    %v610 = vpop.f32.mrb[0].mxu0
    %v611 = vadd.f32 %v258, %v610
    %v612 = vpop.f32.mrb[0].mxu0
    %v613 = vpop.f32.mrb[0].mxu0
    %v614 = vadd.f32 %v258, %v613
    %v615 = vpop.f32.mrb[0].mxu0
    %616 = vmatprep.mubr.bf16.mxu0 0
    %617 = vmatmul.mubr.bf16.gmra.mrb[0].mxu0 %v455
    %v618 = vpop.f32.mrb[0].mxu0
    %v619 = vadd.f32 %v258, %v618
    %v620 = vpop.f32.mrb[0].mxu0
    %v621 = vpop.f32.mrb[0].mxu0
    %v622 = vadd.f32 %v258, %v621
    %v623 = vpop.f32.mrb[0].mxu0
    %624 = vmatprep.mubr.bf16.mxu0 0
    %625 = vmatmul.mubr.bf16.gmra.mrb[0].mxu0 %v458
    %v626 = vpop.f32.mrb[0].mxu0
    %v627 = vadd.f32 %v258, %v626
    %v628 = vpop.f32.mrb[0].mxu0
    %v629 = vpop.f32.mrb[0].mxu0
    %v630 = vadd.f32 %v258, %v629
    %v631 = vpop.f32.mrb[0].mxu0
    %632 = vmatprep.mubr.bf16.mxu0 0
    %633 = vmatmul.mubr.bf16.gmra.mrb[0].mxu0 %v461
    %v634 = vpop.f32.mrb[0].mxu0
    %v635 = vadd.f32 %v258, %v634
    %v636 = vpop.f32.mrb[0].mxu0
    %v637 = vpop.f32.mrb[0].mxu0
    %v638 = vadd.f32 %v258, %v637
    %v639 = vpop.f32.mrb[0].mxu0
    %640 = vmatprep.mubr.bf16.mxu0 0
    %641 = vmatmul.mubr.bf16.gmra.mrb[0].mxu0 %v464
    %v642 = vpop.f32.mrb[0].mxu0
    %v643 = vadd.f32 %v258, %v642
    %v644 = vpop.f32.mrb[0].mxu0
    %v645 = vpop.f32.mrb[0].mxu0
    %v646 = vadd.f32 %v258, %v645
    %v647 = vpop.f32.mrb[0].mxu0
    %648 = vmatprep.mubr.bf16.mxu0 0
    %649 = vmatmul.mubr.bf16.gmra.mrb[0].mxu0 %v467
    %v650 = vpop.f32.mrb[0].mxu0
    %v651 = vadd.f32 %v258, %v650
    %v652 = vpop.f32.mrb[0].mxu0
    %v653 = vpop.f32.mrb[0].mxu0
    %v654 = vadd.f32 %v258, %v653
    %v655 = vpop.f32.mrb[0].mxu0
    %656 = vmatprep.mubr.bf16.mxu0 0
    %657 = vmatmul.mubr.bf16.gmra.mrb[0].mxu0 %v470
    %v658 = vpop.f32.mrb[0].mxu0
    %v659 = vadd.f32 %v258, %v658
    %v660 = vpop.f32.mrb[0].mxu0
    %v661 = vpop.f32.mrb[0].mxu0
    %v662 = vadd.f32 %v258, %v661
    %v663 = vpop.f32.mrb[0].mxu0
    %664 = vmatprep.mubr.bf16.mxu0 0
    %665 = vmatmul.mubr.bf16.gmra.mrb[0].mxu0 %v473
    %v666 = vpop.f32.mrb[0].mxu0
    %v667 = vadd.f32 %v258, %v666
    %v668 = vpop.f32.mrb[0].mxu0
    %v669 = vpop.f32.mrb[0].mxu0
    %v670 = vadd.f32 %v258, %v669
    %v671 = vpop.f32.mrb[0].mxu0
    %672 = vmatprep.mubr.bf16.mxu0 0
    %673 = vmatmul.mubr.bf16.gmra.mrb[0].mxu0 %v476
    %v674 = vpop.f32.mrb[0].mxu0
    %v675 = vadd.f32 %v258, %v674
    %v676 = vpop.f32.mrb[0].mxu0
    %v677 = vpop.f32.mrb[0].mxu0
    %v678 = vadd.f32 %v258, %v677
    %v679 = vpop.f32.mrb[0].mxu0
    %680 = vmatprep.mubr.bf16.mxu0 0
    %681 = vmatmul.mubr.bf16.gmra.mrb[0].mxu0 %v479
    %v682 = vpop.f32.mrb[0].mxu0
    %v683 = vadd.f32 %v258, %v682
    %v684 = vpop.f32.mrb[0].mxu0
    %v685 = vpop.f32.mrb[0].mxu0
    %v686 = vadd.f32 %v258, %v685
    %v687 = vpop.f32.mrb[0].mxu0
    %688 = vmatprep.mubr.bf16.mxu0 0
    %689 = vmatmul.mubr.bf16.gmra.mrb[0].mxu0 %v482
    %v690 = vpop.f32.mrb[0].mxu0
    %v691 = vadd.f32 %v258, %v690
    %v692 = vpop.f32.mrb[0].mxu0
    %v693 = vpop.f32.mrb[0].mxu0
    %v694 = vadd.f32 %v258, %v693
    %v695 = vpop.f32.mrb[0].mxu0
    %696 = vmatprep.mubr.bf16.mxu0 0
    %697 = vmatmul.mubr.bf16.gmra.mrb[0].mxu0 %v485
    %v698 = vpop.f32.mrb[0].mxu0
    %v699 = vadd.f32 %v258, %v698
    %v700 = vpop.f32.mrb[0].mxu0
    %v701 = vpop.f32.mrb[0].mxu0
    %v702 = vadd.f32 %v258, %v701
    %v703 = vpop.f32.mrb[0].mxu0
    %704 = vmatprep.mubr.bf16.mxu0 0
    %705 = vmatmul.mubr.bf16.gmra.mrb[0].mxu0 %v488
    %v706 = vpop.f32.mrb[0].mxu0
    %v707 = vadd.f32 %v258, %v706
    %v708 = vpop.f32.mrb[0].mxu0
    %v709 = vpop.f32.mrb[0].mxu0
    %v710 = vadd.f32 %v258, %v709
    %v711 = vpop.f32.mrb[0].mxu0
    %712 = vmatprep.mubr.bf16.mxu0 0
    %713 = vmatmul.mubr.bf16.gmra.mrb[0].mxu0 %v491
    %v714 = vpop.f32.mrb[0].mxu0
    %v715 = vadd.f32 %v258, %v714
    %v716 = vpop.f32.mrb[0].mxu0
    %v717 = vpop.f32.mrb[0].mxu0
    %v718 = vadd.f32 %v258, %v717
    %v719 = vpop.f32.mrb[0].mxu0
    %720 = vmatprep.mubr.bf16.mxu0 0
    %721 = vmatmul.mubr.bf16.gmra.mrb[0].mxu0 %v494
    %v722 = vpop.f32.mrb[0].mxu0
    %v723 = vadd.f32 %v258, %v722
    %v724 = vpop.f32.mrb[0].mxu0
    %v725 = vpop.f32.mrb[0].mxu0
    %v726 = vadd.f32 %v258, %v725
    %v727 = vpop.f32.mrb[0].mxu0
    %728 = vmatprep.mubr.bf16.mxu0 0
    %729 = vmatmul.mubr.bf16.gmra.mrb[0].mxu0 %v497
    %v730 = vpop.f32.mrb[0].mxu0
    %v731 = vadd.f32 %v258, %v730
    %v732 = vpop.f32.mrb[0].mxu0
    %v733 = vpop.f32.mrb[0].mxu0
    %v734 = vadd.f32 %v258, %v733
    %v735 = vpop.f32.mrb[0].mxu0
    %736 = vmatprep.mubr.bf16.mxu0 0
    %737 = vmatmul.mubr.bf16.gmra.mrb[0].mxu0 %v500
    %v738 = vpop.f32.mrb[0].mxu0
    %v739 = vadd.f32 %v258, %v738
    %v740 = vpop.f32.mrb[0].mxu0
    %v741 = vpop.f32.mrb[0].mxu0
    %v742 = vadd.f32 %v258, %v741
    %v743 = vpop.f32.mrb[0].mxu0
    %744 = vmatprep.mubr.bf16.mxu0 0
    %745 = vmatmul.mubr.bf16.gmra.mrb[0].mxu0 %v503
    %v746 = vpop.f32.mrb[0].mxu0
    %v747 = vadd.f32 %v258, %v746
    %v748 = vpop.f32.mrb[0].mxu0
    %v749 = vpop.f32.mrb[0].mxu0
    %v750 = vadd.f32 %v258, %v749
    %v751 = vpop.f32.mrb[0].mxu0
    %752 = vmatprep.mubr.bf16.mxu0 0
    %753 = vmatmul.mubr.bf16.gmra.mrb[0].mxu0 %v506
    %v754 = vpop.f32.mrb[0].mxu0
    %v755 = vadd.f32 %v258, %v754
    %v756 = vpop.f32.mrb[0].mxu0
    %v757 = vpop.f32.mrb[0].mxu0
    %v758 = vadd.f32 %v258, %v757
    %v759 = vpop.f32.mrb[0].mxu0
    %760 = vmatprep.mubr.bf16.mxu0 0
    %761 = vmatmul.mubr.bf16.gmra.mrb[0].mxu0 %v509
    %v762 = vpop.f32.mrb[0].mxu0
    %v763 = vadd.f32 %v258, %v762
    %v764 = vpop.f32.mrb[0].mxu0
    %v765 = vpop.f32.mrb[0].mxu0
    %v766 = vadd.f32 %v258, %v765
    %v767 = vpop.f32.mrb[0].mxu0
    %768 = vmatprep.mubr.bf16.mxu0 0
    %769 = vmatmul.mubr.bf16.gmra.mrb[0].mxu0 %v512
    %v770 = vpop.f32.mrb[0].mxu0
    %v771 = vadd.f32 %v258, %v770
    %v772 = vpop.f32.mrb[0].mxu0
    %v773 = vpop.f32.mrb[0].mxu0
    %v774 = vadd.f32 %v258, %v773
    %v775 = vpop.f32.mrb[0].mxu0
    %776 = vmatprep.mubr.bf16.mxu0 0
    %777 = vmatmul.mubr.bf16.gmra.mrb[0].mxu0 %v515
    %v778 = vpop.f32.mrb[0].mxu0
    %v779 = vadd.f32 %v258, %v778
    %v780 = vpop.f32.mrb[0].mxu0
    %v781 = vpop.f32.mrb[0].mxu0
    %v782 = vadd.f32 %v258, %v781
    %v783 = vpop.f32.mrb[0].mxu0
    %784 = vmatprep.mubr.bf16.mxu0 0
    %785 = vmatmul.mubr.bf16.gmra.mrb[0].mxu0 %v518
    %v786 = vpop.f32.mrb[0].mxu0
    %v787 = vadd.f32 %v258, %v786
    %v788 = vpop.f32.mrb[0].mxu0
    %v789 = vpop.f32.mrb[0].mxu0
    %v790 = vadd.f32 %v258, %v789
    %v791 = vpop.f32.mrb[0].mxu0
    %792 = vmatprep.mubr.bf16.mxu0 0
    %793 = vmatmul.mubr.bf16.gmra.mrb[0].mxu0 %v521
    %v794 = vpop.f32.mrb[0].mxu0
    %v795 = vadd.f32 %v258, %v794
    %v796 = vpop.f32.mrb[0].mxu0
    %v797 = vpop.f32.mrb[0].mxu0
    %v798 = vadd.f32 %v258, %v797
    %v799 = vpop.f32.mrb[0].mxu0
    %800 = vmatprep.mubr.bf16.mxu0 0
    %801 = vmatmul.mubr.bf16.gmra.mrb[0].mxu0 %v524
    %v802 = vpop.f32.mrb[0].mxu0
    %v803 = vadd.f32 %v258, %v802
    %v804 = vpop.f32.mrb[0].mxu0
    %v805 = vpop.f32.mrb[0].mxu0
    %v806 = vadd.f32 %v258, %v805
    %v807 = vpop.f32.mrb[0].mxu0
    %808 = vmatprep.mubr.bf16.mxu0 0
    %809 = vmatmul.mubr.bf16.gmra.mrb[0].mxu0 %v527
    %v810 = vpop.f32.mrb[0].mxu0
    %v811 = vadd.f32 %v258, %v810
    %v812 = vpop.f32.mrb[0].mxu0
    %v813 = vpop.f32.mrb[0].mxu0
    %v814 = vadd.f32 %v258, %v813
    %v815 = vpop.f32.mrb[0].mxu0
    %816 = vmatprep.mubr.bf16.mxu0 0
    %817 = vmatmul.mubr.bf16.gmra.mrb[0].mxu0 %v530
    %v818 = vpop.f32.mrb[0].mxu0
    %v819 = vadd.f32 %v258, %v818
    %v820 = vpop.f32.mrb[0].mxu0
    %v821 = vpop.f32.mrb[0].mxu0
    %v822 = vadd.f32 %v258, %v821
    %v823 = vpop.f32.mrb[0].mxu0
    %824 = vdwg.mxu0
    %v825 = vmax.f32 %v571, 0.0
    %v826 = vmax.f32 %v574, 0.0
    %v827 = vmax.f32 %v579, 0.0
    %v828 = vmax.f32 %v582, 0.0
    %v829 = vmax.f32 %v587, 0.0
    %v830 = vmax.f32 %v590, 0.0
    %v831 = vmax.f32 %v595, 0.0
    %v832 = vmax.f32 %v598, 0.0
    %v833 = vmax.f32 %v603, 0.0
    %v834 = vmax.f32 %v606, 0.0
    %v835 = vmax.f32 %v611, 0.0
    %v836 = vmax.f32 %v614, 0.0
    %v837 = vmax.f32 %v619, 0.0
    %v838 = vmax.f32 %v622, 0.0
    %v839 = vmax.f32 %v627, 0.0
    %v840 = vmax.f32 %v630, 0.0
    %v841 = vmax.f32 %v635, 0.0
    %v842 = vmax.f32 %v638, 0.0
    %v843 = vmax.f32 %v643, 0.0
    %v844 = vmax.f32 %v646, 0.0
    %v845 = vmax.f32 %v651, 0.0
    %v846 = vmax.f32 %v654, 0.0
    %v847 = vmax.f32 %v659, 0.0
    %v848 = vmax.f32 %v662, 0.0
    %v849 = vmax.f32 %v667, 0.0
    %v850 = vmax.f32 %v670, 0.0
    %v851 = vmax.f32 %v675, 0.0
    %v852 = vmax.f32 %v678, 0.0
    %v853 = vmax.f32 %v683, 0.0
    %v854 = vmax.f32 %v686, 0.0
    %v855 = vmax.f32 %v691, 0.0
    %v856 = vmax.f32 %v694, 0.0
    %v857 = vmax.f32 %v699, 0.0
    %v858 = vmax.f32 %v702, 0.0
    %v859 = vmax.f32 %v707, 0.0
    %v860 = vmax.f32 %v710, 0.0
    %v861 = vmax.f32 %v715, 0.0
    %v862 = vmax.f32 %v718, 0.0
    %v863 = vmax.f32 %v723, 0.0
    %v864 = vmax.f32 %v726, 0.0
    %v865 = vmax.f32 %v731, 0.0
    %v866 = vmax.f32 %v734, 0.0
    %v867 = vmax.f32 %v739, 0.0
    %v868 = vmax.f32 %v742, 0.0
    %v869 = vmax.f32 %v747, 0.0
    %v870 = vmax.f32 %v750, 0.0
    %v871 = vmax.f32 %v755, 0.0
    %v872 = vmax.f32 %v758, 0.0
    %v873 = vmax.f32 %v763, 0.0
    %v874 = vmax.f32 %v766, 0.0
    %v875 = vmax.f32 %v771, 0.0
    %v876 = vmax.f32 %v774, 0.0
    %v877 = vmax.f32 %v779, 0.0
    %v878 = vmax.f32 %v782, 0.0
    %v879 = vmax.f32 %v787, 0.0
    %v880 = vmax.f32 %v790, 0.0
    %v881 = vmax.f32 %v795, 0.0
    %v882 = vmax.f32 %v798, 0.0
    %v883 = vmax.f32 %v803, 0.0
    %v884 = vmax.f32 %v806, 0.0
    %v885 = vmax.f32 %v811, 0.0
    %v886 = vmax.f32 %v814, 0.0
    %v887 = vmax.f32 %v819, 0.0
    %v888 = vmax.f32 %v822, 0.0
    %v889 = vmax.f32 %v825, %v827
    %v890 = vmax.f32 %v826, %v828
    %v891 = vmax.f32 %v829, %v831
    %v892 = vmax.f32 %v830, %v832
    %v893 = vmax.f32 %v833, %v835
    %v894 = vmax.f32 %v834, %v836
    %v895 = vmax.f32 %v837, %v839
    %v896 = vmax.f32 %v838, %v840
    %v897 = vmax.f32 %v841, %v843
    %v898 = vmax.f32 %v842, %v844
    %v899 = vmax.f32 %v845, %v847
    %v900 = vmax.f32 %v846, %v848
    %v901 = vmax.f32 %v849, %v851
    %v902 = vmax.f32 %v850, %v852
    %v903 = vmax.f32 %v853, %v855
    %v904 = vmax.f32 %v854, %v856
    %v905 = vmax.f32 %v857, %v859
    %v906 = vmax.f32 %v858, %v860
    %v907 = vmax.f32 %v861, %v863
    %v908 = vmax.f32 %v862, %v864
    %v909 = vmax.f32 %v865, %v867
    %v910 = vmax.f32 %v866, %v868
    %v911 = vmax.f32 %v869, %v871
    %v912 = vmax.f32 %v870, %v872
    %v913 = vmax.f32 %v873, %v875
    %v914 = vmax.f32 %v874, %v876
    %v915 = vmax.f32 %v877, %v879
    %v916 = vmax.f32 %v878, %v880
    %v917 = vmax.f32 %v881, %v883
    %v918 = vmax.f32 %v882, %v884
    %v919 = vmax.f32 %v885, %v887
    %v920 = vmax.f32 %v886, %v888
    %v953 = vcombine.high %v889, %v889
    %v955 = vunpack.c.l.s4 1983009808
    %v956 = vunpack.c.0.s8 %v955
    %v957 = vlaneseq
    %v958 = vshrl.u32 %v957, 7
    %v959 = vsub.s32 %v956, %v958
    %v960 = vrot.slane %v889, %v959
    %v962 = vunpack.c.l.s4 1983009808
    %v963 = vunpack.c.0.s8 %v962
    %v964 = vlaneseq
    %v965 = vshrl.u32 %v964, 7
    %v966 = vsub.s32 %v963, %v965
    %v967 = vrot.slane %v953, %v966
    %v968 = vcombine.high %v960, %v960
    %v969 = vcombine.high %v967, %v967
    %v970 = vcombine.high %v890, %v890
    %v972 = vunpack.c.l.s4 1983009808
    %v973 = vunpack.c.0.s8 %v972
    %v974 = vlaneseq
    %v975 = vshrl.u32 %v974, 7
    %v976 = vsub.s32 %v973, %v975
    %v977 = vrot.slane %v890, %v976
    %v979 = vunpack.c.l.s4 1983009808
    %v980 = vunpack.c.0.s8 %v979
    %v981 = vlaneseq
    %v982 = vshrl.u32 %v981, 7
    %v983 = vsub.s32 %v980, %v982
    %v984 = vrot.slane %v970, %v983
    %v985 = vcombine.high %v977, %v977
    %v986 = vcombine.high %v984, %v984
    %v987 = vcombine.high %v891, %v891
    %v989 = vunpack.c.l.s4 1983009808
    %v990 = vunpack.c.0.s8 %v989
    %v991 = vlaneseq
    %v992 = vshrl.u32 %v991, 7
    %v993 = vsub.s32 %v990, %v992
    %v994 = vrot.slane %v891, %v993
    %v996 = vunpack.c.l.s4 1983009808
    %v997 = vunpack.c.0.s8 %v996
    %v998 = vlaneseq
    %v999 = vshrl.u32 %v998, 7
    %v1000 = vsub.s32 %v997, %v999
    %v1001 = vrot.slane %v987, %v1000
    %v1002 = vcombine.high %v994, %v994
    %v1003 = vcombine.high %v1001, %v1001
    %v1004 = vcombine.high %v892, %v892
    %v1006 = vunpack.c.l.s4 1983009808
    %v1007 = vunpack.c.0.s8 %v1006
    %v1008 = vlaneseq
    %v1009 = vshrl.u32 %v1008, 7
    %v1010 = vsub.s32 %v1007, %v1009
    %v1011 = vrot.slane %v892, %v1010
    %v1013 = vunpack.c.l.s4 1983009808
    %v1014 = vunpack.c.0.s8 %v1013
    %v1015 = vlaneseq
    %v1016 = vshrl.u32 %v1015, 7
    %v1017 = vsub.s32 %v1014, %v1016
    %v1018 = vrot.slane %v1004, %v1017
    %v1019 = vcombine.high %v1011, %v1011
    %v1020 = vcombine.high %v1018, %v1018
    %v1021 = vcombine.high %v893, %v893
    %v1023 = vunpack.c.l.s4 1983009808
    %v1024 = vunpack.c.0.s8 %v1023
    %v1025 = vlaneseq
    %v1026 = vshrl.u32 %v1025, 7
    %v1027 = vsub.s32 %v1024, %v1026
    %v1028 = vrot.slane %v893, %v1027
    %v1030 = vunpack.c.l.s4 1983009808
    %v1031 = vunpack.c.0.s8 %v1030
    %v1032 = vlaneseq
    %v1033 = vshrl.u32 %v1032, 7
    %v1034 = vsub.s32 %v1031, %v1033
    %v1035 = vrot.slane %v1021, %v1034
    %v1036 = vcombine.high %v1028, %v1028
    %v1037 = vcombine.high %v1035, %v1035
    %v1038 = vcombine.high %v894, %v894
    %v1040 = vunpack.c.l.s4 1983009808
    %v1041 = vunpack.c.0.s8 %v1040
    %v1042 = vlaneseq
    %v1043 = vshrl.u32 %v1042, 7
    %v1044 = vsub.s32 %v1041, %v1043
    %v1045 = vrot.slane %v894, %v1044
    %v1047 = vunpack.c.l.s4 1983009808
    %v1048 = vunpack.c.0.s8 %v1047
    %v1049 = vlaneseq
    %v1050 = vshrl.u32 %v1049, 7
    %v1051 = vsub.s32 %v1048, %v1050
    %v1052 = vrot.slane %v1038, %v1051
    %v1053 = vcombine.high %v1045, %v1045
    %v1054 = vcombine.high %v1052, %v1052
    %v1055 = vcombine.high %v895, %v895
    %v1057 = vunpack.c.l.s4 1983009808
    %v1058 = vunpack.c.0.s8 %v1057
    %v1059 = vlaneseq
    %v1060 = vshrl.u32 %v1059, 7
    %v1061 = vsub.s32 %v1058, %v1060
    %v1062 = vrot.slane %v895, %v1061
    %v1064 = vunpack.c.l.s4 1983009808
    %v1065 = vunpack.c.0.s8 %v1064
    %v1066 = vlaneseq
    %v1067 = vshrl.u32 %v1066, 7
    %v1068 = vsub.s32 %v1065, %v1067
    %v1069 = vrot.slane %v1055, %v1068
    %v1070 = vcombine.high %v1062, %v1062
    %v1071 = vcombine.high %v1069, %v1069
    %v1072 = vcombine.high %v896, %v896
    %v1074 = vunpack.c.l.s4 1983009808
    %v1075 = vunpack.c.0.s8 %v1074
    %v1076 = vlaneseq
    %v1077 = vshrl.u32 %v1076, 7
    %v1078 = vsub.s32 %v1075, %v1077
    %v1079 = vrot.slane %v896, %v1078
    %v1081 = vunpack.c.l.s4 1983009808
    %v1082 = vunpack.c.0.s8 %v1081
    %v1083 = vlaneseq
    %v1084 = vshrl.u32 %v1083, 7
    %v1085 = vsub.s32 %v1082, %v1084
    %v1086 = vrot.slane %v1072, %v1085
    %v1087 = vcombine.high %v1079, %v1079
    %v1088 = vcombine.high %v1086, %v1086
    %v1089 = vcombine.high %v897, %v897
    %v1091 = vunpack.c.l.s4 1983009808
    %v1092 = vunpack.c.0.s8 %v1091
    %v1093 = vlaneseq
    %v1094 = vshrl.u32 %v1093, 7
    %v1095 = vsub.s32 %v1092, %v1094
    %v1096 = vrot.slane %v897, %v1095
    %v1098 = vunpack.c.l.s4 1983009808
    %v1099 = vunpack.c.0.s8 %v1098
    %v1100 = vlaneseq
    %v1101 = vshrl.u32 %v1100, 7
    %v1102 = vsub.s32 %v1099, %v1101
    %v1103 = vrot.slane %v1089, %v1102
    %v1104 = vcombine.high %v1096, %v1096
    %v1105 = vcombine.high %v1103, %v1103
    %v1106 = vcombine.high %v898, %v898
    %v1108 = vunpack.c.l.s4 1983009808
    %v1109 = vunpack.c.0.s8 %v1108
    %v1110 = vlaneseq
    %v1111 = vshrl.u32 %v1110, 7
    %v1112 = vsub.s32 %v1109, %v1111
    %v1113 = vrot.slane %v898, %v1112
    %v1115 = vunpack.c.l.s4 1983009808
    %v1116 = vunpack.c.0.s8 %v1115
    %v1117 = vlaneseq
    %v1118 = vshrl.u32 %v1117, 7
    %v1119 = vsub.s32 %v1116, %v1118
    %v1120 = vrot.slane %v1106, %v1119
    %v1121 = vcombine.high %v1113, %v1113
    %v1122 = vcombine.high %v1120, %v1120
    %v1123 = vcombine.high %v899, %v899
    %v1125 = vunpack.c.l.s4 1983009808
    %v1126 = vunpack.c.0.s8 %v1125
    %v1127 = vlaneseq
    %v1128 = vshrl.u32 %v1127, 7
    %v1129 = vsub.s32 %v1126, %v1128
    %v1130 = vrot.slane %v899, %v1129
    %v1132 = vunpack.c.l.s4 1983009808
    %v1133 = vunpack.c.0.s8 %v1132
    %v1134 = vlaneseq
    %v1135 = vshrl.u32 %v1134, 7
    %v1136 = vsub.s32 %v1133, %v1135
    %v1137 = vrot.slane %v1123, %v1136
    %v1138 = vcombine.high %v1130, %v1130
    %v1139 = vcombine.high %v1137, %v1137
    %v1140 = vcombine.high %v900, %v900
    %v1142 = vunpack.c.l.s4 1983009808
    %v1143 = vunpack.c.0.s8 %v1142
    %v1144 = vlaneseq
    %v1145 = vshrl.u32 %v1144, 7
    %v1146 = vsub.s32 %v1143, %v1145
    %v1147 = vrot.slane %v900, %v1146
    %v1149 = vunpack.c.l.s4 1983009808
    %v1150 = vunpack.c.0.s8 %v1149
    %v1151 = vlaneseq
    %v1152 = vshrl.u32 %v1151, 7
    %v1153 = vsub.s32 %v1150, %v1152
    %v1154 = vrot.slane %v1140, %v1153
    %v1155 = vcombine.high %v1147, %v1147
    %v1156 = vcombine.high %v1154, %v1154
    %v1157 = vcombine.high %v901, %v901
    %v1159 = vunpack.c.l.s4 1983009808
    %v1160 = vunpack.c.0.s8 %v1159
    %v1161 = vlaneseq
    %v1162 = vshrl.u32 %v1161, 7
    %v1163 = vsub.s32 %v1160, %v1162
    %v1164 = vrot.slane %v901, %v1163
    %v1166 = vunpack.c.l.s4 1983009808
    %v1167 = vunpack.c.0.s8 %v1166
    %v1168 = vlaneseq
    %v1169 = vshrl.u32 %v1168, 7
    %v1170 = vsub.s32 %v1167, %v1169
    %v1171 = vrot.slane %v1157, %v1170
    %v1172 = vcombine.high %v1164, %v1164
    %v1173 = vcombine.high %v1171, %v1171
    %v1174 = vcombine.high %v902, %v902
    %v1176 = vunpack.c.l.s4 1983009808
    %v1177 = vunpack.c.0.s8 %v1176
    %v1178 = vlaneseq
    %v1179 = vshrl.u32 %v1178, 7
    %v1180 = vsub.s32 %v1177, %v1179
    %v1181 = vrot.slane %v902, %v1180
    %v1183 = vunpack.c.l.s4 1983009808
    %v1184 = vunpack.c.0.s8 %v1183
    %v1185 = vlaneseq
    %v1186 = vshrl.u32 %v1185, 7
    %v1187 = vsub.s32 %v1184, %v1186
    %v1188 = vrot.slane %v1174, %v1187
    %v1189 = vcombine.high %v1181, %v1181
    %v1190 = vcombine.high %v1188, %v1188
    %v1191 = vcombine.high %v903, %v903
    %v1193 = vunpack.c.l.s4 1983009808
    %v1194 = vunpack.c.0.s8 %v1193
    %v1195 = vlaneseq
    %v1196 = vshrl.u32 %v1195, 7
    %v1197 = vsub.s32 %v1194, %v1196
    %v1198 = vrot.slane %v903, %v1197
    %v1200 = vunpack.c.l.s4 1983009808
    %v1201 = vunpack.c.0.s8 %v1200
    %v1202 = vlaneseq
    %v1203 = vshrl.u32 %v1202, 7
    %v1204 = vsub.s32 %v1201, %v1203
    %v1205 = vrot.slane %v1191, %v1204
    %v1206 = vcombine.high %v1198, %v1198
    %v1207 = vcombine.high %v1205, %v1205
    %v1208 = vcombine.high %v904, %v904
    %v1210 = vunpack.c.l.s4 1983009808
    %v1211 = vunpack.c.0.s8 %v1210
    %v1212 = vlaneseq
    %v1213 = vshrl.u32 %v1212, 7
    %v1214 = vsub.s32 %v1211, %v1213
    %v1215 = vrot.slane %v904, %v1214
    %v1217 = vunpack.c.l.s4 1983009808
    %v1218 = vunpack.c.0.s8 %v1217
    %v1219 = vlaneseq
    %v1220 = vshrl.u32 %v1219, 7
    %v1221 = vsub.s32 %v1218, %v1220
    %v1222 = vrot.slane %v1208, %v1221
    %v1223 = vcombine.high %v1215, %v1215
    %v1224 = vcombine.high %v1222, %v1222
    %v1225 = vcombine.high %v905, %v905
    %v1227 = vunpack.c.l.s4 1983009808
    %v1228 = vunpack.c.0.s8 %v1227
    %v1229 = vlaneseq
    %v1230 = vshrl.u32 %v1229, 7
    %v1231 = vsub.s32 %v1228, %v1230
    %v1232 = vrot.slane %v905, %v1231
    %v1234 = vunpack.c.l.s4 1983009808
    %v1235 = vunpack.c.0.s8 %v1234
    %v1236 = vlaneseq
    %v1237 = vshrl.u32 %v1236, 7
    %v1238 = vsub.s32 %v1235, %v1237
    %v1239 = vrot.slane %v1225, %v1238
    %v1240 = vcombine.high %v1232, %v1232
    %v1241 = vcombine.high %v1239, %v1239
    %v1242 = vcombine.high %v906, %v906
    %v1244 = vunpack.c.l.s4 1983009808
    %v1245 = vunpack.c.0.s8 %v1244
    %v1246 = vlaneseq
    %v1247 = vshrl.u32 %v1246, 7
    %v1248 = vsub.s32 %v1245, %v1247
    %v1249 = vrot.slane %v906, %v1248
    %v1251 = vunpack.c.l.s4 1983009808
    %v1252 = vunpack.c.0.s8 %v1251
    %v1253 = vlaneseq
    %v1254 = vshrl.u32 %v1253, 7
    %v1255 = vsub.s32 %v1252, %v1254
    %v1256 = vrot.slane %v1242, %v1255
    %v1257 = vcombine.high %v1249, %v1249
    %v1258 = vcombine.high %v1256, %v1256
    %v1259 = vcombine.high %v907, %v907
    %v1261 = vunpack.c.l.s4 1983009808
    %v1262 = vunpack.c.0.s8 %v1261
    %v1263 = vlaneseq
    %v1264 = vshrl.u32 %v1263, 7
    %v1265 = vsub.s32 %v1262, %v1264
    %v1266 = vrot.slane %v907, %v1265
    %v1268 = vunpack.c.l.s4 1983009808
    %v1269 = vunpack.c.0.s8 %v1268
    %v1270 = vlaneseq
    %v1271 = vshrl.u32 %v1270, 7
    %v1272 = vsub.s32 %v1269, %v1271
    %v1273 = vrot.slane %v1259, %v1272
    %v1274 = vcombine.high %v1266, %v1266
    %v1275 = vcombine.high %v1273, %v1273
    %v1276 = vcombine.high %v908, %v908
    %v1278 = vunpack.c.l.s4 1983009808
    %v1279 = vunpack.c.0.s8 %v1278
    %v1280 = vlaneseq
    %v1281 = vshrl.u32 %v1280, 7
    %v1282 = vsub.s32 %v1279, %v1281
    %v1283 = vrot.slane %v908, %v1282
    %v1285 = vunpack.c.l.s4 1983009808
    %v1286 = vunpack.c.0.s8 %v1285
    %v1287 = vlaneseq
    %v1288 = vshrl.u32 %v1287, 7
    %v1289 = vsub.s32 %v1286, %v1288
    %v1290 = vrot.slane %v1276, %v1289
    %v1291 = vcombine.high %v1283, %v1283
    %v1292 = vcombine.high %v1290, %v1290
    %v1293 = vcombine.high %v909, %v909
    %v1295 = vunpack.c.l.s4 1983009808
    %v1296 = vunpack.c.0.s8 %v1295
    %v1297 = vlaneseq
    %v1298 = vshrl.u32 %v1297, 7
    %v1299 = vsub.s32 %v1296, %v1298
    %v1300 = vrot.slane %v909, %v1299
    %v1302 = vunpack.c.l.s4 1983009808
    %v1303 = vunpack.c.0.s8 %v1302
    %v1304 = vlaneseq
    %v1305 = vshrl.u32 %v1304, 7
    %v1306 = vsub.s32 %v1303, %v1305
    %v1307 = vrot.slane %v1293, %v1306
    %v1308 = vcombine.high %v1300, %v1300
    %v1309 = vcombine.high %v1307, %v1307
    %v1310 = vcombine.high %v910, %v910
    %v1312 = vunpack.c.l.s4 1983009808
    %v1313 = vunpack.c.0.s8 %v1312
    %v1314 = vlaneseq
    %v1315 = vshrl.u32 %v1314, 7
    %v1316 = vsub.s32 %v1313, %v1315
    %v1317 = vrot.slane %v910, %v1316
    %v1319 = vunpack.c.l.s4 1983009808
    %v1320 = vunpack.c.0.s8 %v1319
    %v1321 = vlaneseq
    %v1322 = vshrl.u32 %v1321, 7
    %v1323 = vsub.s32 %v1320, %v1322
    %v1324 = vrot.slane %v1310, %v1323
    %v1325 = vcombine.high %v1317, %v1317
    %v1326 = vcombine.high %v1324, %v1324
    %v1327 = vcombine.high %v911, %v911
    %v1329 = vunpack.c.l.s4 1983009808
    %v1330 = vunpack.c.0.s8 %v1329
    %v1331 = vlaneseq
    %v1332 = vshrl.u32 %v1331, 7
    %v1333 = vsub.s32 %v1330, %v1332
    %v1334 = vrot.slane %v911, %v1333
    %v1336 = vunpack.c.l.s4 1983009808
    %v1337 = vunpack.c.0.s8 %v1336
    %v1338 = vlaneseq
    %v1339 = vshrl.u32 %v1338, 7
    %v1340 = vsub.s32 %v1337, %v1339
    %v1341 = vrot.slane %v1327, %v1340
    %v1342 = vcombine.high %v1334, %v1334
    %v1343 = vcombine.high %v1341, %v1341
    %v1344 = vcombine.high %v912, %v912
    %v1346 = vunpack.c.l.s4 1983009808
    %v1347 = vunpack.c.0.s8 %v1346
    %v1348 = vlaneseq
    %v1349 = vshrl.u32 %v1348, 7
    %v1350 = vsub.s32 %v1347, %v1349
    %v1351 = vrot.slane %v912, %v1350
    %v1353 = vunpack.c.l.s4 1983009808
    %v1354 = vunpack.c.0.s8 %v1353
    %v1355 = vlaneseq
    %v1356 = vshrl.u32 %v1355, 7
    %v1357 = vsub.s32 %v1354, %v1356
    %v1358 = vrot.slane %v1344, %v1357
    %v1359 = vcombine.high %v1351, %v1351
    %v1360 = vcombine.high %v1358, %v1358
    %v1361 = vcombine.high %v913, %v913
    %v1363 = vunpack.c.l.s4 1983009808
    %v1364 = vunpack.c.0.s8 %v1363
    %v1365 = vlaneseq
    %v1366 = vshrl.u32 %v1365, 7
    %v1367 = vsub.s32 %v1364, %v1366
    %v1368 = vrot.slane %v913, %v1367
    %v1370 = vunpack.c.l.s4 1983009808
    %v1371 = vunpack.c.0.s8 %v1370
    %v1372 = vlaneseq
    %v1373 = vshrl.u32 %v1372, 7
    %v1374 = vsub.s32 %v1371, %v1373
    %v1375 = vrot.slane %v1361, %v1374
    %v1376 = vcombine.high %v1368, %v1368
    %v1377 = vcombine.high %v1375, %v1375
    %v1378 = vcombine.high %v914, %v914
    %v1380 = vunpack.c.l.s4 1983009808
    %v1381 = vunpack.c.0.s8 %v1380
    %v1382 = vlaneseq
    %v1383 = vshrl.u32 %v1382, 7
    %v1384 = vsub.s32 %v1381, %v1383
    %v1385 = vrot.slane %v914, %v1384
    %v1387 = vunpack.c.l.s4 1983009808
    %v1388 = vunpack.c.0.s8 %v1387
    %v1389 = vlaneseq
    %v1390 = vshrl.u32 %v1389, 7
    %v1391 = vsub.s32 %v1388, %v1390
    %v1392 = vrot.slane %v1378, %v1391
    %v1393 = vcombine.high %v1385, %v1385
    %v1394 = vcombine.high %v1392, %v1392
    %v1395 = vcombine.high %v915, %v915
    %v1397 = vunpack.c.l.s4 1983009808
    %v1398 = vunpack.c.0.s8 %v1397
    %v1399 = vlaneseq
    %v1400 = vshrl.u32 %v1399, 7
    %v1401 = vsub.s32 %v1398, %v1400
    %v1402 = vrot.slane %v915, %v1401
    %v1404 = vunpack.c.l.s4 1983009808
    %v1405 = vunpack.c.0.s8 %v1404
    %v1406 = vlaneseq
    %v1407 = vshrl.u32 %v1406, 7
    %v1408 = vsub.s32 %v1405, %v1407
    %v1409 = vrot.slane %v1395, %v1408
    %v1410 = vcombine.high %v1402, %v1402
    %v1411 = vcombine.high %v1409, %v1409
    %v1412 = vcombine.high %v916, %v916
    %v1414 = vunpack.c.l.s4 1983009808
    %v1415 = vunpack.c.0.s8 %v1414
    %v1416 = vlaneseq
    %v1417 = vshrl.u32 %v1416, 7
    %v1418 = vsub.s32 %v1415, %v1417
    %v1419 = vrot.slane %v916, %v1418
    %v1421 = vunpack.c.l.s4 1983009808
    %v1422 = vunpack.c.0.s8 %v1421
    %v1423 = vlaneseq
    %v1424 = vshrl.u32 %v1423, 7
    %v1425 = vsub.s32 %v1422, %v1424
    %v1426 = vrot.slane %v1412, %v1425
    %v1427 = vcombine.high %v1419, %v1419
    %v1428 = vcombine.high %v1426, %v1426
    %v1429 = vcombine.high %v917, %v917
    %v1431 = vunpack.c.l.s4 1983009808
    %v1432 = vunpack.c.0.s8 %v1431
    %v1433 = vlaneseq
    %v1434 = vshrl.u32 %v1433, 7
    %v1435 = vsub.s32 %v1432, %v1434
    %v1436 = vrot.slane %v917, %v1435
    %v1438 = vunpack.c.l.s4 1983009808
    %v1439 = vunpack.c.0.s8 %v1438
    %v1440 = vlaneseq
    %v1441 = vshrl.u32 %v1440, 7
    %v1442 = vsub.s32 %v1439, %v1441
    %v1443 = vrot.slane %v1429, %v1442
    %v1444 = vcombine.high %v1436, %v1436
    %v1445 = vcombine.high %v1443, %v1443
    %v1446 = vcombine.high %v918, %v918
    %v1448 = vunpack.c.l.s4 1983009808
    %v1449 = vunpack.c.0.s8 %v1448
    %v1450 = vlaneseq
    %v1451 = vshrl.u32 %v1450, 7
    %v1452 = vsub.s32 %v1449, %v1451
    %v1453 = vrot.slane %v918, %v1452
    %v1455 = vunpack.c.l.s4 1983009808
    %v1456 = vunpack.c.0.s8 %v1455
    %v1457 = vlaneseq
    %v1458 = vshrl.u32 %v1457, 7
    %v1459 = vsub.s32 %v1456, %v1458
    %v1460 = vrot.slane %v1446, %v1459
    %v1461 = vcombine.high %v1453, %v1453
    %v1462 = vcombine.high %v1460, %v1460
    %v1463 = vcombine.high %v919, %v919
    %v1465 = vunpack.c.l.s4 1983009808
    %v1466 = vunpack.c.0.s8 %v1465
    %v1467 = vlaneseq
    %v1468 = vshrl.u32 %v1467, 7
    %v1469 = vsub.s32 %v1466, %v1468
    %v1470 = vrot.slane %v919, %v1469
    %v1472 = vunpack.c.l.s4 1983009808
    %v1473 = vunpack.c.0.s8 %v1472
    %v1474 = vlaneseq
    %v1475 = vshrl.u32 %v1474, 7
    %v1476 = vsub.s32 %v1473, %v1475
    %v1477 = vrot.slane %v1463, %v1476
    %v1478 = vcombine.high %v1470, %v1470
    %v1479 = vcombine.high %v1477, %v1477
    %v1480 = vcombine.high %v920, %v920
    %v1482 = vunpack.c.l.s4 1983009808
    %v1483 = vunpack.c.0.s8 %v1482
    %v1484 = vlaneseq
    %v1485 = vshrl.u32 %v1484, 7
    %v1486 = vsub.s32 %v1483, %v1485
    %v1487 = vrot.slane %v920, %v1486
    %v1489 = vunpack.c.l.s4 1983009808
    %v1490 = vunpack.c.0.s8 %v1489
    %v1491 = vlaneseq
    %v1492 = vshrl.u32 %v1491, 7
    %v1493 = vsub.s32 %v1490, %v1492
    %v1494 = vrot.slane %v1480, %v1493
    %v1495 = vcombine.high %v1487, %v1487
    %v1496 = vcombine.high %v1494, %v1494
    %v1625 = vrot.slane %v960, 7
    %v1626 = vrot.slane %v1625, 2
    %v1627 = vrot.slane %v968, 7
    %v1628 = vrot.slane %v1627, 2
    %v1629 = vrot.slane %v967, 7
    %v1630 = vrot.slane %v1629, 2
    %v1631 = vrot.slane %v969, 7
    %v1632 = vrot.slane %v1631, 2
    %v1633 = vrot.slane %v977, 7
    %v1634 = vrot.slane %v1633, 2
    %v1635 = vrot.slane %v985, 7
    %v1636 = vrot.slane %v1635, 2
    %v1637 = vrot.slane %v984, 7
    %v1638 = vrot.slane %v1637, 2
    %v1639 = vrot.slane %v986, 7
    %v1640 = vrot.slane %v1639, 2
    %v1641 = vrot.slane %v994, 7
    %v1642 = vrot.slane %v1641, 2
    %v1643 = vrot.slane %v1002, 7
    %v1644 = vrot.slane %v1643, 2
    %v1645 = vrot.slane %v1001, 7
    %v1646 = vrot.slane %v1645, 2
    %v1647 = vrot.slane %v1003, 7
    %v1648 = vrot.slane %v1647, 2
    %v1649 = vrot.slane %v1011, 7
    %v1650 = vrot.slane %v1649, 2
    %v1651 = vrot.slane %v1019, 7
    %v1652 = vrot.slane %v1651, 2
    %v1653 = vrot.slane %v1018, 7
    %v1654 = vrot.slane %v1653, 2
    %v1655 = vrot.slane %v1020, 7
    %v1656 = vrot.slane %v1655, 2
    %v1657 = vrot.slane %v1028, 7
    %v1658 = vrot.slane %v1657, 2
    %v1659 = vrot.slane %v1036, 7
    %v1660 = vrot.slane %v1659, 2
    %v1661 = vrot.slane %v1035, 7
    %v1662 = vrot.slane %v1661, 2
    %v1663 = vrot.slane %v1037, 7
    %v1664 = vrot.slane %v1663, 2
    %v1665 = vrot.slane %v1045, 7
    %v1666 = vrot.slane %v1665, 2
    %v1667 = vrot.slane %v1053, 7
    %v1668 = vrot.slane %v1667, 2
    %v1669 = vrot.slane %v1052, 7
    %v1670 = vrot.slane %v1669, 2
    %v1671 = vrot.slane %v1054, 7
    %v1672 = vrot.slane %v1671, 2
    %v1673 = vrot.slane %v1062, 7
    %v1674 = vrot.slane %v1673, 2
    %v1675 = vrot.slane %v1070, 7
    %v1676 = vrot.slane %v1675, 2
    %v1677 = vrot.slane %v1069, 7
    %v1678 = vrot.slane %v1677, 2
    %v1679 = vrot.slane %v1071, 7
    %v1680 = vrot.slane %v1679, 2
    %v1681 = vrot.slane %v1079, 7
    %v1682 = vrot.slane %v1681, 2
    %v1683 = vrot.slane %v1087, 7
    %v1684 = vrot.slane %v1683, 2
    %v1685 = vrot.slane %v1086, 7
    %v1686 = vrot.slane %v1685, 2
    %v1687 = vrot.slane %v1088, 7
    %v1688 = vrot.slane %v1687, 2
    %v1689 = vrot.slane %v1096, 7
    %v1690 = vrot.slane %v1689, 2
    %v1691 = vrot.slane %v1104, 7
    %v1692 = vrot.slane %v1691, 2
    %v1693 = vrot.slane %v1103, 7
    %v1694 = vrot.slane %v1693, 2
    %v1695 = vrot.slane %v1105, 7
    %v1696 = vrot.slane %v1695, 2
    %v1697 = vrot.slane %v1113, 7
    %v1698 = vrot.slane %v1697, 2
    %v1699 = vrot.slane %v1121, 7
    %v1700 = vrot.slane %v1699, 2
    %v1701 = vrot.slane %v1120, 7
    %v1702 = vrot.slane %v1701, 2
    %v1703 = vrot.slane %v1122, 7
    %v1704 = vrot.slane %v1703, 2
    %v1705 = vrot.slane %v1130, 7
    %v1706 = vrot.slane %v1705, 2
    %v1707 = vrot.slane %v1138, 7
    %v1708 = vrot.slane %v1707, 2
    %v1709 = vrot.slane %v1137, 7
    %v1710 = vrot.slane %v1709, 2
    %v1711 = vrot.slane %v1139, 7
    %v1712 = vrot.slane %v1711, 2
    %v1713 = vrot.slane %v1147, 7
    %v1714 = vrot.slane %v1713, 2
    %v1715 = vrot.slane %v1155, 7
    %v1716 = vrot.slane %v1715, 2
    %v1717 = vrot.slane %v1154, 7
    %v1718 = vrot.slane %v1717, 2
    %v1719 = vrot.slane %v1156, 7
    %v1720 = vrot.slane %v1719, 2
    %v1721 = vrot.slane %v1164, 7
    %v1722 = vrot.slane %v1721, 2
    %v1723 = vrot.slane %v1172, 7
    %v1724 = vrot.slane %v1723, 2
    %v1725 = vrot.slane %v1171, 7
    %v1726 = vrot.slane %v1725, 2
    %v1727 = vrot.slane %v1173, 7
    %v1728 = vrot.slane %v1727, 2
    %v1729 = vrot.slane %v1181, 7
    %v1730 = vrot.slane %v1729, 2
    %v1731 = vrot.slane %v1189, 7
    %v1732 = vrot.slane %v1731, 2
    %v1733 = vrot.slane %v1188, 7
    %v1734 = vrot.slane %v1733, 2
    %v1735 = vrot.slane %v1190, 7
    %v1736 = vrot.slane %v1735, 2
    %v1737 = vrot.slane %v1198, 7
    %v1738 = vrot.slane %v1737, 2
    %v1739 = vrot.slane %v1206, 7
    %v1740 = vrot.slane %v1739, 2
    %v1741 = vrot.slane %v1205, 7
    %v1742 = vrot.slane %v1741, 2
    %v1743 = vrot.slane %v1207, 7
    %v1744 = vrot.slane %v1743, 2
    %v1745 = vrot.slane %v1215, 7
    %v1746 = vrot.slane %v1745, 2
    %v1747 = vrot.slane %v1223, 7
    %v1748 = vrot.slane %v1747, 2
    %v1749 = vrot.slane %v1222, 7
    %v1750 = vrot.slane %v1749, 2
    %v1751 = vrot.slane %v1224, 7
    %v1752 = vrot.slane %v1751, 2
    %v1753 = vrot.slane %v1232, 7
    %v1754 = vrot.slane %v1753, 2
    %v1755 = vrot.slane %v1240, 7
    %v1756 = vrot.slane %v1755, 2
    %v1757 = vrot.slane %v1239, 7
    %v1758 = vrot.slane %v1757, 2
    %v1759 = vrot.slane %v1241, 7
    %v1760 = vrot.slane %v1759, 2
    %v1761 = vrot.slane %v1249, 7
    %v1762 = vrot.slane %v1761, 2
    %v1763 = vrot.slane %v1257, 7
    %v1764 = vrot.slane %v1763, 2
    %v1765 = vrot.slane %v1256, 7
    %v1766 = vrot.slane %v1765, 2
    %v1767 = vrot.slane %v1258, 7
    %v1768 = vrot.slane %v1767, 2
    %v1769 = vrot.slane %v1266, 7
    %v1770 = vrot.slane %v1769, 2
    %v1771 = vrot.slane %v1274, 7
    %v1772 = vrot.slane %v1771, 2
    %v1773 = vrot.slane %v1273, 7
    %v1774 = vrot.slane %v1773, 2
    %v1775 = vrot.slane %v1275, 7
    %v1776 = vrot.slane %v1775, 2
    %v1777 = vrot.slane %v1283, 7
    %v1778 = vrot.slane %v1777, 2
    %v1779 = vrot.slane %v1291, 7
    %v1780 = vrot.slane %v1779, 2
    %v1781 = vrot.slane %v1290, 7
    %v1782 = vrot.slane %v1781, 2
    %v1783 = vrot.slane %v1292, 7
    %v1784 = vrot.slane %v1783, 2
    %v1785 = vrot.slane %v1300, 7
    %v1786 = vrot.slane %v1785, 2
    %v1787 = vrot.slane %v1308, 7
    %v1788 = vrot.slane %v1787, 2
    %v1789 = vrot.slane %v1307, 7
    %v1790 = vrot.slane %v1789, 2
    %v1791 = vrot.slane %v1309, 7
    %v1792 = vrot.slane %v1791, 2
    %v1793 = vrot.slane %v1317, 7
    %v1794 = vrot.slane %v1793, 2
    %v1795 = vrot.slane %v1325, 7
    %v1796 = vrot.slane %v1795, 2
    %v1797 = vrot.slane %v1324, 7
    %v1798 = vrot.slane %v1797, 2
    %v1799 = vrot.slane %v1326, 7
    %v1800 = vrot.slane %v1799, 2
    %v1801 = vrot.slane %v1334, 7
    %v1802 = vrot.slane %v1801, 2
    %v1803 = vrot.slane %v1342, 7
    %v1804 = vrot.slane %v1803, 2
    %v1805 = vrot.slane %v1341, 7
    %v1806 = vrot.slane %v1805, 2
    %v1807 = vrot.slane %v1343, 7
    %v1808 = vrot.slane %v1807, 2
    %v1809 = vrot.slane %v1351, 7
    %v1810 = vrot.slane %v1809, 2
    %v1811 = vrot.slane %v1359, 7
    %v1812 = vrot.slane %v1811, 2
    %v1813 = vrot.slane %v1358, 7
    %v1814 = vrot.slane %v1813, 2
    %v1815 = vrot.slane %v1360, 7
    %v1816 = vrot.slane %v1815, 2
    %v1817 = vrot.slane %v1368, 7
    %v1818 = vrot.slane %v1817, 2
    %v1819 = vrot.slane %v1376, 7
    %v1820 = vrot.slane %v1819, 2
    %v1821 = vrot.slane %v1375, 7
    %v1822 = vrot.slane %v1821, 2
    %v1823 = vrot.slane %v1377, 7
    %v1824 = vrot.slane %v1823, 2
    %v1825 = vrot.slane %v1385, 7
    %v1826 = vrot.slane %v1825, 2
    %v1827 = vrot.slane %v1393, 7
    %v1828 = vrot.slane %v1827, 2
    %v1829 = vrot.slane %v1392, 7
    %v1830 = vrot.slane %v1829, 2
    %v1831 = vrot.slane %v1394, 7
    %v1832 = vrot.slane %v1831, 2
    %v1833 = vrot.slane %v1402, 7
    %v1834 = vrot.slane %v1833, 2
    %v1835 = vrot.slane %v1410, 7
    %v1836 = vrot.slane %v1835, 2
    %v1837 = vrot.slane %v1409, 7
    %v1838 = vrot.slane %v1837, 2
    %v1839 = vrot.slane %v1411, 7
    %v1840 = vrot.slane %v1839, 2
    %v1841 = vrot.slane %v1419, 7
    %v1842 = vrot.slane %v1841, 2
    %v1843 = vrot.slane %v1427, 7
    %v1844 = vrot.slane %v1843, 2
    %v1845 = vrot.slane %v1426, 7
    %v1846 = vrot.slane %v1845, 2
    %v1847 = vrot.slane %v1428, 7
    %v1848 = vrot.slane %v1847, 2
    %v1849 = vrot.slane %v1436, 7
    %v1850 = vrot.slane %v1849, 2
    %v1851 = vrot.slane %v1444, 7
    %v1852 = vrot.slane %v1851, 2
    %v1853 = vrot.slane %v1443, 7
    %v1854 = vrot.slane %v1853, 2
    %v1855 = vrot.slane %v1445, 7
    %v1856 = vrot.slane %v1855, 2
    %v1857 = vrot.slane %v1453, 7
    %v1858 = vrot.slane %v1857, 2
    %v1859 = vrot.slane %v1461, 7
    %v1860 = vrot.slane %v1859, 2
    %v1861 = vrot.slane %v1460, 7
    %v1862 = vrot.slane %v1861, 2
    %v1863 = vrot.slane %v1462, 7
    %v1864 = vrot.slane %v1863, 2
    %v1865 = vrot.slane %v1470, 7
    %v1866 = vrot.slane %v1865, 2
    %v1867 = vrot.slane %v1478, 7
    %v1868 = vrot.slane %v1867, 2
    %v1869 = vrot.slane %v1477, 7
    %v1870 = vrot.slane %v1869, 2
    %v1871 = vrot.slane %v1479, 7
    %v1872 = vrot.slane %v1871, 2
    %v1873 = vrot.slane %v1487, 7
    %v1874 = vrot.slane %v1873, 2
    %v1875 = vrot.slane %v1495, 7
    %v1876 = vrot.slane %v1875, 2
    %v1877 = vrot.slane %v1494, 7
    %v1878 = vrot.slane %v1877, 2
    %v1879 = vrot.slane %v1496, 7
    %v1880 = vrot.slane %v1879, 2
    %v2009 = vmax.f32 %v960, %v1626
    %v2010 = vmax.f32 %v968, %v1628
    %v2011 = vmax.f32 %v967, %v1630
    %v2012 = vmax.f32 %v969, %v1632
    %v2013 = vmax.f32 %v977, %v1634
    %v2014 = vmax.f32 %v985, %v1636
    %v2015 = vmax.f32 %v984, %v1638
    %v2016 = vmax.f32 %v986, %v1640
    %v2017 = vmax.f32 %v994, %v1642
    %v2018 = vmax.f32 %v1002, %v1644
    %v2019 = vmax.f32 %v1001, %v1646
    %v2020 = vmax.f32 %v1003, %v1648
    %v2021 = vmax.f32 %v1011, %v1650
    %v2022 = vmax.f32 %v1019, %v1652
    %v2023 = vmax.f32 %v1018, %v1654
    %v2024 = vmax.f32 %v1020, %v1656
    %v2025 = vmax.f32 %v1028, %v1658
    %v2026 = vmax.f32 %v1036, %v1660
    %v2027 = vmax.f32 %v1035, %v1662
    %v2028 = vmax.f32 %v1037, %v1664
    %v2029 = vmax.f32 %v1045, %v1666
    %v2030 = vmax.f32 %v1053, %v1668
    %v2031 = vmax.f32 %v1052, %v1670
    %v2032 = vmax.f32 %v1054, %v1672
    %v2033 = vmax.f32 %v1062, %v1674
    %v2034 = vmax.f32 %v1070, %v1676
    %v2035 = vmax.f32 %v1069, %v1678
    %v2036 = vmax.f32 %v1071, %v1680
    %v2037 = vmax.f32 %v1079, %v1682
    %v2038 = vmax.f32 %v1087, %v1684
    %v2039 = vmax.f32 %v1086, %v1686
    %v2040 = vmax.f32 %v1088, %v1688
    %v2041 = vmax.f32 %v1096, %v1690
    %v2042 = vmax.f32 %v1104, %v1692
    %v2043 = vmax.f32 %v1103, %v1694
    %v2044 = vmax.f32 %v1105, %v1696
    %v2045 = vmax.f32 %v1113, %v1698
    %v2046 = vmax.f32 %v1121, %v1700
    %v2047 = vmax.f32 %v1120, %v1702
    %v2048 = vmax.f32 %v1122, %v1704
    %v2049 = vmax.f32 %v1130, %v1706
    %v2050 = vmax.f32 %v1138, %v1708
    %v2051 = vmax.f32 %v1137, %v1710
    %v2052 = vmax.f32 %v1139, %v1712
    %v2053 = vmax.f32 %v1147, %v1714
    %v2054 = vmax.f32 %v1155, %v1716
    %v2055 = vmax.f32 %v1154, %v1718
    %v2056 = vmax.f32 %v1156, %v1720
    %v2057 = vmax.f32 %v1164, %v1722
    %v2058 = vmax.f32 %v1172, %v1724
    %v2059 = vmax.f32 %v1171, %v1726
    %v2060 = vmax.f32 %v1173, %v1728
    %v2061 = vmax.f32 %v1181, %v1730
    %v2062 = vmax.f32 %v1189, %v1732
    %v2063 = vmax.f32 %v1188, %v1734
    %v2064 = vmax.f32 %v1190, %v1736
    %v2065 = vmax.f32 %v1198, %v1738
    %v2066 = vmax.f32 %v1206, %v1740
    %v2067 = vmax.f32 %v1205, %v1742
    %v2068 = vmax.f32 %v1207, %v1744
    %v2069 = vmax.f32 %v1215, %v1746
    %v2070 = vmax.f32 %v1223, %v1748
    %v2071 = vmax.f32 %v1222, %v1750
    %v2072 = vmax.f32 %v1224, %v1752
    %v2073 = vmax.f32 %v1232, %v1754
    %v2074 = vmax.f32 %v1240, %v1756
    %v2075 = vmax.f32 %v1239, %v1758
    %v2076 = vmax.f32 %v1241, %v1760
    %v2077 = vmax.f32 %v1249, %v1762
    %v2078 = vmax.f32 %v1257, %v1764
    %v2079 = vmax.f32 %v1256, %v1766
    %v2080 = vmax.f32 %v1258, %v1768
    %v2081 = vmax.f32 %v1266, %v1770
    %v2082 = vmax.f32 %v1274, %v1772
    %v2083 = vmax.f32 %v1273, %v1774
    %v2084 = vmax.f32 %v1275, %v1776
    %v2085 = vmax.f32 %v1283, %v1778
    %v2086 = vmax.f32 %v1291, %v1780
    %v2087 = vmax.f32 %v1290, %v1782
    %v2088 = vmax.f32 %v1292, %v1784
    %v2089 = vmax.f32 %v1300, %v1786
    %v2090 = vmax.f32 %v1308, %v1788
    %v2091 = vmax.f32 %v1307, %v1790
    %v2092 = vmax.f32 %v1309, %v1792
    %v2093 = vmax.f32 %v1317, %v1794
    %v2094 = vmax.f32 %v1325, %v1796
    %v2095 = vmax.f32 %v1324, %v1798
    %v2096 = vmax.f32 %v1326, %v1800
    %v2097 = vmax.f32 %v1334, %v1802
    %v2098 = vmax.f32 %v1342, %v1804
    %v2099 = vmax.f32 %v1341, %v1806
    %v2100 = vmax.f32 %v1343, %v1808
    %v2101 = vmax.f32 %v1351, %v1810
    %v2102 = vmax.f32 %v1359, %v1812
    %v2103 = vmax.f32 %v1358, %v1814
    %v2104 = vmax.f32 %v1360, %v1816
    %v2105 = vmax.f32 %v1368, %v1818
    %v2106 = vmax.f32 %v1376, %v1820
    %v2107 = vmax.f32 %v1375, %v1822
    %v2108 = vmax.f32 %v1377, %v1824
    %v2109 = vmax.f32 %v1385, %v1826
    %v2110 = vmax.f32 %v1393, %v1828
    %v2111 = vmax.f32 %v1392, %v1830
    %v2112 = vmax.f32 %v1394, %v1832
    %v2113 = vmax.f32 %v1402, %v1834
    %v2114 = vmax.f32 %v1410, %v1836
    %v2115 = vmax.f32 %v1409, %v1838
    %v2116 = vmax.f32 %v1411, %v1840
    %v2117 = vmax.f32 %v1419, %v1842
    %v2118 = vmax.f32 %v1427, %v1844
    %v2119 = vmax.f32 %v1426, %v1846
    %v2120 = vmax.f32 %v1428, %v1848
    %v2121 = vmax.f32 %v1436, %v1850
    %v2122 = vmax.f32 %v1444, %v1852
    %v2123 = vmax.f32 %v1443, %v1854
    %v2124 = vmax.f32 %v1445, %v1856
    %v2125 = vmax.f32 %v1453, %v1858
    %v2126 = vmax.f32 %v1461, %v1860
    %v2127 = vmax.f32 %v1460, %v1862
    %v2128 = vmax.f32 %v1462, %v1864
    %v2129 = vmax.f32 %v1470, %v1866
    %v2130 = vmax.f32 %v1478, %v1868
    %v2131 = vmax.f32 %v1477, %v1870
    %v2132 = vmax.f32 %v1479, %v1872
    %v2133 = vmax.f32 %v1487, %v1874
    %v2134 = vmax.f32 %v1495, %v1876
    %v2135 = vmax.f32 %v1494, %v1878
    %v2136 = vmax.f32 %v1496, %v1880
    %vm2137 = vcmask 261120
    %2138 = vst.msk [vmem:[#allocation2] sm:$0xff] %vm2137, 0.0
    %2139 = vst.msk [vmem:[#allocation2 + $0xc0] sm:$0xff] %vm2137, 0.0
    %s2140 = scalar_lea.vmem [#allocation2], 24
    %vm2141 = vcmask 253952
    %2142 = vst.msk [vmem:[%s2140] sm:$0x1] %vm2141, 0.0
    %2143 = vst.msk [vmem:[%s2140 + $0x18] sm:$0x1] %vm2141, 0.0
    %2144 = vst.msk [vmem:[%s2140 + $0x30] sm:$0x1] %vm2141, 0.0
    %2145 = vst.msk [vmem:[%s2140 + $0x48] sm:$0x1] %vm2141, 0.0
    %2146 = vst.msk [vmem:[%s2140 + $0x60] sm:$0x1] %vm2141, 0.0
    %2147 = vst.msk [vmem:[%s2140 + $0x78] sm:$0x1] %vm2141, 0.0
    %2148 = vst.msk [vmem:[%s2140 + $0x90] sm:$0x1] %vm2141, 0.0
    %2149 = vst.msk [vmem:[%s2140 + $0xc0] sm:$0x1] %vm2141, 0.0
    %2150 = vst.msk [vmem:[%s2140 + $0xd8] sm:$0x1] %vm2141, 0.0
    %2151 = vst.msk [vmem:[%s2140 + $0xf0] sm:$0x1] %vm2141, 0.0
    %2152 = vst.msk [vmem:[%s2140 + $0x108] sm:$0x1] %vm2141, 0.0
    %2153 = vst.msk [vmem:[%s2140 + $0x120] sm:$0x1] %vm2141, 0.0
    %2154 = vst.msk [vmem:[%s2140 + $0x138] sm:$0x1] %vm2141, 0.0
    %2155 = vst.msk [vmem:[%s2140 + $0x150] sm:$0x1] %vm2141, 0.0
    %v2254 = vlaneseq
    %v2255 = vshrl.u32 %v2254, 7
    %v2256 = vsub.s32 0, %v2255
    %v2257 = vrot.slane %v2009, %v2256
    %v2258 = vlaneseq
    %v2259 = vshrl.u32 %v2258, 7
    %v2260 = vsub.s32 0, %v2259
    %v2261 = vrot.slane %v2010, %v2260
    %v2262 = vlaneseq
    %v2263 = vshrl.u32 %v2262, 7
    %v2264 = vsub.s32 0, %v2263
    %v2265 = vrot.slane %v2011, %v2264
    %v2266 = vlaneseq
    %v2267 = vshrl.u32 %v2266, 7
    %v2268 = vsub.s32 0, %v2267
    %v2269 = vrot.slane %v2012, %v2268
    %v2270 = vlaneseq
    %v2271 = vshrl.u32 %v2270, 7
    %v2272 = vsub.s32 0, %v2271
    %v2273 = vrot.slane %v2013, %v2272
    %v2274 = vlaneseq
    %v2275 = vshrl.u32 %v2274, 7
    %v2276 = vsub.s32 0, %v2275
    %v2277 = vrot.slane %v2014, %v2276
    %v2278 = vlaneseq
    %v2279 = vshrl.u32 %v2278, 7
    %v2280 = vsub.s32 0, %v2279
    %v2281 = vrot.slane %v2015, %v2280
    %v2282 = vlaneseq
    %v2283 = vshrl.u32 %v2282, 7
    %v2284 = vsub.s32 0, %v2283
    %v2285 = vrot.slane %v2017, %v2284
    %v2286 = vlaneseq
    %v2287 = vshrl.u32 %v2286, 7
    %v2288 = vsub.s32 0, %v2287
    %v2289 = vrot.slane %v2018, %v2288
    %v2290 = vlaneseq
    %v2291 = vshrl.u32 %v2290, 7
    %v2292 = vsub.s32 0, %v2291
    %v2293 = vrot.slane %v2019, %v2292
    %v2294 = vlaneseq
    %v2295 = vshrl.u32 %v2294, 7
    %v2296 = vsub.s32 0, %v2295
    %v2297 = vrot.slane %v2020, %v2296
    %v2298 = vlaneseq
    %v2299 = vshrl.u32 %v2298, 7
    %v2300 = vsub.s32 0, %v2299
    %v2301 = vrot.slane %v2021, %v2300
    %v2302 = vlaneseq
    %v2303 = vshrl.u32 %v2302, 7
    %v2304 = vsub.s32 0, %v2303
    %v2305 = vrot.slane %v2022, %v2304
    %v2306 = vlaneseq
    %v2307 = vshrl.u32 %v2306, 7
    %v2308 = vsub.s32 0, %v2307
    %v2309 = vrot.slane %v2023, %v2308
    %v2310 = vlaneseq
    %v2311 = vshrl.u32 %v2310, 7
    %v2312 = vsub.s32 0, %v2311
    %v2313 = vrot.slane %v2025, %v2312
    %v2314 = vlaneseq
    %v2315 = vshrl.u32 %v2314, 7
    %v2316 = vsub.s32 0, %v2315
    %v2317 = vrot.slane %v2026, %v2316
    %v2318 = vlaneseq
    %v2319 = vshrl.u32 %v2318, 7
    %v2320 = vsub.s32 0, %v2319
    %v2321 = vrot.slane %v2027, %v2320
    %v2322 = vlaneseq
    %v2323 = vshrl.u32 %v2322, 7
    %v2324 = vsub.s32 0, %v2323
    %v2325 = vrot.slane %v2028, %v2324
    %v2326 = vlaneseq
    %v2327 = vshrl.u32 %v2326, 7
    %v2328 = vsub.s32 0, %v2327
    %v2329 = vrot.slane %v2029, %v2328
    %v2330 = vlaneseq
    %v2331 = vshrl.u32 %v2330, 7
    %v2332 = vsub.s32 0, %v2331
    %v2333 = vrot.slane %v2030, %v2332
    %v2334 = vlaneseq
    %v2335 = vshrl.u32 %v2334, 7
    %v2336 = vsub.s32 0, %v2335
    %v2337 = vrot.slane %v2031, %v2336
    %v2338 = vlaneseq
    %v2339 = vshrl.u32 %v2338, 7
    %v2340 = vsub.s32 0, %v2339
    %v2341 = vrot.slane %v2033, %v2340
    %v2342 = vlaneseq
    %v2343 = vshrl.u32 %v2342, 7
    %v2344 = vsub.s32 0, %v2343
    %v2345 = vrot.slane %v2034, %v2344
    %v2346 = vlaneseq
    %v2347 = vshrl.u32 %v2346, 7
    %v2348 = vsub.s32 0, %v2347
    %v2349 = vrot.slane %v2035, %v2348
    %v2350 = vlaneseq
    %v2351 = vshrl.u32 %v2350, 7
    %v2352 = vsub.s32 0, %v2351
    %v2353 = vrot.slane %v2036, %v2352
    %v2354 = vlaneseq
    %v2355 = vshrl.u32 %v2354, 7
    %v2356 = vsub.s32 0, %v2355
    %v2357 = vrot.slane %v2037, %v2356
    %v2358 = vlaneseq
    %v2359 = vshrl.u32 %v2358, 7
    %v2360 = vsub.s32 0, %v2359
    %v2361 = vrot.slane %v2038, %v2360
    %v2362 = vlaneseq
    %v2363 = vshrl.u32 %v2362, 7
    %v2364 = vsub.s32 0, %v2363
    %v2365 = vrot.slane %v2039, %v2364
    %v2366 = vlaneseq
    %v2367 = vshrl.u32 %v2366, 7
    %v2368 = vsub.s32 0, %v2367
    %v2369 = vrot.slane %v2041, %v2368
    %v2370 = vlaneseq
    %v2371 = vshrl.u32 %v2370, 7
    %v2372 = vsub.s32 0, %v2371
    %v2373 = vrot.slane %v2042, %v2372
    %v2374 = vlaneseq
    %v2375 = vshrl.u32 %v2374, 7
    %v2376 = vsub.s32 0, %v2375
    %v2377 = vrot.slane %v2043, %v2376
    %v2378 = vlaneseq
    %v2379 = vshrl.u32 %v2378, 7
    %v2380 = vsub.s32 0, %v2379
    %v2381 = vrot.slane %v2044, %v2380
    %v2382 = vlaneseq
    %v2383 = vshrl.u32 %v2382, 7
    %v2384 = vsub.s32 0, %v2383
    %v2385 = vrot.slane %v2045, %v2384
    %v2386 = vlaneseq
    %v2387 = vshrl.u32 %v2386, 7
    %v2388 = vsub.s32 0, %v2387
    %v2389 = vrot.slane %v2046, %v2388
    %v2390 = vlaneseq
    %v2391 = vshrl.u32 %v2390, 7
    %v2392 = vsub.s32 0, %v2391
    %v2393 = vrot.slane %v2047, %v2392
    %v2394 = vlaneseq
    %v2395 = vshrl.u32 %v2394, 7
    %v2396 = vsub.s32 0, %v2395
    %v2397 = vrot.slane %v2049, %v2396
    %v2398 = vlaneseq
    %v2399 = vshrl.u32 %v2398, 7
    %v2400 = vsub.s32 0, %v2399
    %v2401 = vrot.slane %v2050, %v2400
    %v2402 = vlaneseq
    %v2403 = vshrl.u32 %v2402, 7
    %v2404 = vsub.s32 0, %v2403
    %v2405 = vrot.slane %v2051, %v2404
    %v2406 = vlaneseq
    %v2407 = vshrl.u32 %v2406, 7
    %v2408 = vsub.s32 0, %v2407
    %v2409 = vrot.slane %v2052, %v2408
    %v2410 = vlaneseq
    %v2411 = vshrl.u32 %v2410, 7
    %v2412 = vsub.s32 0, %v2411
    %v2413 = vrot.slane %v2053, %v2412
    %v2414 = vlaneseq
    %v2415 = vshrl.u32 %v2414, 7
    %v2416 = vsub.s32 0, %v2415
    %v2417 = vrot.slane %v2054, %v2416
    %v2418 = vlaneseq
    %v2419 = vshrl.u32 %v2418, 7
    %v2420 = vsub.s32 0, %v2419
    %v2421 = vrot.slane %v2055, %v2420
    %v2422 = vlaneseq
    %v2423 = vshrl.u32 %v2422, 7
    %v2424 = vsub.s32 0, %v2423
    %v2425 = vrot.slane %v2057, %v2424
    %v2426 = vlaneseq
    %v2427 = vshrl.u32 %v2426, 7
    %v2428 = vsub.s32 0, %v2427
    %v2429 = vrot.slane %v2058, %v2428
    %v2430 = vlaneseq
    %v2431 = vshrl.u32 %v2430, 7
    %v2432 = vsub.s32 0, %v2431
    %v2433 = vrot.slane %v2059, %v2432
    %v2434 = vlaneseq
    %v2435 = vshrl.u32 %v2434, 7
    %v2436 = vsub.s32 0, %v2435
    %v2437 = vrot.slane %v2060, %v2436
    %v2438 = vlaneseq
    %v2439 = vshrl.u32 %v2438, 7
    %v2440 = vsub.s32 0, %v2439
    %v2441 = vrot.slane %v2061, %v2440
    %v2442 = vlaneseq
    %v2443 = vshrl.u32 %v2442, 7
    %v2444 = vsub.s32 0, %v2443
    %v2445 = vrot.slane %v2062, %v2444
    %v2446 = vlaneseq
    %v2447 = vshrl.u32 %v2446, 7
    %v2448 = vsub.s32 0, %v2447
    %v2449 = vrot.slane %v2063, %v2448
    %v2450 = vlaneseq
    %v2451 = vshrl.u32 %v2450, 7
    %v2452 = vsub.s32 0, %v2451
    %v2453 = vrot.slane %v2073, %v2452
    %v2454 = vlaneseq
    %v2455 = vshrl.u32 %v2454, 7
    %v2456 = vsub.s32 0, %v2455
    %v2457 = vrot.slane %v2074, %v2456
    %v2458 = vlaneseq
    %v2459 = vshrl.u32 %v2458, 7
    %v2460 = vsub.s32 0, %v2459
    %v2461 = vrot.slane %v2075, %v2460
    %v2462 = vlaneseq
    %v2463 = vshrl.u32 %v2462, 7
    %v2464 = vsub.s32 0, %v2463
    %v2465 = vrot.slane %v2076, %v2464
    %v2466 = vlaneseq
    %v2467 = vshrl.u32 %v2466, 7
    %v2468 = vsub.s32 0, %v2467
    %v2469 = vrot.slane %v2077, %v2468
    %v2470 = vlaneseq
    %v2471 = vshrl.u32 %v2470, 7
    %v2472 = vsub.s32 0, %v2471
    %v2473 = vrot.slane %v2078, %v2472
    %v2474 = vlaneseq
    %v2475 = vshrl.u32 %v2474, 7
    %v2476 = vsub.s32 0, %v2475
    %v2477 = vrot.slane %v2079, %v2476
    %v2478 = vlaneseq
    %v2479 = vshrl.u32 %v2478, 7
    %v2480 = vsub.s32 0, %v2479
    %v2481 = vrot.slane %v2081, %v2480
    %v2482 = vlaneseq
    %v2483 = vshrl.u32 %v2482, 7
    %v2484 = vsub.s32 0, %v2483
    %v2485 = vrot.slane %v2082, %v2484
    %v2486 = vlaneseq
    %v2487 = vshrl.u32 %v2486, 7
    %v2488 = vsub.s32 0, %v2487
    %v2489 = vrot.slane %v2083, %v2488
    %v2490 = vlaneseq
    %v2491 = vshrl.u32 %v2490, 7
    %v2492 = vsub.s32 0, %v2491
    %v2493 = vrot.slane %v2084, %v2492
    %v2494 = vlaneseq
    %v2495 = vshrl.u32 %v2494, 7
    %v2496 = vsub.s32 0, %v2495
    %v2497 = vrot.slane %v2085, %v2496
    %v2498 = vlaneseq
    %v2499 = vshrl.u32 %v2498, 7
    %v2500 = vsub.s32 0, %v2499
    %v2501 = vrot.slane %v2086, %v2500
    %v2502 = vlaneseq
    %v2503 = vshrl.u32 %v2502, 7
    %v2504 = vsub.s32 0, %v2503
    %v2505 = vrot.slane %v2087, %v2504
    %v2506 = vlaneseq
    %v2507 = vshrl.u32 %v2506, 7
    %v2508 = vsub.s32 0, %v2507
    %v2509 = vrot.slane %v2089, %v2508
    %v2510 = vlaneseq
    %v2511 = vshrl.u32 %v2510, 7
    %v2512 = vsub.s32 0, %v2511
    %v2513 = vrot.slane %v2090, %v2512
    %v2514 = vlaneseq
    %v2515 = vshrl.u32 %v2514, 7
    %v2516 = vsub.s32 0, %v2515
    %v2517 = vrot.slane %v2091, %v2516
    %v2518 = vlaneseq
    %v2519 = vshrl.u32 %v2518, 7
    %v2520 = vsub.s32 0, %v2519
    %v2521 = vrot.slane %v2092, %v2520
    %v2522 = vlaneseq
    %v2523 = vshrl.u32 %v2522, 7
    %v2524 = vsub.s32 0, %v2523
    %v2525 = vrot.slane %v2093, %v2524
    %v2526 = vlaneseq
    %v2527 = vshrl.u32 %v2526, 7
    %v2528 = vsub.s32 0, %v2527
    %v2529 = vrot.slane %v2094, %v2528
    %v2530 = vlaneseq
    %v2531 = vshrl.u32 %v2530, 7
    %v2532 = vsub.s32 0, %v2531
    %v2533 = vrot.slane %v2095, %v2532
    %v2534 = vlaneseq
    %v2535 = vshrl.u32 %v2534, 7
    %v2536 = vsub.s32 0, %v2535
    %v2537 = vrot.slane %v2097, %v2536
    %v2538 = vlaneseq
    %v2539 = vshrl.u32 %v2538, 7
    %v2540 = vsub.s32 0, %v2539
    %v2541 = vrot.slane %v2098, %v2540
    %v2542 = vlaneseq
    %v2543 = vshrl.u32 %v2542, 7
    %v2544 = vsub.s32 0, %v2543
    %v2545 = vrot.slane %v2099, %v2544
    %v2546 = vlaneseq
    %v2547 = vshrl.u32 %v2546, 7
    %v2548 = vsub.s32 0, %v2547
    %v2549 = vrot.slane %v2100, %v2548
    %v2550 = vlaneseq
    %v2551 = vshrl.u32 %v2550, 7
    %v2552 = vsub.s32 0, %v2551
    %v2553 = vrot.slane %v2101, %v2552
    %v2554 = vlaneseq
    %v2555 = vshrl.u32 %v2554, 7
    %v2556 = vsub.s32 0, %v2555
    %v2557 = vrot.slane %v2102, %v2556
    %v2558 = vlaneseq
    %v2559 = vshrl.u32 %v2558, 7
    %v2560 = vsub.s32 0, %v2559
    %v2561 = vrot.slane %v2103, %v2560
    %v2562 = vlaneseq
    %v2563 = vshrl.u32 %v2562, 7
    %v2564 = vsub.s32 0, %v2563
    %v2565 = vrot.slane %v2105, %v2564
    %v2566 = vlaneseq
    %v2567 = vshrl.u32 %v2566, 7
    %v2568 = vsub.s32 0, %v2567
    %v2569 = vrot.slane %v2106, %v2568
    %v2570 = vlaneseq
    %v2571 = vshrl.u32 %v2570, 7
    %v2572 = vsub.s32 0, %v2571
    %v2573 = vrot.slane %v2107, %v2572
    %v2574 = vlaneseq
    %v2575 = vshrl.u32 %v2574, 7
    %v2576 = vsub.s32 0, %v2575
    %v2577 = vrot.slane %v2108, %v2576
    %v2578 = vlaneseq
    %v2579 = vshrl.u32 %v2578, 7
    %v2580 = vsub.s32 0, %v2579
    %v2581 = vrot.slane %v2109, %v2580
    %v2582 = vlaneseq
    %v2583 = vshrl.u32 %v2582, 7
    %v2584 = vsub.s32 0, %v2583
    %v2585 = vrot.slane %v2110, %v2584
    %v2586 = vlaneseq
    %v2587 = vshrl.u32 %v2586, 7
    %v2588 = vsub.s32 0, %v2587
    %v2589 = vrot.slane %v2111, %v2588
    %v2590 = vlaneseq
    %v2591 = vshrl.u32 %v2590, 7
    %v2592 = vsub.s32 0, %v2591
    %v2593 = vrot.slane %v2113, %v2592
    %v2594 = vlaneseq
    %v2595 = vshrl.u32 %v2594, 7
    %v2596 = vsub.s32 0, %v2595
    %v2597 = vrot.slane %v2114, %v2596
    %v2598 = vlaneseq
    %v2599 = vshrl.u32 %v2598, 7
    %v2600 = vsub.s32 0, %v2599
    %v2601 = vrot.slane %v2115, %v2600
    %v2602 = vlaneseq
    %v2603 = vshrl.u32 %v2602, 7
    %v2604 = vsub.s32 0, %v2603
    %v2605 = vrot.slane %v2116, %v2604
    %v2606 = vlaneseq
    %v2607 = vshrl.u32 %v2606, 7
    %v2608 = vsub.s32 0, %v2607
    %v2609 = vrot.slane %v2117, %v2608
    %v2610 = vlaneseq
    %v2611 = vshrl.u32 %v2610, 7
    %v2612 = vsub.s32 0, %v2611
    %v2613 = vrot.slane %v2118, %v2612
    %v2614 = vlaneseq
    %v2615 = vshrl.u32 %v2614, 7
    %v2616 = vsub.s32 0, %v2615
    %v2617 = vrot.slane %v2119, %v2616
    %v2618 = vlaneseq
    %v2619 = vshrl.u32 %v2618, 7
    %v2620 = vsub.s32 0, %v2619
    %v2621 = vrot.slane %v2121, %v2620
    %v2622 = vlaneseq
    %v2623 = vshrl.u32 %v2622, 7
    %v2624 = vsub.s32 0, %v2623
    %v2625 = vrot.slane %v2122, %v2624
    %v2626 = vlaneseq
    %v2627 = vshrl.u32 %v2626, 7
    %v2628 = vsub.s32 0, %v2627
    %v2629 = vrot.slane %v2123, %v2628
    %v2630 = vlaneseq
    %v2631 = vshrl.u32 %v2630, 7
    %v2632 = vsub.s32 0, %v2631
    %v2633 = vrot.slane %v2124, %v2632
    %v2634 = vlaneseq
    %v2635 = vshrl.u32 %v2634, 7
    %v2636 = vsub.s32 0, %v2635
    %v2637 = vrot.slane %v2125, %v2636
    %v2638 = vlaneseq
    %v2639 = vshrl.u32 %v2638, 7
    %v2640 = vsub.s32 0, %v2639
    %v2641 = vrot.slane %v2126, %v2640
    %v2642 = vlaneseq
    %v2643 = vshrl.u32 %v2642, 7
    %v2644 = vsub.s32 0, %v2643
    %v2645 = vrot.slane %v2127, %v2644
    %vm2646 = vcmask 1042434
    %v2647 = vsel %vm2646, %v2261, %v2257
    %vm2648 = vcmask 1043459
    %v2649 = vsel %vm2648, %v2265, %v2647
    %vm2650 = vcmask 1044484
    %v2651 = vsel %vm2650, %v2269, %v2649
    %vm2652 = vcmask 1045509
    %v2653 = vsel %vm2652, %v2273, %v2651
    %vm2654 = vcmask 1046534
    %v2655 = vsel %vm2654, %v2277, %v2653
    %vm2656 = vcmask 1047559
    %v2657 = vsel %vm2656, %v2281, %v2655
    %v2658 = vsel %vm2646, %v2289, %v2285
    %v2659 = vsel %vm2648, %v2293, %v2658
    %v2660 = vsel %vm2650, %v2297, %v2659
    %v2661 = vsel %vm2652, %v2301, %v2660
    %v2662 = vsel %vm2654, %v2305, %v2661
    %v2663 = vsel %vm2656, %v2309, %v2662
    %v2664 = vsel %vm2646, %v2317, %v2313
    %v2665 = vsel %vm2648, %v2321, %v2664
    %v2666 = vsel %vm2650, %v2325, %v2665
    %v2667 = vsel %vm2652, %v2329, %v2666
    %v2668 = vsel %vm2654, %v2333, %v2667
    %v2669 = vsel %vm2656, %v2337, %v2668
    %v2670 = vsel %vm2646, %v2345, %v2341
    %v2671 = vsel %vm2648, %v2349, %v2670
    %v2672 = vsel %vm2650, %v2353, %v2671
    %v2673 = vsel %vm2652, %v2357, %v2672
    %v2674 = vsel %vm2654, %v2361, %v2673
    %v2675 = vsel %vm2656, %v2365, %v2674
    %v2676 = vsel %vm2646, %v2373, %v2369
    %v2677 = vsel %vm2648, %v2377, %v2676
    %v2678 = vsel %vm2650, %v2381, %v2677
    %v2679 = vsel %vm2652, %v2385, %v2678
    %v2680 = vsel %vm2654, %v2389, %v2679
    %v2681 = vsel %vm2656, %v2393, %v2680
    %v2682 = vsel %vm2646, %v2401, %v2397
    %v2683 = vsel %vm2648, %v2405, %v2682
    %v2684 = vsel %vm2650, %v2409, %v2683
    %v2685 = vsel %vm2652, %v2413, %v2684
    %v2686 = vsel %vm2654, %v2417, %v2685
    %v2687 = vsel %vm2656, %v2421, %v2686
    %v2688 = vsel %vm2646, %v2429, %v2425
    %v2689 = vsel %vm2648, %v2433, %v2688
    %v2690 = vsel %vm2650, %v2437, %v2689
    %v2691 = vsel %vm2652, %v2441, %v2690
    %v2692 = vsel %vm2654, %v2445, %v2691
    %v2693 = vsel %vm2656, %v2449, %v2692
    %v2694 = vsel %vm2646, %v2457, %v2453
    %v2695 = vsel %vm2648, %v2461, %v2694
    %v2696 = vsel %vm2650, %v2465, %v2695
    %v2697 = vsel %vm2652, %v2469, %v2696
    %v2698 = vsel %vm2654, %v2473, %v2697
    %v2699 = vsel %vm2656, %v2477, %v2698
    %v2700 = vsel %vm2646, %v2485, %v2481
    %v2701 = vsel %vm2648, %v2489, %v2700
    %v2702 = vsel %vm2650, %v2493, %v2701
    %v2703 = vsel %vm2652, %v2497, %v2702
    %v2704 = vsel %vm2654, %v2501, %v2703
    %v2705 = vsel %vm2656, %v2505, %v2704
    %v2706 = vsel %vm2646, %v2513, %v2509
    %v2707 = vsel %vm2648, %v2517, %v2706
    %v2708 = vsel %vm2650, %v2521, %v2707
    %v2709 = vsel %vm2652, %v2525, %v2708
    %v2710 = vsel %vm2654, %v2529, %v2709
    %v2711 = vsel %vm2656, %v2533, %v2710
    %v2712 = vsel %vm2646, %v2541, %v2537
    %v2713 = vsel %vm2648, %v2545, %v2712
    %v2714 = vsel %vm2650, %v2549, %v2713
    %v2715 = vsel %vm2652, %v2553, %v2714
    %v2716 = vsel %vm2654, %v2557, %v2715
    %v2717 = vsel %vm2656, %v2561, %v2716
    %v2718 = vsel %vm2646, %v2569, %v2565
    %v2719 = vsel %vm2648, %v2573, %v2718
    %v2720 = vsel %vm2650, %v2577, %v2719
    %v2721 = vsel %vm2652, %v2581, %v2720
    %v2722 = vsel %vm2654, %v2585, %v2721
    %v2723 = vsel %vm2656, %v2589, %v2722
    %v2724 = vsel %vm2646, %v2597, %v2593
    %v2725 = vsel %vm2648, %v2601, %v2724
    %v2726 = vsel %vm2650, %v2605, %v2725
    %v2727 = vsel %vm2652, %v2609, %v2726
    %v2728 = vsel %vm2654, %v2613, %v2727
    %v2729 = vsel %vm2656, %v2617, %v2728
    %v2730 = vsel %vm2646, %v2625, %v2621
    %v2731 = vsel %vm2648, %v2629, %v2730
    %v2732 = vsel %vm2650, %v2633, %v2731
    %v2733 = vsel %vm2652, %v2637, %v2732
    %v2734 = vsel %vm2654, %v2641, %v2733
    %v2735 = vsel %vm2656, %v2645, %v2734
    %vm2750 = vcmask 261121
    %2751 = vst.msk [vmem:[%s2140] sm:$0xfe] %vm2750, %v2657
    %2752 = vst.msk [vmem:[%s2140 + $0x18] sm:$0xfe] %vm2750, %v2663
    %2753 = vst.msk [vmem:[%s2140 + $0x30] sm:$0xfe] %vm2750, %v2669
    %2754 = vst.msk [vmem:[%s2140 + $0x48] sm:$0xfe] %vm2750, %v2675
    %2755 = vst.msk [vmem:[%s2140 + $0x60] sm:$0xfe] %vm2750, %v2681
    %2756 = vst.msk [vmem:[%s2140 + $0x78] sm:$0xfe] %vm2750, %v2687
    %2757 = vst.msk [vmem:[%s2140 + $0x90] sm:$0xfe] %vm2750, %v2693
    %2758 = vst.msk [vmem:[%s2140 + $0xc0] sm:$0xfe] %vm2750, %v2699
    %2759 = vst.msk [vmem:[%s2140 + $0xd8] sm:$0xfe] %vm2750, %v2705
    %2760 = vst.msk [vmem:[%s2140 + $0xf0] sm:$0xfe] %vm2750, %v2711
    %2761 = vst.msk [vmem:[%s2140 + $0x108] sm:$0xfe] %vm2750, %v2717
    %2762 = vst.msk [vmem:[%s2140 + $0x120] sm:$0xfe] %vm2750, %v2723
    %2763 = vst.msk [vmem:[%s2140 + $0x138] sm:$0xfe] %vm2750, %v2729
    %2764 = vst.msk [vmem:[%s2140 + $0x150] sm:$0xfe] %vm2750, %v2735
    %vm2765 = vcmask 523520
    %2766 = vst.msk [vmem:[#allocation2] sm:$0xff] %vm2765, 0.0
    %2767 = vst.msk [vmem:[#allocation2 + $0xc0] sm:$0xff] %vm2765, 0.0
    %v2782 = vlaneseq
    %v2783 = vshrl.u32 %v2782, 7
    %v2784 = vsub.s32 0, %v2783
    %v2785 = vrot.slane %v2016, %v2784
    %v2786 = vlaneseq
    %v2787 = vshrl.u32 %v2786, 7
    %v2788 = vsub.s32 0, %v2787
    %v2789 = vrot.slane %v2024, %v2788
    %v2790 = vlaneseq
    %v2791 = vshrl.u32 %v2790, 7
    %v2792 = vsub.s32 0, %v2791
    %v2793 = vrot.slane %v2032, %v2792
    %v2794 = vlaneseq
    %v2795 = vshrl.u32 %v2794, 7
    %v2796 = vsub.s32 0, %v2795
    %v2797 = vrot.slane %v2040, %v2796
    %v2798 = vlaneseq
    %v2799 = vshrl.u32 %v2798, 7
    %v2800 = vsub.s32 0, %v2799
    %v2801 = vrot.slane %v2048, %v2800
    %v2802 = vlaneseq
    %v2803 = vshrl.u32 %v2802, 7
    %v2804 = vsub.s32 0, %v2803
    %v2805 = vrot.slane %v2056, %v2804
    %v2806 = vlaneseq
    %v2807 = vshrl.u32 %v2806, 7
    %v2808 = vsub.s32 0, %v2807
    %v2809 = vrot.slane %v2064, %v2808
    %v2810 = vlaneseq
    %v2811 = vshrl.u32 %v2810, 7
    %v2812 = vsub.s32 0, %v2811
    %v2813 = vrot.slane %v2080, %v2812
    %v2814 = vlaneseq
    %v2815 = vshrl.u32 %v2814, 7
    %v2816 = vsub.s32 0, %v2815
    %v2817 = vrot.slane %v2088, %v2816
    %v2818 = vlaneseq
    %v2819 = vshrl.u32 %v2818, 7
    %v2820 = vsub.s32 0, %v2819
    %v2821 = vrot.slane %v2096, %v2820
    %v2822 = vlaneseq
    %v2823 = vshrl.u32 %v2822, 7
    %v2824 = vsub.s32 0, %v2823
    %v2825 = vrot.slane %v2104, %v2824
    %v2826 = vlaneseq
    %v2827 = vshrl.u32 %v2826, 7
    %v2828 = vsub.s32 0, %v2827
    %v2829 = vrot.slane %v2112, %v2828
    %v2830 = vlaneseq
    %v2831 = vshrl.u32 %v2830, 7
    %v2832 = vsub.s32 0, %v2831
    %v2833 = vrot.slane %v2120, %v2832
    %v2834 = vlaneseq
    %v2835 = vshrl.u32 %v2834, 7
    %v2836 = vsub.s32 0, %v2835
    %v2837 = vrot.slane %v2128, %v2836
    %vm2838 = vcmask 1041409
    %v2839 = vsel %vm2838, %v2261, %v2257
    %v2840 = vsel %vm2646, %v2265, %v2839
    %v2841 = vsel %vm2648, %v2269, %v2840
    %v2842 = vsel %vm2650, %v2273, %v2841
    %v2843 = vsel %vm2652, %v2277, %v2842
    %v2844 = vsel %vm2654, %v2281, %v2843
    %v2845 = vsel %vm2656, %v2785, %v2844
    %v2846 = vsel %vm2838, %v2289, %v2285
    %v2847 = vsel %vm2646, %v2293, %v2846
    %v2848 = vsel %vm2648, %v2297, %v2847
    %v2849 = vsel %vm2650, %v2301, %v2848
    %v2850 = vsel %vm2652, %v2305, %v2849
    %v2851 = vsel %vm2654, %v2309, %v2850
    %v2852 = vsel %vm2656, %v2789, %v2851
    %v2853 = vsel %vm2838, %v2317, %v2313
    %v2854 = vsel %vm2646, %v2321, %v2853
    %v2855 = vsel %vm2648, %v2325, %v2854
    %v2856 = vsel %vm2650, %v2329, %v2855
    %v2857 = vsel %vm2652, %v2333, %v2856
    %v2858 = vsel %vm2654, %v2337, %v2857
    %v2859 = vsel %vm2656, %v2793, %v2858
    %v2860 = vsel %vm2838, %v2345, %v2341
    %v2861 = vsel %vm2646, %v2349, %v2860
    %v2862 = vsel %vm2648, %v2353, %v2861
    %v2863 = vsel %vm2650, %v2357, %v2862
    %v2864 = vsel %vm2652, %v2361, %v2863
    %v2865 = vsel %vm2654, %v2365, %v2864
    %v2866 = vsel %vm2656, %v2797, %v2865
    %v2867 = vsel %vm2838, %v2373, %v2369
    %v2868 = vsel %vm2646, %v2377, %v2867
    %v2869 = vsel %vm2648, %v2381, %v2868
    %v2870 = vsel %vm2650, %v2385, %v2869
    %v2871 = vsel %vm2652, %v2389, %v2870
    %v2872 = vsel %vm2654, %v2393, %v2871
    %v2873 = vsel %vm2656, %v2801, %v2872
    %v2874 = vsel %vm2838, %v2401, %v2397
    %v2875 = vsel %vm2646, %v2405, %v2874
    %v2876 = vsel %vm2648, %v2409, %v2875
    %v2877 = vsel %vm2650, %v2413, %v2876
    %v2878 = vsel %vm2652, %v2417, %v2877
    %v2879 = vsel %vm2654, %v2421, %v2878
    %v2880 = vsel %vm2656, %v2805, %v2879
    %v2881 = vsel %vm2838, %v2429, %v2425
    %v2882 = vsel %vm2646, %v2433, %v2881
    %v2883 = vsel %vm2648, %v2437, %v2882
    %v2884 = vsel %vm2650, %v2441, %v2883
    %v2885 = vsel %vm2652, %v2445, %v2884
    %v2886 = vsel %vm2654, %v2449, %v2885
    %v2887 = vsel %vm2656, %v2809, %v2886
    %v2888 = vsel %vm2838, %v2457, %v2453
    %v2889 = vsel %vm2646, %v2461, %v2888
    %v2890 = vsel %vm2648, %v2465, %v2889
    %v2891 = vsel %vm2650, %v2469, %v2890
    %v2892 = vsel %vm2652, %v2473, %v2891
    %v2893 = vsel %vm2654, %v2477, %v2892
    %v2894 = vsel %vm2656, %v2813, %v2893
    %v2895 = vsel %vm2838, %v2485, %v2481
    %v2896 = vsel %vm2646, %v2489, %v2895
    %v2897 = vsel %vm2648, %v2493, %v2896
    %v2898 = vsel %vm2650, %v2497, %v2897
    %v2899 = vsel %vm2652, %v2501, %v2898
    %v2900 = vsel %vm2654, %v2505, %v2899
    %v2901 = vsel %vm2656, %v2817, %v2900
    %v2902 = vsel %vm2838, %v2513, %v2509
    %v2903 = vsel %vm2646, %v2517, %v2902
    %v2904 = vsel %vm2648, %v2521, %v2903
    %v2905 = vsel %vm2650, %v2525, %v2904
    %v2906 = vsel %vm2652, %v2529, %v2905
    %v2907 = vsel %vm2654, %v2533, %v2906
    %v2908 = vsel %vm2656, %v2821, %v2907
    %v2909 = vsel %vm2838, %v2541, %v2537
    %v2910 = vsel %vm2646, %v2545, %v2909
    %v2911 = vsel %vm2648, %v2549, %v2910
    %v2912 = vsel %vm2650, %v2553, %v2911
    %v2913 = vsel %vm2652, %v2557, %v2912
    %v2914 = vsel %vm2654, %v2561, %v2913
    %v2915 = vsel %vm2656, %v2825, %v2914
    %v2916 = vsel %vm2838, %v2569, %v2565
    %v2917 = vsel %vm2646, %v2573, %v2916
    %v2918 = vsel %vm2648, %v2577, %v2917
    %v2919 = vsel %vm2650, %v2581, %v2918
    %v2920 = vsel %vm2652, %v2585, %v2919
    %v2921 = vsel %vm2654, %v2589, %v2920
    %v2922 = vsel %vm2656, %v2829, %v2921
    %v2923 = vsel %vm2838, %v2597, %v2593
    %v2924 = vsel %vm2646, %v2601, %v2923
    %v2925 = vsel %vm2648, %v2605, %v2924
    %v2926 = vsel %vm2650, %v2609, %v2925
    %v2927 = vsel %vm2652, %v2613, %v2926
    %v2928 = vsel %vm2654, %v2617, %v2927
    %v2929 = vsel %vm2656, %v2833, %v2928
    %v2930 = vsel %vm2838, %v2625, %v2621
    %v2931 = vsel %vm2646, %v2629, %v2930
    %v2932 = vsel %vm2648, %v2633, %v2931
    %v2933 = vsel %vm2650, %v2637, %v2932
    %v2934 = vsel %vm2652, %v2641, %v2933
    %v2935 = vsel %vm2654, %v2645, %v2934
    %v2936 = vsel %vm2656, %v2837, %v2935
    %2937 = vrot.lane.b32.xlu0 %v2845, 32
    %v2938 = vpop.permute.xlu0 %2937
    %2939 = vrot.lane.b32.xlu0 %v2852, 32
    %v2940 = vpop.permute.xlu0 %2939
    %2941 = vrot.lane.b32.xlu0 %v2859, 32
    %v2942 = vpop.permute.xlu0 %2941
    %2943 = vrot.lane.b32.xlu0 %v2866, 32
    %v2944 = vpop.permute.xlu0 %2943
    %2945 = vrot.lane.b32.xlu0 %v2873, 32
    %v2946 = vpop.permute.xlu0 %2945
    %2947 = vrot.lane.b32.xlu0 %v2880, 32
    %v2948 = vpop.permute.xlu0 %2947
    %2949 = vrot.lane.b32.xlu0 %v2887, 32
    %v2950 = vpop.permute.xlu0 %2949
    %2951 = vrot.lane.b32.xlu0 %v2894, 32
    %v2952 = vpop.permute.xlu0 %2951
    %2953 = vrot.lane.b32.xlu0 %v2901, 32
    %v2954 = vpop.permute.xlu0 %2953
    %2955 = vrot.lane.b32.xlu0 %v2908, 32
    %v2956 = vpop.permute.xlu0 %2955
    %2957 = vrot.lane.b32.xlu0 %v2915, 32
    %v2958 = vpop.permute.xlu0 %2957
    %2959 = vrot.lane.b32.xlu0 %v2922, 32
    %v2960 = vpop.permute.xlu0 %2959
    %2961 = vrot.lane.b32.xlu0 %v2929, 32
    %v2962 = vpop.permute.xlu0 %2961
    %2963 = vrot.lane.b32.xlu0 %v2936, 32
    %v2964 = vpop.permute.xlu0 %2963
    %2979 = vst.msk [vmem:[%s2140] sm:$0xff] %vm2765, %v2938
    %2980 = vst.msk [vmem:[%s2140 + $0x18] sm:$0xff] %vm2765, %v2940
    %2981 = vst.msk [vmem:[%s2140 + $0x30] sm:$0xff] %vm2765, %v2942
    %2982 = vst.msk [vmem:[%s2140 + $0x48] sm:$0xff] %vm2765, %v2944
    %2983 = vst.msk [vmem:[%s2140 + $0x60] sm:$0xff] %vm2765, %v2946
    %2984 = vst.msk [vmem:[%s2140 + $0x78] sm:$0xff] %vm2765, %v2948
    %2985 = vst.msk [vmem:[%s2140 + $0x90] sm:$0xff] %vm2765, %v2950
    %2986 = vst.msk [vmem:[%s2140 + $0xc0] sm:$0xff] %vm2765, %v2952
    %2987 = vst.msk [vmem:[%s2140 + $0xd8] sm:$0xff] %vm2765, %v2954
    %2988 = vst.msk [vmem:[%s2140 + $0xf0] sm:$0xff] %vm2765, %v2956
    %2989 = vst.msk [vmem:[%s2140 + $0x108] sm:$0xff] %vm2765, %v2958
    %2990 = vst.msk [vmem:[%s2140 + $0x120] sm:$0xff] %vm2765, %v2960
    %2991 = vst.msk [vmem:[%s2140 + $0x138] sm:$0xff] %vm2765, %v2962
    %2992 = vst.msk [vmem:[%s2140 + $0x150] sm:$0xff] %vm2765, %v2964
    %vm2993 = vcmask 785920
    %2994 = vst.msk [vmem:[#allocation2] sm:$0xff] %vm2993, 0.0
    %2995 = vst.msk [vmem:[#allocation2 + $0xc0] sm:$0xff] %vm2993, 0.0
    %vm2996 = vcmask 778752
    %2997 = vst.msk [vmem:[%s2140 + $0x7] sm:$0x1] %vm2996, 0.0
    %2998 = vst.msk [vmem:[%s2140 + $0x1f] sm:$0x1] %vm2996, 0.0
    %2999 = vst.msk [vmem:[%s2140 + $0x37] sm:$0x1] %vm2996, 0.0
    %3000 = vst.msk [vmem:[%s2140 + $0x4f] sm:$0x1] %vm2996, 0.0
    %3001 = vst.msk [vmem:[%s2140 + $0x67] sm:$0x1] %vm2996, 0.0
    %3002 = vst.msk [vmem:[%s2140 + $0x7f] sm:$0x1] %vm2996, 0.0
    %3003 = vst.msk [vmem:[%s2140 + $0x97] sm:$0x1] %vm2996, 0.0
    %3004 = vst.msk [vmem:[%s2140 + $0xc7] sm:$0x1] %vm2996, 0.0
    %3005 = vst.msk [vmem:[%s2140 + $0xdf] sm:$0x1] %vm2996, 0.0
    %3006 = vst.msk [vmem:[%s2140 + $0xf7] sm:$0x1] %vm2996, 0.0
    %3007 = vst.msk [vmem:[%s2140 + $0x10f] sm:$0x1] %vm2996, 0.0
    %3008 = vst.msk [vmem:[%s2140 + $0x127] sm:$0x1] %vm2996, 0.0
    %3009 = vst.msk [vmem:[%s2140 + $0x13f] sm:$0x1] %vm2996, 0.0
    %3010 = vst.msk [vmem:[%s2140 + $0x157] sm:$0x1] %vm2996, 0.0
    %v3011 = vsel %vm2838, %v2265, %v2261
    %v3012 = vsel %vm2646, %v2269, %v3011
    %v3013 = vsel %vm2648, %v2273, %v3012
    %v3014 = vsel %vm2650, %v2277, %v3013
    %v3015 = vsel %vm2652, %v2281, %v3014
    %v3016 = vsel %vm2654, %v2785, %v3015
    %v3017 = vsel %vm2838, %v2293, %v2289
    %v3018 = vsel %vm2646, %v2297, %v3017
    %v3019 = vsel %vm2648, %v2301, %v3018
    %v3020 = vsel %vm2650, %v2305, %v3019
    %v3021 = vsel %vm2652, %v2309, %v3020
    %v3022 = vsel %vm2654, %v2789, %v3021
    %v3023 = vsel %vm2838, %v2321, %v2317
    %v3024 = vsel %vm2646, %v2325, %v3023
    %v3025 = vsel %vm2648, %v2329, %v3024
    %v3026 = vsel %vm2650, %v2333, %v3025
    %v3027 = vsel %vm2652, %v2337, %v3026
    %v3028 = vsel %vm2654, %v2793, %v3027
    %v3029 = vsel %vm2838, %v2349, %v2345
    %v3030 = vsel %vm2646, %v2353, %v3029
    %v3031 = vsel %vm2648, %v2357, %v3030
    %v3032 = vsel %vm2650, %v2361, %v3031
    %v3033 = vsel %vm2652, %v2365, %v3032
    %v3034 = vsel %vm2654, %v2797, %v3033
    %v3035 = vsel %vm2838, %v2377, %v2373
    %v3036 = vsel %vm2646, %v2381, %v3035
    %v3037 = vsel %vm2648, %v2385, %v3036
    %v3038 = vsel %vm2650, %v2389, %v3037
    %v3039 = vsel %vm2652, %v2393, %v3038
    %v3040 = vsel %vm2654, %v2801, %v3039
    %v3041 = vsel %vm2838, %v2405, %v2401
    %v3042 = vsel %vm2646, %v2409, %v3041
    %v3043 = vsel %vm2648, %v2413, %v3042
    %v3044 = vsel %vm2650, %v2417, %v3043
    %v3045 = vsel %vm2652, %v2421, %v3044
    %v3046 = vsel %vm2654, %v2805, %v3045
    %v3047 = vsel %vm2838, %v2433, %v2429
    %v3048 = vsel %vm2646, %v2437, %v3047
    %v3049 = vsel %vm2648, %v2441, %v3048
    %v3050 = vsel %vm2650, %v2445, %v3049
    %v3051 = vsel %vm2652, %v2449, %v3050
    %v3052 = vsel %vm2654, %v2809, %v3051
    %v3053 = vsel %vm2838, %v2461, %v2457
    %v3054 = vsel %vm2646, %v2465, %v3053
    %v3055 = vsel %vm2648, %v2469, %v3054
    %v3056 = vsel %vm2650, %v2473, %v3055
    %v3057 = vsel %vm2652, %v2477, %v3056
    %v3058 = vsel %vm2654, %v2813, %v3057
    %v3059 = vsel %vm2838, %v2489, %v2485
    %v3060 = vsel %vm2646, %v2493, %v3059
    %v3061 = vsel %vm2648, %v2497, %v3060
    %v3062 = vsel %vm2650, %v2501, %v3061
    %v3063 = vsel %vm2652, %v2505, %v3062
    %v3064 = vsel %vm2654, %v2817, %v3063
    %v3065 = vsel %vm2838, %v2517, %v2513
    %v3066 = vsel %vm2646, %v2521, %v3065
    %v3067 = vsel %vm2648, %v2525, %v3066
    %v3068 = vsel %vm2650, %v2529, %v3067
    %v3069 = vsel %vm2652, %v2533, %v3068
    %v3070 = vsel %vm2654, %v2821, %v3069
    %v3071 = vsel %vm2838, %v2545, %v2541
    %v3072 = vsel %vm2646, %v2549, %v3071
    %v3073 = vsel %vm2648, %v2553, %v3072
    %v3074 = vsel %vm2650, %v2557, %v3073
    %v3075 = vsel %vm2652, %v2561, %v3074
    %v3076 = vsel %vm2654, %v2825, %v3075
    %v3077 = vsel %vm2838, %v2573, %v2569
    %v3078 = vsel %vm2646, %v2577, %v3077
    %v3079 = vsel %vm2648, %v2581, %v3078
    %v3080 = vsel %vm2650, %v2585, %v3079
    %v3081 = vsel %vm2652, %v2589, %v3080
    %v3082 = vsel %vm2654, %v2829, %v3081
    %v3083 = vsel %vm2838, %v2601, %v2597
    %v3084 = vsel %vm2646, %v2605, %v3083
    %v3085 = vsel %vm2648, %v2609, %v3084
    %v3086 = vsel %vm2650, %v2613, %v3085
    %v3087 = vsel %vm2652, %v2617, %v3086
    %v3088 = vsel %vm2654, %v2833, %v3087
    %v3089 = vsel %vm2838, %v2629, %v2625
    %v3090 = vsel %vm2646, %v2633, %v3089
    %v3091 = vsel %vm2648, %v2637, %v3090
    %v3092 = vsel %vm2650, %v2641, %v3091
    %v3093 = vsel %vm2652, %v2645, %v3092
    %v3094 = vsel %vm2654, %v2837, %v3093
    %3095 = vrot.lane.b32.xlu0 %v3016, 64
    %v3096 = vpop.permute.xlu0 %3095
    %3097 = vrot.lane.b32.xlu0 %v3022, 64
    %v3098 = vpop.permute.xlu0 %3097
    %3099 = vrot.lane.b32.xlu0 %v3028, 64
    %v3100 = vpop.permute.xlu0 %3099
    %3101 = vrot.lane.b32.xlu0 %v3034, 64
    %v3102 = vpop.permute.xlu0 %3101
    %3103 = vrot.lane.b32.xlu0 %v3040, 64
    %v3104 = vpop.permute.xlu0 %3103
    %3105 = vrot.lane.b32.xlu0 %v3046, 64
    %v3106 = vpop.permute.xlu0 %3105
    %3107 = vrot.lane.b32.xlu0 %v3052, 64
    %v3108 = vpop.permute.xlu0 %3107
    %3109 = vrot.lane.b32.xlu0 %v3058, 64
    %v3110 = vpop.permute.xlu0 %3109
    %3111 = vrot.lane.b32.xlu0 %v3064, 64
    %v3112 = vpop.permute.xlu0 %3111
    %3113 = vrot.lane.b32.xlu0 %v3070, 64
    %v3114 = vpop.permute.xlu0 %3113
    %3115 = vrot.lane.b32.xlu0 %v3076, 64
    %v3116 = vpop.permute.xlu0 %3115
    %3117 = vrot.lane.b32.xlu0 %v3082, 64
    %v3118 = vpop.permute.xlu0 %3117
    %3119 = vrot.lane.b32.xlu0 %v3088, 64
    %v3120 = vpop.permute.xlu0 %3119
    %3121 = vrot.lane.b32.xlu0 %v3094, 64
    %v3122 = vpop.permute.xlu0 %3121
    %vm3137 = vcmask 784896
    %3138 = vst.msk [vmem:[%s2140] sm:$0x7f] %vm3137, %v3096
    %3139 = vst.msk [vmem:[%s2140 + $0x18] sm:$0x7f] %vm3137, %v3098
    %3140 = vst.msk [vmem:[%s2140 + $0x30] sm:$0x7f] %vm3137, %v3100
    %3141 = vst.msk [vmem:[%s2140 + $0x48] sm:$0x7f] %vm3137, %v3102
    %3142 = vst.msk [vmem:[%s2140 + $0x60] sm:$0x7f] %vm3137, %v3104
    %3143 = vst.msk [vmem:[%s2140 + $0x78] sm:$0x7f] %vm3137, %v3106
    %3144 = vst.msk [vmem:[%s2140 + $0x90] sm:$0x7f] %vm3137, %v3108
    %3145 = vst.msk [vmem:[%s2140 + $0xc0] sm:$0x7f] %vm3137, %v3110
    %3146 = vst.msk [vmem:[%s2140 + $0xd8] sm:$0x7f] %vm3137, %v3112
    %3147 = vst.msk [vmem:[%s2140 + $0xf0] sm:$0x7f] %vm3137, %v3114
    %3148 = vst.msk [vmem:[%s2140 + $0x108] sm:$0x7f] %vm3137, %v3116
    %3149 = vst.msk [vmem:[%s2140 + $0x120] sm:$0x7f] %vm3137, %v3118
    %3150 = vst.msk [vmem:[%s2140 + $0x138] sm:$0x7f] %vm3137, %v3120
    %3151 = vst.msk [vmem:[%s2140 + $0x150] sm:$0x7f] %vm3137, %v3122
    %vm3152 = vcmask 1041152
    %3153 = vst.msk [vmem:[#allocation2] sm:$0x1] %vm3152, 0.0
    %3154 = vst.msk [vmem:[#allocation2 + $0x18] sm:$0x1] %vm3152, 0.0
    %3155 = vst.msk [vmem:[#allocation2 + $0x30] sm:$0x1] %vm3152, 0.0
    %3156 = vst.msk [vmem:[#allocation2 + $0x48] sm:$0x1] %vm3152, 0.0
    %3157 = vst.msk [vmem:[#allocation2 + $0x60] sm:$0x1] %vm3152, 0.0
    %3158 = vst.msk [vmem:[#allocation2 + $0x78] sm:$0x1] %vm3152, 0.0
    %3159 = vst.msk [vmem:[#allocation2 + $0x90] sm:$0x1] %vm3152, 0.0
    %3160 = vst.msk [vmem:[#allocation2 + $0xa8] sm:$0x1] %vm3152, 0.0
    %3161 = vst.msk [vmem:[#allocation2 + $0xc0] sm:$0x1] %vm3152, 0.0
    %3162 = vst.msk [vmem:[#allocation2 + $0xd8] sm:$0x1] %vm3152, 0.0
    %3163 = vst.msk [vmem:[#allocation2 + $0xf0] sm:$0x1] %vm3152, 0.0
    %3164 = vst.msk [vmem:[#allocation2 + $0x108] sm:$0x1] %vm3152, 0.0
    %3165 = vst.msk [vmem:[#allocation2 + $0x120] sm:$0x1] %vm3152, 0.0
    %3166 = vst.msk [vmem:[#allocation2 + $0x138] sm:$0x1] %vm3152, 0.0
    %3167 = vst.msk [vmem:[#allocation2 + $0x150] sm:$0x1] %vm3152, 0.0
    %3168 = vst.msk [vmem:[#allocation2 + $0x168] sm:$0x1] %vm3152, 0.0
    %v3183 = vlaneseq
    %v3184 = vshrl.u32 %v3183, 7
    %v3185 = vsub.s32 0, %v3184
    %v3186 = vrot.slane %v2065, %v3185
    %v3187 = vlaneseq
    %v3188 = vshrl.u32 %v3187, 7
    %v3189 = vsub.s32 0, %v3188
    %v3190 = vrot.slane %v2066, %v3189
    %v3191 = vlaneseq
    %v3192 = vshrl.u32 %v3191, 7
    %v3193 = vsub.s32 0, %v3192
    %v3194 = vrot.slane %v2067, %v3193
    %v3195 = vlaneseq
    %v3196 = vshrl.u32 %v3195, 7
    %v3197 = vsub.s32 0, %v3196
    %v3198 = vrot.slane %v2068, %v3197
    %v3199 = vlaneseq
    %v3200 = vshrl.u32 %v3199, 7
    %v3201 = vsub.s32 0, %v3200
    %v3202 = vrot.slane %v2069, %v3201
    %v3203 = vlaneseq
    %v3204 = vshrl.u32 %v3203, 7
    %v3205 = vsub.s32 0, %v3204
    %v3206 = vrot.slane %v2070, %v3205
    %v3207 = vlaneseq
    %v3208 = vshrl.u32 %v3207, 7
    %v3209 = vsub.s32 0, %v3208
    %v3210 = vrot.slane %v2071, %v3209
    %v3211 = vlaneseq
    %v3212 = vshrl.u32 %v3211, 7
    %v3213 = vsub.s32 0, %v3212
    %v3214 = vrot.slane %v2129, %v3213
    %v3215 = vlaneseq
    %v3216 = vshrl.u32 %v3215, 7
    %v3217 = vsub.s32 0, %v3216
    %v3218 = vrot.slane %v2130, %v3217
    %v3219 = vlaneseq
    %v3220 = vshrl.u32 %v3219, 7
    %v3221 = vsub.s32 0, %v3220
    %v3222 = vrot.slane %v2131, %v3221
    %v3223 = vlaneseq
    %v3224 = vshrl.u32 %v3223, 7
    %v3225 = vsub.s32 0, %v3224
    %v3226 = vrot.slane %v2132, %v3225
    %v3227 = vlaneseq
    %v3228 = vshrl.u32 %v3227, 7
    %v3229 = vsub.s32 0, %v3228
    %v3230 = vrot.slane %v2133, %v3229
    %v3231 = vlaneseq
    %v3232 = vshrl.u32 %v3231, 7
    %v3233 = vsub.s32 0, %v3232
    %v3234 = vrot.slane %v2134, %v3233
    %v3235 = vlaneseq
    %v3236 = vshrl.u32 %v3235, 7
    %v3237 = vsub.s32 0, %v3236
    %v3238 = vrot.slane %v2135, %v3237
    %v3239 = vsel %vm2646, %v3190, %v3186
    %v3240 = vsel %vm2648, %v3194, %v3239
    %v3241 = vsel %vm2650, %v3198, %v3240
    %v3242 = vsel %vm2652, %v3202, %v3241
    %v3243 = vsel %vm2654, %v3206, %v3242
    %v3244 = vsel %vm2656, %v3210, %v3243
    %v3245 = vsel %vm2646, %v3218, %v3214
    %v3246 = vsel %vm2648, %v3222, %v3245
    %v3247 = vsel %vm2650, %v3226, %v3246
    %v3248 = vsel %vm2652, %v3230, %v3247
    %v3249 = vsel %vm2654, %v3234, %v3248
    %v3250 = vsel %vm2656, %v3238, %v3249
    %3251 = vrot.lane.b32.xlu0 %v2657, 96
    %v3252 = vpop.permute.xlu0 %3251
    %3253 = vrot.lane.b32.xlu0 %v2663, 96
    %v3254 = vpop.permute.xlu0 %3253
    %3255 = vrot.lane.b32.xlu0 %v2669, 96
    %v3256 = vpop.permute.xlu0 %3255
    %3257 = vrot.lane.b32.xlu0 %v2675, 96
    %v3258 = vpop.permute.xlu0 %3257
    %3259 = vrot.lane.b32.xlu0 %v2681, 96
    %v3260 = vpop.permute.xlu0 %3259
    %3261 = vrot.lane.b32.xlu0 %v2687, 96
    %v3262 = vpop.permute.xlu0 %3261
    %3263 = vrot.lane.b32.xlu0 %v2693, 96
    %v3264 = vpop.permute.xlu0 %3263
    %3265 = vrot.lane.b32.xlu0 %v3244, 96
    %v3266 = vpop.permute.xlu0 %3265
    %3267 = vrot.lane.b32.xlu0 %v2699, 96
    %v3268 = vpop.permute.xlu0 %3267
    %3269 = vrot.lane.b32.xlu0 %v2705, 96
    %v3270 = vpop.permute.xlu0 %3269
    %3271 = vrot.lane.b32.xlu0 %v2711, 96
    %v3272 = vpop.permute.xlu0 %3271
    %3273 = vrot.lane.b32.xlu0 %v2717, 96
    %v3274 = vpop.permute.xlu0 %3273
    %3275 = vrot.lane.b32.xlu0 %v2723, 96
    %v3276 = vpop.permute.xlu0 %3275
    %3277 = vrot.lane.b32.xlu0 %v2729, 96
    %v3278 = vpop.permute.xlu0 %3277
    %3279 = vrot.lane.b32.xlu0 %v2735, 96
    %v3280 = vpop.permute.xlu0 %3279
    %3281 = vrot.lane.b32.xlu0 %v3250, 96
    %v3282 = vpop.permute.xlu0 %3281
    %vm3299 = vcmask 1048321
    %3300 = vst.msk [vmem:[#allocation2] sm:$0xfe] %vm3299, %v3252
    %3301 = vst.msk [vmem:[#allocation2 + $0x18] sm:$0xfe] %vm3299, %v3254
    %3302 = vst.msk [vmem:[#allocation2 + $0x30] sm:$0xfe] %vm3299, %v3256
    %3303 = vst.msk [vmem:[#allocation2 + $0x48] sm:$0xfe] %vm3299, %v3258
    %3304 = vst.msk [vmem:[#allocation2 + $0x60] sm:$0xfe] %vm3299, %v3260
    %3305 = vst.msk [vmem:[#allocation2 + $0x78] sm:$0xfe] %vm3299, %v3262
    %3306 = vst.msk [vmem:[#allocation2 + $0x90] sm:$0xfe] %vm3299, %v3264
    %3307 = vst.msk [vmem:[#allocation2 + $0xa8] sm:$0xfe] %vm3299, %v3266
    %3308 = vst.msk [vmem:[#allocation2 + $0xc0] sm:$0xfe] %vm3299, %v3268
    %3309 = vst.msk [vmem:[#allocation2 + $0xd8] sm:$0xfe] %vm3299, %v3270
    %3310 = vst.msk [vmem:[#allocation2 + $0xf0] sm:$0xfe] %vm3299, %v3272
    %3311 = vst.msk [vmem:[#allocation2 + $0x108] sm:$0xfe] %vm3299, %v3274
    %3312 = vst.msk [vmem:[#allocation2 + $0x120] sm:$0xfe] %vm3299, %v3276
    %3313 = vst.msk [vmem:[#allocation2 + $0x138] sm:$0xfe] %vm3299, %v3278
    %3314 = vst.msk [vmem:[#allocation2 + $0x150] sm:$0xfe] %vm3299, %v3280
    %3315 = vst.msk [vmem:[#allocation2 + $0x168] sm:$0xfe] %vm3299, %v3282
    %v3318 = vlaneseq
    %v3319 = vshrl.u32 %v3318, 7
    %v3320 = vsub.s32 0, %v3319
    %v3321 = vrot.slane %v2072, %v3320
    %v3322 = vlaneseq
    %v3323 = vshrl.u32 %v3322, 7
    %v3324 = vsub.s32 0, %v3323
    %v3325 = vrot.slane %v2136, %v3324
    %v3326 = vsel %vm2838, %v3190, %v3186
    %v3327 = vsel %vm2646, %v3194, %v3326
    %v3328 = vsel %vm2648, %v3198, %v3327
    %v3329 = vsel %vm2650, %v3202, %v3328
    %v3330 = vsel %vm2652, %v3206, %v3329
    %v3331 = vsel %vm2654, %v3210, %v3330
    %v3332 = vsel %vm2656, %v3321, %v3331
    %v3333 = vsel %vm2838, %v3218, %v3214
    %v3334 = vsel %vm2646, %v3222, %v3333
    %v3335 = vsel %vm2648, %v3226, %v3334
    %v3336 = vsel %vm2650, %v3230, %v3335
    %v3337 = vsel %vm2652, %v3234, %v3336
    %v3338 = vsel %vm2654, %v3238, %v3337
    %v3339 = vsel %vm2656, %v3325, %v3338
    %3356 = vst.msk [vmem:[#allocation2 + $0x8] sm:$0xff] %vm2137, %v2845
    %3357 = vst.msk [vmem:[#allocation2 + $0x20] sm:$0xff] %vm2137, %v2852
    %3358 = vst.msk [vmem:[#allocation2 + $0x38] sm:$0xff] %vm2137, %v2859
    %3359 = vst.msk [vmem:[#allocation2 + $0x50] sm:$0xff] %vm2137, %v2866
    %3360 = vst.msk [vmem:[#allocation2 + $0x68] sm:$0xff] %vm2137, %v2873
    %3361 = vst.msk [vmem:[#allocation2 + $0x80] sm:$0xff] %vm2137, %v2880
    %3362 = vst.msk [vmem:[#allocation2 + $0x98] sm:$0xff] %vm2137, %v2887
    %3363 = vst.msk [vmem:[#allocation2 + $0xb0] sm:$0xff] %vm2137, %v3332
    %3364 = vst.msk [vmem:[#allocation2 + $0xc8] sm:$0xff] %vm2137, %v2894
    %3365 = vst.msk [vmem:[#allocation2 + $0xe0] sm:$0xff] %vm2137, %v2901
    %3366 = vst.msk [vmem:[#allocation2 + $0xf8] sm:$0xff] %vm2137, %v2908
    %3367 = vst.msk [vmem:[#allocation2 + $0x110] sm:$0xff] %vm2137, %v2915
    %3368 = vst.msk [vmem:[#allocation2 + $0x128] sm:$0xff] %vm2137, %v2922
    %3369 = vst.msk [vmem:[#allocation2 + $0x140] sm:$0xff] %vm2137, %v2929
    %3370 = vst.msk [vmem:[#allocation2 + $0x158] sm:$0xff] %vm2137, %v2936
    %3371 = vst.msk [vmem:[#allocation2 + $0x170] sm:$0xff] %vm2137, %v3339
    %vm3372 = vcmask 516352
    %3373 = vst.msk [vmem:[#allocation2 + $0xf] sm:$0x1] %vm3372, 0.0
    %3374 = vst.msk [vmem:[#allocation2 + $0x27] sm:$0x1] %vm3372, 0.0
    %3375 = vst.msk [vmem:[#allocation2 + $0x3f] sm:$0x1] %vm3372, 0.0
    %3376 = vst.msk [vmem:[#allocation2 + $0x57] sm:$0x1] %vm3372, 0.0
    %3377 = vst.msk [vmem:[#allocation2 + $0x6f] sm:$0x1] %vm3372, 0.0
    %3378 = vst.msk [vmem:[#allocation2 + $0x87] sm:$0x1] %vm3372, 0.0
    %3379 = vst.msk [vmem:[#allocation2 + $0x9f] sm:$0x1] %vm3372, 0.0
    %3380 = vst.msk [vmem:[#allocation2 + $0xb7] sm:$0x1] %vm3372, 0.0
    %3381 = vst.msk [vmem:[#allocation2 + $0xcf] sm:$0x1] %vm3372, 0.0
    %3382 = vst.msk [vmem:[#allocation2 + $0xe7] sm:$0x1] %vm3372, 0.0
    %3383 = vst.msk [vmem:[#allocation2 + $0xff] sm:$0x1] %vm3372, 0.0
    %3384 = vst.msk [vmem:[#allocation2 + $0x117] sm:$0x1] %vm3372, 0.0
    %3385 = vst.msk [vmem:[#allocation2 + $0x12f] sm:$0x1] %vm3372, 0.0
    %3386 = vst.msk [vmem:[#allocation2 + $0x147] sm:$0x1] %vm3372, 0.0
    %3387 = vst.msk [vmem:[#allocation2 + $0x15f] sm:$0x1] %vm3372, 0.0
    %3388 = vst.msk [vmem:[#allocation2 + $0x177] sm:$0x1] %vm3372, 0.0
    %v3389 = vsel %vm2838, %v3194, %v3190
    %v3390 = vsel %vm2646, %v3198, %v3389
    %v3391 = vsel %vm2648, %v3202, %v3390
    %v3392 = vsel %vm2650, %v3206, %v3391
    %v3393 = vsel %vm2652, %v3210, %v3392
    %v3394 = vsel %vm2654, %v3321, %v3393
    %v3395 = vsel %vm2838, %v3222, %v3218
    %v3396 = vsel %vm2646, %v3226, %v3395
    %v3397 = vsel %vm2648, %v3230, %v3396
    %v3398 = vsel %vm2650, %v3234, %v3397
    %v3399 = vsel %vm2652, %v3238, %v3398
    %v3400 = vsel %vm2654, %v3325, %v3399
    %3401 = vrot.lane.b32.xlu0 %v3016, 32
    %v3402 = vpop.permute.xlu0 %3401
    %3403 = vrot.lane.b32.xlu0 %v3022, 32
    %v3404 = vpop.permute.xlu0 %3403
    %3405 = vrot.lane.b32.xlu0 %v3028, 32
    %v3406 = vpop.permute.xlu0 %3405
    %3407 = vrot.lane.b32.xlu0 %v3034, 32
    %v3408 = vpop.permute.xlu0 %3407
    %3409 = vrot.lane.b32.xlu0 %v3040, 32
    %v3410 = vpop.permute.xlu0 %3409
    %3411 = vrot.lane.b32.xlu0 %v3046, 32
    %v3412 = vpop.permute.xlu0 %3411
    %3413 = vrot.lane.b32.xlu0 %v3052, 32
    %v3414 = vpop.permute.xlu0 %3413
    %3415 = vrot.lane.b32.xlu0 %v3394, 32
    %v3416 = vpop.permute.xlu0 %3415
    %3417 = vrot.lane.b32.xlu0 %v3058, 32
    %v3418 = vpop.permute.xlu0 %3417
    %3419 = vrot.lane.b32.xlu0 %v3064, 32
    %v3420 = vpop.permute.xlu0 %3419
    %3421 = vrot.lane.b32.xlu0 %v3070, 32
    %v3422 = vpop.permute.xlu0 %3421
    %3423 = vrot.lane.b32.xlu0 %v3076, 32
    %v3424 = vpop.permute.xlu0 %3423
    %3425 = vrot.lane.b32.xlu0 %v3082, 32
    %v3426 = vpop.permute.xlu0 %3425
    %3427 = vrot.lane.b32.xlu0 %v3088, 32
    %v3428 = vpop.permute.xlu0 %3427
    %3429 = vrot.lane.b32.xlu0 %v3094, 32
    %v3430 = vpop.permute.xlu0 %3429
    %3431 = vrot.lane.b32.xlu0 %v3400, 32
    %v3432 = vpop.permute.xlu0 %3431
    %vm3449 = vcmask 522496
    %3450 = vst.msk [vmem:[#allocation2 + $0x8] sm:$0x7f] %vm3449, %v3402
    %3451 = vst.msk [vmem:[#allocation2 + $0x20] sm:$0x7f] %vm3449, %v3404
    %3452 = vst.msk [vmem:[#allocation2 + $0x38] sm:$0x7f] %vm3449, %v3406
    %3453 = vst.msk [vmem:[#allocation2 + $0x50] sm:$0x7f] %vm3449, %v3408
    %3454 = vst.msk [vmem:[#allocation2 + $0x68] sm:$0x7f] %vm3449, %v3410
    %3455 = vst.msk [vmem:[#allocation2 + $0x80] sm:$0x7f] %vm3449, %v3412
    %3456 = vst.msk [vmem:[#allocation2 + $0x98] sm:$0x7f] %vm3449, %v3414
    %3457 = vst.msk [vmem:[#allocation2 + $0xb0] sm:$0x7f] %vm3449, %v3416
    %3458 = vst.msk [vmem:[#allocation2 + $0xc8] sm:$0x7f] %vm3449, %v3418
    %3459 = vst.msk [vmem:[#allocation2 + $0xe0] sm:$0x7f] %vm3449, %v3420
    %3460 = vst.msk [vmem:[#allocation2 + $0xf8] sm:$0x7f] %vm3449, %v3422
    %3461 = vst.msk [vmem:[#allocation2 + $0x110] sm:$0x7f] %vm3449, %v3424
    %3462 = vst.msk [vmem:[#allocation2 + $0x128] sm:$0x7f] %vm3449, %v3426
    %3463 = vst.msk [vmem:[#allocation2 + $0x140] sm:$0x7f] %vm3449, %v3428
    %3464 = vst.msk [vmem:[#allocation2 + $0x158] sm:$0x7f] %vm3449, %v3430
    %3465 = vst.msk [vmem:[#allocation2 + $0x170] sm:$0x7f] %vm3449, %v3432
    %s3466 = scalar_lea.vmem [#allocation2], 168
    %3467 = vst.msk [vmem:[%s3466 + $0x8] sm:$0xff] %vm2993, 0.0
    %3468 = vst.msk [vmem:[%s3466 + $0xc8] sm:$0xff] %vm2993, 0.0
    %3469 = vst.msk [vmem:[#allocation2 + $0x8] sm:$0x1] %vm2996, 0.0
    %3470 = vst.msk [vmem:[#allocation2 + $0x20] sm:$0x1] %vm2996, 0.0
    %3471 = vst.msk [vmem:[#allocation2 + $0x38] sm:$0x1] %vm2996, 0.0
    %3472 = vst.msk [vmem:[#allocation2 + $0x50] sm:$0x1] %vm2996, 0.0
    %3473 = vst.msk [vmem:[#allocation2 + $0x68] sm:$0x1] %vm2996, 0.0
    %3474 = vst.msk [vmem:[#allocation2 + $0x80] sm:$0x1] %vm2996, 0.0
    %3475 = vst.msk [vmem:[#allocation2 + $0x98] sm:$0x1] %vm2996, 0.0
    %3476 = vst.msk [vmem:[#allocation2 + $0xc8] sm:$0x1] %vm2996, 0.0
    %3477 = vst.msk [vmem:[#allocation2 + $0xe0] sm:$0x1] %vm2996, 0.0
    %3478 = vst.msk [vmem:[#allocation2 + $0xf8] sm:$0x1] %vm2996, 0.0
    %3479 = vst.msk [vmem:[#allocation2 + $0x110] sm:$0x1] %vm2996, 0.0
    %3480 = vst.msk [vmem:[#allocation2 + $0x128] sm:$0x1] %vm2996, 0.0
    %3481 = vst.msk [vmem:[#allocation2 + $0x140] sm:$0x1] %vm2996, 0.0
    %3482 = vst.msk [vmem:[#allocation2 + $0x158] sm:$0x1] %vm2996, 0.0
    %3483 = vrot.lane.b32.xlu0 %v2663, 64
    %v3484 = vpop.permute.xlu0 %3483
    %3485 = vrot.lane.b32.xlu0 %v2669, 64
    %v3486 = vpop.permute.xlu0 %3485
    %3487 = vrot.lane.b32.xlu0 %v2675, 64
    %v3488 = vpop.permute.xlu0 %3487
    %3489 = vrot.lane.b32.xlu0 %v2681, 64
    %v3490 = vpop.permute.xlu0 %3489
    %3491 = vrot.lane.b32.xlu0 %v2687, 64
    %v3492 = vpop.permute.xlu0 %3491
    %3493 = vrot.lane.b32.xlu0 %v2693, 64
    %v3494 = vpop.permute.xlu0 %3493
    %3495 = vrot.lane.b32.xlu0 %v3244, 64
    %v3496 = vpop.permute.xlu0 %3495
    %3497 = vrot.lane.b32.xlu0 %v2705, 64
    %v3498 = vpop.permute.xlu0 %3497
    %3499 = vrot.lane.b32.xlu0 %v2711, 64
    %v3500 = vpop.permute.xlu0 %3499
    %3501 = vrot.lane.b32.xlu0 %v2717, 64
    %v3502 = vpop.permute.xlu0 %3501
    %3503 = vrot.lane.b32.xlu0 %v2723, 64
    %v3504 = vpop.permute.xlu0 %3503
    %3505 = vrot.lane.b32.xlu0 %v2729, 64
    %v3506 = vpop.permute.xlu0 %3505
    %3507 = vrot.lane.b32.xlu0 %v2735, 64
    %v3508 = vpop.permute.xlu0 %3507
    %3509 = vrot.lane.b32.xlu0 %v3250, 64
    %v3510 = vpop.permute.xlu0 %3509
    %vm3525 = vcmask 785921
    %3526 = vst.msk [vmem:[#allocation2 + $0x8] sm:$0xfe] %vm3525, %v3484
    %3527 = vst.msk [vmem:[#allocation2 + $0x20] sm:$0xfe] %vm3525, %v3486
    %3528 = vst.msk [vmem:[#allocation2 + $0x38] sm:$0xfe] %vm3525, %v3488
    %3529 = vst.msk [vmem:[#allocation2 + $0x50] sm:$0xfe] %vm3525, %v3490
    %3530 = vst.msk [vmem:[#allocation2 + $0x68] sm:$0xfe] %vm3525, %v3492
    %3531 = vst.msk [vmem:[#allocation2 + $0x80] sm:$0xfe] %vm3525, %v3494
    %3532 = vst.msk [vmem:[#allocation2 + $0x98] sm:$0xfe] %vm3525, %v3496
    %3533 = vst.msk [vmem:[#allocation2 + $0xc8] sm:$0xfe] %vm3525, %v3498
    %3534 = vst.msk [vmem:[#allocation2 + $0xe0] sm:$0xfe] %vm3525, %v3500
    %3535 = vst.msk [vmem:[#allocation2 + $0xf8] sm:$0xfe] %vm3525, %v3502
    %3536 = vst.msk [vmem:[#allocation2 + $0x110] sm:$0xfe] %vm3525, %v3504
    %3537 = vst.msk [vmem:[#allocation2 + $0x128] sm:$0xfe] %vm3525, %v3506
    %3538 = vst.msk [vmem:[#allocation2 + $0x140] sm:$0xfe] %vm3525, %v3508
    %3539 = vst.msk [vmem:[#allocation2 + $0x158] sm:$0xfe] %vm3525, %v3510
    %vm3540 = vcmask 1048320
    %3541 = vst.msk [vmem:[%s3466 + $0x8] sm:$0xff] %vm3540, 0.0
    %3542 = vst.msk [vmem:[%s3466 + $0xc8] sm:$0xff] %vm3540, 0.0
    %3543 = vrot.lane.b32.xlu0 %v2852, 96
    %v3544 = vpop.permute.xlu0 %3543
    %3545 = vrot.lane.b32.xlu0 %v2859, 96
    %v3546 = vpop.permute.xlu0 %3545
    %3547 = vrot.lane.b32.xlu0 %v2866, 96
    %v3548 = vpop.permute.xlu0 %3547
    %3549 = vrot.lane.b32.xlu0 %v2873, 96
    %v3550 = vpop.permute.xlu0 %3549
    %3551 = vrot.lane.b32.xlu0 %v2880, 96
    %v3552 = vpop.permute.xlu0 %3551
    %3553 = vrot.lane.b32.xlu0 %v2887, 96
    %v3554 = vpop.permute.xlu0 %3553
    %3555 = vrot.lane.b32.xlu0 %v3332, 96
    %v3556 = vpop.permute.xlu0 %3555
    %3557 = vrot.lane.b32.xlu0 %v2901, 96
    %v3558 = vpop.permute.xlu0 %3557
    %3559 = vrot.lane.b32.xlu0 %v2908, 96
    %v3560 = vpop.permute.xlu0 %3559
    %3561 = vrot.lane.b32.xlu0 %v2915, 96
    %v3562 = vpop.permute.xlu0 %3561
    %3563 = vrot.lane.b32.xlu0 %v2922, 96
    %v3564 = vpop.permute.xlu0 %3563
    %3565 = vrot.lane.b32.xlu0 %v2929, 96
    %v3566 = vpop.permute.xlu0 %3565
    %3567 = vrot.lane.b32.xlu0 %v2936, 96
    %v3568 = vpop.permute.xlu0 %3567
    %3569 = vrot.lane.b32.xlu0 %v3339, 96
    %v3570 = vpop.permute.xlu0 %3569
    %3585 = vst.msk [vmem:[#allocation2 + $0x8] sm:$0xff] %vm3540, %v3544
    %3586 = vst.msk [vmem:[#allocation2 + $0x20] sm:$0xff] %vm3540, %v3546
    %3587 = vst.msk [vmem:[#allocation2 + $0x38] sm:$0xff] %vm3540, %v3548
    %3588 = vst.msk [vmem:[#allocation2 + $0x50] sm:$0xff] %vm3540, %v3550
    %3589 = vst.msk [vmem:[#allocation2 + $0x68] sm:$0xff] %vm3540, %v3552
    %3590 = vst.msk [vmem:[#allocation2 + $0x80] sm:$0xff] %vm3540, %v3554
    %3591 = vst.msk [vmem:[#allocation2 + $0x98] sm:$0xff] %vm3540, %v3556
    %3592 = vst.msk [vmem:[#allocation2 + $0xc8] sm:$0xff] %vm3540, %v3558
    %3593 = vst.msk [vmem:[#allocation2 + $0xe0] sm:$0xff] %vm3540, %v3560
    %3594 = vst.msk [vmem:[#allocation2 + $0xf8] sm:$0xff] %vm3540, %v3562
    %3595 = vst.msk [vmem:[#allocation2 + $0x110] sm:$0xff] %vm3540, %v3564
    %3596 = vst.msk [vmem:[#allocation2 + $0x128] sm:$0xff] %vm3540, %v3566
    %3597 = vst.msk [vmem:[#allocation2 + $0x140] sm:$0xff] %vm3540, %v3568
    %3598 = vst.msk [vmem:[#allocation2 + $0x158] sm:$0xff] %vm3540, %v3570
    %3599 = vst.msk [vmem:[%s3466 + $0x10] sm:$0xff] %vm2137, 0.0
    %3600 = vst.msk [vmem:[%s3466 + $0xd0] sm:$0xff] %vm2137, 0.0
    %3601 = vst.msk [vmem:[#allocation2 + $0x17] sm:$0x1] %vm2141, 0.0
    %3602 = vst.msk [vmem:[#allocation2 + $0x2f] sm:$0x1] %vm2141, 0.0
    %3603 = vst.msk [vmem:[#allocation2 + $0x47] sm:$0x1] %vm2141, 0.0
    %3604 = vst.msk [vmem:[#allocation2 + $0x5f] sm:$0x1] %vm2141, 0.0
    %3605 = vst.msk [vmem:[#allocation2 + $0x77] sm:$0x1] %vm2141, 0.0
    %3606 = vst.msk [vmem:[#allocation2 + $0x8f] sm:$0x1] %vm2141, 0.0
    %3607 = vst.msk [vmem:[#allocation2 + $0xa7] sm:$0x1] %vm2141, 0.0
    %3608 = vst.msk [vmem:[#allocation2 + $0xd7] sm:$0x1] %vm2141, 0.0
    %3609 = vst.msk [vmem:[#allocation2 + $0xef] sm:$0x1] %vm2141, 0.0
    %3610 = vst.msk [vmem:[#allocation2 + $0x107] sm:$0x1] %vm2141, 0.0
    %3611 = vst.msk [vmem:[#allocation2 + $0x11f] sm:$0x1] %vm2141, 0.0
    %3612 = vst.msk [vmem:[#allocation2 + $0x137] sm:$0x1] %vm2141, 0.0
    %3613 = vst.msk [vmem:[#allocation2 + $0x14f] sm:$0x1] %vm2141, 0.0
    %3614 = vst.msk [vmem:[#allocation2 + $0x167] sm:$0x1] %vm2141, 0.0
    %vm3629 = vcmask 260096
    %3630 = vst.msk [vmem:[#allocation2 + $0x10] sm:$0x7f] %vm3629, %v3022
    %3631 = vst.msk [vmem:[#allocation2 + $0x28] sm:$0x7f] %vm3629, %v3028
    %3632 = vst.msk [vmem:[#allocation2 + $0x40] sm:$0x7f] %vm3629, %v3034
    %3633 = vst.msk [vmem:[#allocation2 + $0x58] sm:$0x7f] %vm3629, %v3040
    %3634 = vst.msk [vmem:[#allocation2 + $0x70] sm:$0x7f] %vm3629, %v3046
    %3635 = vst.msk [vmem:[#allocation2 + $0x88] sm:$0x7f] %vm3629, %v3052
    %3636 = vst.msk [vmem:[#allocation2 + $0xa0] sm:$0x7f] %vm3629, %v3394
    %3637 = vst.msk [vmem:[#allocation2 + $0xd0] sm:$0x7f] %vm3629, %v3064
    %3638 = vst.msk [vmem:[#allocation2 + $0xe8] sm:$0x7f] %vm3629, %v3070
    %3639 = vst.msk [vmem:[#allocation2 + $0x100] sm:$0x7f] %vm3629, %v3076
    %3640 = vst.msk [vmem:[#allocation2 + $0x118] sm:$0x7f] %vm3629, %v3082
    %3641 = vst.msk [vmem:[#allocation2 + $0x130] sm:$0x7f] %vm3629, %v3088
    %3642 = vst.msk [vmem:[#allocation2 + $0x148] sm:$0x7f] %vm3629, %v3094
    %3643 = vst.msk [vmem:[#allocation2 + $0x160] sm:$0x7f] %vm3629, %v3400
    %v3644 = vld [vmem:[#allocation2] sm:$0xff]
    %v3645 = vld [vmem:[#allocation2 + $0x8] sm:$0xff]
    %v3646 = vld [vmem:[#allocation2 + $0x10] sm:$0xff]
    %v3647 = vld [vmem:[#allocation2 + $0x18] sm:$0xff]
    %v3648 = vld [vmem:[#allocation2 + $0x20] sm:$0xff]
    %v3649 = vld [vmem:[#allocation2 + $0x28] sm:$0xff]
    %v3650 = vld [vmem:[#allocation2 + $0x30] sm:$0xff]
    %v3651 = vld [vmem:[#allocation2 + $0x38] sm:$0xff]
    %v3652 = vld [vmem:[#allocation2 + $0x40] sm:$0xff]
    %v3653 = vld [vmem:[#allocation2 + $0x48] sm:$0xff]
    %v3654 = vld [vmem:[#allocation2 + $0x50] sm:$0xff]
    %v3655 = vld [vmem:[#allocation2 + $0x58] sm:$0xff]
    %v3656 = vld [vmem:[#allocation2 + $0x60] sm:$0xff]
    %v3657 = vld [vmem:[#allocation2 + $0x68] sm:$0xff]
    %v3658 = vld [vmem:[#allocation2 + $0x70] sm:$0xff]
    %v3659 = vld [vmem:[#allocation2 + $0x78] sm:$0xff]
    %v3660 = vld [vmem:[#allocation2 + $0x80] sm:$0xff]
    %v3661 = vld [vmem:[#allocation2 + $0x88] sm:$0xff]
    %v3662 = vld [vmem:[#allocation2 + $0x90] sm:$0xff]
    %v3663 = vld [vmem:[#allocation2 + $0x98] sm:$0xff]
    %v3664 = vld [vmem:[#allocation2 + $0xa0] sm:$0xff]
    %v3665 = vld [vmem:[#allocation2 + $0xa8] sm:$0xff]
    %v3666 = vld [vmem:[#allocation2 + $0xb0] sm:$0xff]
    %v3667 = vld [vmem:[#allocation2 + $0xb8] sm:$0xff]
    %v3668 = vld [vmem:[#allocation2 + $0xc0] sm:$0xff]
    %v3669 = vld [vmem:[#allocation2 + $0xc8] sm:$0xff]
    %v3670 = vld [vmem:[#allocation2 + $0xd0] sm:$0xff]
    %v3671 = vld [vmem:[#allocation2 + $0xd8] sm:$0xff]
    %v3672 = vld [vmem:[#allocation2 + $0xe0] sm:$0xff]
    %v3673 = vld [vmem:[#allocation2 + $0xe8] sm:$0xff]
    %v3674 = vld [vmem:[#allocation2 + $0xf0] sm:$0xff]
    %v3675 = vld [vmem:[#allocation2 + $0xf8] sm:$0xff]
    %v3676 = vld [vmem:[#allocation2 + $0x100] sm:$0xff]
    %v3677 = vld [vmem:[#allocation2 + $0x108] sm:$0xff]
    %v3678 = vld [vmem:[#allocation2 + $0x110] sm:$0xff]
    %v3679 = vld [vmem:[#allocation2 + $0x118] sm:$0xff]
    %v3680 = vld [vmem:[#allocation2 + $0x120] sm:$0xff]
    %v3681 = vld [vmem:[#allocation2 + $0x128] sm:$0xff]
    %v3682 = vld [vmem:[#allocation2 + $0x130] sm:$0xff]
    %v3683 = vld [vmem:[#allocation2 + $0x138] sm:$0xff]
    %v3684 = vld [vmem:[#allocation2 + $0x140] sm:$0xff]
    %v3685 = vld [vmem:[#allocation2 + $0x148] sm:$0xff]
    %v3686 = vld [vmem:[#allocation2 + $0x150] sm:$0xff]
    %v3687 = vld [vmem:[#allocation2 + $0x158] sm:$0xff]
    %v3688 = vld [vmem:[#allocation2 + $0x160] sm:$0xff]
    %v3689 = vld [vmem:[#allocation2 + $0x168] sm:$0xff]
    %v3690 = vld [vmem:[#allocation2 + $0x170] sm:$0xff]
    %v3691 = vld [vmem:[#allocation2 + $0x178] sm:$0xff]
    %v3692 = vpack.c.bf16 %v3647, %v3644
    %v3693 = vpack.c.bf16 %v3648, %v3645
    %v3694 = vpack.c.bf16 %v3649, %v3646
    %v3695 = vpack.c.bf16 %v3653, %v3650
    %v3696 = vpack.c.bf16 %v3654, %v3651
    %v3697 = vpack.c.bf16 %v3655, %v3652
    %v3698 = vpack.c.bf16 %v3659, %v3656
    %v3699 = vpack.c.bf16 %v3660, %v3657
    %v3700 = vpack.c.bf16 %v3661, %v3658
    %v3701 = vpack.c.bf16 %v3665, %v3662
    %v3702 = vpack.c.bf16 %v3666, %v3663
    %v3703 = vpack.c.bf16 %v3667, %v3664
    %v3704 = vpack.c.bf16 %v3671, %v3668
    %v3705 = vpack.c.bf16 %v3672, %v3669
    %v3706 = vpack.c.bf16 %v3673, %v3670
    %v3707 = vpack.c.bf16 %v3677, %v3674
    %v3708 = vpack.c.bf16 %v3678, %v3675
    %v3709 = vpack.c.bf16 %v3679, %v3676
    %v3710 = vpack.c.bf16 %v3683, %v3680
    %v3711 = vpack.c.bf16 %v3684, %v3681
    %v3712 = vpack.c.bf16 %v3685, %v3682
    %v3713 = vpack.c.bf16 %v3689, %v3686
    %v3714 = vpack.c.bf16 %v3690, %v3687
    %v3715 = vpack.c.bf16 %v3691, %v3688
    %v3716 = vld [vmem:[#allocation13] sm:$0xf]
    %v3717 = vld [vmem:[#allocation13 + $0x4] sm:$0xf]
    %v3718 = vld [vmem:[#allocation13 + $0x8] sm:$0xf]
    %v3719 = vld [vmem:[#allocation13 + $0xc] sm:$0xf]
    %v3720 = vld [vmem:[#allocation13 + $0x10] sm:$0xf]
    %v3721 = vld [vmem:[#allocation13 + $0x14] sm:$0xf]
    %v3722 = vld [vmem:[#allocation13 + $0x18] sm:$0xf]
    %v3723 = vld [vmem:[#allocation13 + $0x1c] sm:$0xf]
    %v3724 = vld [vmem:[#allocation13 + $0x20] sm:$0xf]
    %v3725 = vld [vmem:[#allocation13 + $0x24] sm:$0xf]
    %v3726 = vld [vmem:[#allocation13 + $0x28] sm:$0xf]
    %v3727 = vld [vmem:[#allocation13 + $0x2c] sm:$0xf]
    %v3728 = vld [vmem:[#allocation13 + $0x30] sm:$0xf]
    %v3729 = vld [vmem:[#allocation13 + $0x34] sm:$0xf]
    %v3730 = vld [vmem:[#allocation13 + $0x38] sm:$0xf]
    %v3731 = vld [vmem:[#allocation13 + $0x3c] sm:$0xf]
    %v3732 = vld [vmem:[#allocation13 + $0x40] sm:$0xf]
    %v3733 = vld [vmem:[#allocation13 + $0x44] sm:$0xf]
    %v3734 = vld [vmem:[#allocation13 + $0x48] sm:$0xf]
    %v3735 = vld [vmem:[#allocation13 + $0x4c] sm:$0xf]
    %v3736 = vld [vmem:[#allocation13 + $0x50] sm:$0xf]
    %v3737 = vld [vmem:[#allocation13 + $0x54] sm:$0xf]
    %v3738 = vld [vmem:[#allocation13 + $0x58] sm:$0xf]
    %v3739 = vld [vmem:[#allocation13 + $0x5c] sm:$0xf]
    %v3740 = vld [vmem:[#allocation13 + $0x60] sm:$0xf]
    %v3741 = vld [vmem:[#allocation13 + $0x64] sm:$0xf]
    %v3742 = vld [vmem:[#allocation13 + $0x68] sm:$0xf]
    %v3743 = vld [vmem:[#allocation13 + $0x6c] sm:$0xf]
    %v3744 = vld [vmem:[#allocation13 + $0x70] sm:$0xf]
    %v3745 = vld [vmem:[#allocation13 + $0x74] sm:$0xf]
    %v3746 = vld [vmem:[#allocation13 + $0x78] sm:$0xf]
    %v3747 = vld [vmem:[#allocation13 + $0x7c] sm:$0xf]
    %v3748 = vld [vmem:[#allocation13 + $0x80] sm:$0xf]
    %v3749 = vld [vmem:[#allocation13 + $0x84] sm:$0xf]
    %v3750 = vld [vmem:[#allocation13 + $0x88] sm:$0xf]
    %v3751 = vld [vmem:[#allocation13 + $0x8c] sm:$0xf]
    %v3752 = vld [vmem:[#allocation14] sm:$0x1]
    %v3754 = vlaneseq
    %v3755 = vshrl.u32 %v3754, 7
    %v3756 = vsub.s32 0, %v3755
    %v3757 = vrot.slane %v3752, %v3756
    %v3795 = vunpack.c.l.b16 %v3716
    %v3796 = vunpack.c.l.b16 %v3717
    %v3797 = vunpack.c.l.b16 %v3718
    %v3798 = vunpack.c.l.b16 %v3719
    %v3799 = vunpack.c.l.b16 %v3720
    %v3800 = vunpack.c.l.b16 %v3721
    %v3801 = vunpack.c.l.b16 %v3722
    %v3802 = vunpack.c.l.b16 %v3723
    %v3803 = vunpack.c.l.b16 %v3724
    %v3804 = vunpack.c.l.b16 %v3725
    %v3805 = vunpack.c.l.b16 %v3726
    %v3806 = vunpack.c.l.b16 %v3727
    %v3807 = vunpack.c.l.b16 %v3728
    %v3808 = vunpack.c.l.b16 %v3729
    %v3809 = vunpack.c.l.b16 %v3730
    %v3810 = vunpack.c.l.b16 %v3731
    %v3811 = vunpack.c.l.b16 %v3732
    %v3812 = vunpack.c.l.b16 %v3733
    %v3813 = vunpack.c.l.b16 %v3734
    %v3814 = vunpack.c.l.b16 %v3735
    %v3815 = vunpack.c.l.b16 %v3736
    %v3816 = vunpack.c.l.b16 %v3737
    %v3817 = vunpack.c.l.b16 %v3738
    %v3818 = vunpack.c.l.b16 %v3739
    %v3819 = vunpack.c.l.b16 %v3740
    %v3820 = vunpack.c.l.b16 %v3741
    %v3821 = vunpack.c.l.b16 %v3742
    %v3822 = vunpack.c.l.b16 %v3743
    %v3823 = vunpack.c.l.b16 %v3744
    %v3824 = vunpack.c.l.b16 %v3745
    %v3825 = vunpack.c.l.b16 %v3746
    %v3826 = vunpack.c.l.b16 %v3747
    %v3827 = vunpack.c.l.b16 %v3748
    %v3828 = vunpack.c.l.b16 %v3749
    %v3829 = vunpack.c.l.b16 %v3750
    %v3830 = vunpack.c.l.b16 %v3751
    %v3831 = vpack.c.b16 %v3796, %v3795
    %v3832 = vpack.c.b16 %v3798, %v3797
    %v3833 = vpack.c.b16 %v3800, %v3799
    %v3834 = vpack.c.b16 %v3802, %v3801
    %v3835 = vpack.c.b16 %v3804, %v3803
    %v3836 = vpack.c.b16 %v3806, %v3805
    %v3837 = vpack.c.b16 %v3808, %v3807
    %v3838 = vpack.c.b16 %v3810, %v3809
    %v3839 = vpack.c.b16 %v3812, %v3811
    %v3840 = vpack.c.b16 %v3814, %v3813
    %v3841 = vpack.c.b16 %v3816, %v3815
    %v3842 = vpack.c.b16 %v3818, %v3817
    %v3843 = vpack.c.b16 %v3820, %v3819
    %v3844 = vpack.c.b16 %v3822, %v3821
    %v3845 = vpack.c.b16 %v3824, %v3823
    %v3846 = vpack.c.b16 %v3826, %v3825
    %v3847 = vpack.c.b16 %v3828, %v3827
    %v3848 = vpack.c.b16 %v3830, %v3829
    %v3868 = vsel %vm2137, %v3694, 0
    %v3871 = vsel %vm2137, %v3697, 0
    %v3874 = vsel %vm2137, %v3700, 0
    %v3877 = vsel %vm2137, %v3703, 0
    %v3880 = vsel %vm2137, %v3706, 0
    %v3883 = vsel %vm2137, %v3709, 0
    %v3886 = vsel %vm2137, %v3712, 0
    %v3889 = vsel %vm2137, %v3715, 0
    %3891 = vmatprep.subr.bf16.mxu0 0
    %3892 = vmatpush1.bf16.msra.mxu0 %v3831
    %3893 = vmatprep.subr.bf16.mxu0 0
    %3894 = vmatpush1.bf16.msra.mxu0 %v3832
    %3895 = vmatprep.subr.bf16.mxu0 0
    %3896 = vmatpush1.bf16.msra.mxu0 %v3833
    %3897 = vmatprep.subr.bf16.mxu0 0
    %3898 = vmatpush1.bf16.msra.mxu0 %v3834
    %3899 = vmatprep.subr.bf16.mxu0 0
    %3900 = vmatpush1.bf16.msra.mxu0 %v3835
    %3901 = vmatprep.subr.bf16.mxu0 0
    %3902 = vmatpush1.bf16.msra.mxu0 %v3836
    %3903 = vmatprep.subr.bf16.mxu0 0
    %3904 = vmatpush1.bf16.msra.mxu0 %v3837
    %3905 = vmatprep.subr.bf16.mxu0 0
    %3906 = vmatpush1.bf16.msra.mxu0 %v3838
    %3907 = vmatprep.subr.bf16.mxu0 0
    %3908 = vmatpush1.bf16.msra.mxu0 %v3839
    %3909 = vmatprep.subr.bf16.mxu0 0
    %3910 = vmatpush1.bf16.msra.mxu0 %v3840
    %3911 = vmatprep.subr.bf16.mxu0 0
    %3912 = vmatpush1.bf16.msra.mxu0 %v3841
    %3913 = vmatprep.subr.bf16.mxu0 0
    %3914 = vmatpush1.bf16.msra.mxu0 %v3842
    %3915 = vmatprep.subr.bf16.mxu0 0
    %3916 = vmatpush1.bf16.msra.mxu0 %v3843
    %3917 = vmatprep.subr.bf16.mxu0 0
    %3918 = vmatpush1.bf16.msra.mxu0 %v3844
    %3919 = vmatprep.subr.bf16.mxu0 0
    %3920 = vmatpush1.bf16.msra.mxu0 %v3845
    %3921 = vmatprep.subr.bf16.mxu0 0
    %3922 = vmatpush1.bf16.msra.mxu0 %v3846
    %3923 = vmatprep.mubr.bf16.mxu0 %v3693
    %3924 = vmatmul.mubr.bf16.gmra.mrb[0].mxu0 %v3692
    %v3925 = vpop.f32.mrb[0].mxu0
    %v3926 = vadd.f32 %v3757, %v3925
    %v3927 = vpop.f32.mrb[0].mxu0
    %v3928 = vpop.f32.mrb[0].mxu0
    %v3929 = vadd.f32 %v3757, %v3928
    %v3930 = vpop.f32.mrb[0].mxu0
    %3931 = vmatprep.mubr.bf16.mxu0 %v3696
    %3932 = vmatmul.mubr.bf16.gmra.mrb[0].mxu0 %v3695
    %v3933 = vpop.f32.mrb[0].mxu0
    %v3934 = vadd.f32 %v3757, %v3933
    %v3935 = vpop.f32.mrb[0].mxu0
    %v3936 = vpop.f32.mrb[0].mxu0
    %v3937 = vadd.f32 %v3757, %v3936
    %v3938 = vpop.f32.mrb[0].mxu0
    %3939 = vmatprep.mubr.bf16.mxu0 %v3699
    %3940 = vmatmul.mubr.bf16.gmra.mrb[0].mxu0 %v3698
    %v3941 = vpop.f32.mrb[0].mxu0
    %v3942 = vadd.f32 %v3757, %v3941
    %v3943 = vpop.f32.mrb[0].mxu0
    %v3944 = vpop.f32.mrb[0].mxu0
    %v3945 = vadd.f32 %v3757, %v3944
    %v3946 = vpop.f32.mrb[0].mxu0
    %3947 = vmatprep.mubr.bf16.mxu0 %v3702
    %3948 = vmatmul.mubr.bf16.gmra.mrb[0].mxu0 %v3701
    %v3949 = vpop.f32.mrb[0].mxu0
    %v3950 = vadd.f32 %v3757, %v3949
    %v3951 = vpop.f32.mrb[0].mxu0
    %v3952 = vpop.f32.mrb[0].mxu0
    %v3953 = vadd.f32 %v3757, %v3952
    %v3954 = vpop.f32.mrb[0].mxu0
    %3955 = vmatprep.mubr.bf16.mxu0 %v3705
    %3956 = vmatmul.mubr.bf16.gmra.mrb[0].mxu0 %v3704
    %v3957 = vpop.f32.mrb[0].mxu0
    %v3958 = vadd.f32 %v3757, %v3957
    %v3959 = vpop.f32.mrb[0].mxu0
    %v3960 = vpop.f32.mrb[0].mxu0
    %v3961 = vadd.f32 %v3757, %v3960
    %v3962 = vpop.f32.mrb[0].mxu0
    %3963 = vmatprep.mubr.bf16.mxu0 %v3708
    %3964 = vmatmul.mubr.bf16.gmra.mrb[0].mxu0 %v3707
    %v3965 = vpop.f32.mrb[0].mxu0
    %v3966 = vadd.f32 %v3757, %v3965
    %v3967 = vpop.f32.mrb[0].mxu0
    %v3968 = vpop.f32.mrb[0].mxu0
    %v3969 = vadd.f32 %v3757, %v3968
    %v3970 = vpop.f32.mrb[0].mxu0
    %3971 = vmatprep.mubr.bf16.mxu0 %v3711
    %3972 = vmatmul.mubr.bf16.gmra.mrb[0].mxu0 %v3710
    %v3973 = vpop.f32.mrb[0].mxu0
    %v3974 = vadd.f32 %v3757, %v3973
    %v3975 = vpop.f32.mrb[0].mxu0
    %v3976 = vpop.f32.mrb[0].mxu0
    %v3977 = vadd.f32 %v3757, %v3976
    %v3978 = vpop.f32.mrb[0].mxu0
    %3979 = vmatprep.mubr.bf16.mxu0 %v3714
    %3980 = vmatmul.mubr.bf16.gmra.mrb[0].mxu0 %v3713
    %v3981 = vpop.f32.mrb[0].mxu0
    %v3982 = vadd.f32 %v3757, %v3981
    %v3983 = vpop.f32.mrb[0].mxu0
    %v3984 = vpop.f32.mrb[0].mxu0
    %v3985 = vadd.f32 %v3757, %v3984
    %v3986 = vpop.f32.mrb[0].mxu0
    %3987 = vdwg.mxu0
    %3988 = vmatprep.subr.bf16.mxu0 0
    %3989 = vmatpush1.bf16.msra.mxu0 %v3847
    %3990 = vmatprep.subr.bf16.mxu0 0
    %3991 = vmatpush1.bf16.msra.mxu0 %v3848
    %3992 = vmatprep.subr.bf16.mxu0 0
    %3993 = vmatpush1.bf16.msra.mxu0 0
    %3994 = vmatprep.subr.bf16.mxu0 0
    %3995 = vmatpush1.bf16.msra.mxu0 0
    %3996 = vmatprep.subr.bf16.mxu0 0
    %3997 = vmatpush1.bf16.msra.mxu0 0
    %3998 = vmatprep.subr.bf16.mxu0 0
    %3999 = vmatpush1.bf16.msra.mxu0 0
    %4000 = vmatprep.subr.bf16.mxu0 0
    %4001 = vmatpush1.bf16.msra.mxu0 0
    %4002 = vmatprep.subr.bf16.mxu0 0
    %4003 = vmatpush1.bf16.msra.mxu0 0
    %4004 = vmatprep.subr.bf16.mxu0 0
    %4005 = vmatpush1.bf16.msra.mxu0 0
    %4006 = vmatprep.subr.bf16.mxu0 0
    %4007 = vmatpush1.bf16.msra.mxu0 0
    %4008 = vmatprep.subr.bf16.mxu0 0
    %4009 = vmatpush1.bf16.msra.mxu0 0
    %4010 = vmatprep.subr.bf16.mxu0 0
    %4011 = vmatpush1.bf16.msra.mxu0 0
    %4012 = vmatprep.subr.bf16.mxu0 0
    %4013 = vmatpush1.bf16.msra.mxu0 0
    %4014 = vmatprep.subr.bf16.mxu0 0
    %4015 = vmatpush1.bf16.msra.mxu0 0
    %4016 = vmatprep.subr.bf16.mxu0 0
    %4017 = vmatpush1.bf16.msra.mxu0 0
    %4018 = vmatprep.subr.bf16.mxu0 0
    %4019 = vmatpush1.bf16.msra.mxu0 0
    %4020 = vmatprep.mubr.bf16.mxu0 0
    %4021 = vmatmul.mubr.bf16.gmra.mrb[0].mxu0 %v3868
    %v4022 = vpop.f32.mrb[0].mxu0
    %v4023 = vadd.f32 %v3926, %v4022
    %v4024 = vpop.f32.mrb[0].mxu0
    %v4025 = vpop.f32.mrb[0].mxu0
    %v4026 = vadd.f32 %v3929, %v4025
    %v4027 = vpop.f32.mrb[0].mxu0
    %4028 = vmatprep.mubr.bf16.mxu0 0
    %4029 = vmatmul.mubr.bf16.gmra.mrb[0].mxu0 %v3871
    %v4030 = vpop.f32.mrb[0].mxu0
    %v4031 = vadd.f32 %v3934, %v4030
    %v4032 = vpop.f32.mrb[0].mxu0
    %v4033 = vpop.f32.mrb[0].mxu0
    %v4034 = vadd.f32 %v3937, %v4033
    %v4035 = vpop.f32.mrb[0].mxu0
    %4036 = vmatprep.mubr.bf16.mxu0 0
    %4037 = vmatmul.mubr.bf16.gmra.mrb[0].mxu0 %v3874
    %v4038 = vpop.f32.mrb[0].mxu0
    %v4039 = vadd.f32 %v3942, %v4038
    %v4040 = vpop.f32.mrb[0].mxu0
    %v4041 = vpop.f32.mrb[0].mxu0
    %v4042 = vadd.f32 %v3945, %v4041
    %v4043 = vpop.f32.mrb[0].mxu0
    %4044 = vmatprep.mubr.bf16.mxu0 0
    %4045 = vmatmul.mubr.bf16.gmra.mrb[0].mxu0 %v3877
    %v4046 = vpop.f32.mrb[0].mxu0
    %v4047 = vadd.f32 %v3950, %v4046
    %v4048 = vpop.f32.mrb[0].mxu0
    %v4049 = vpop.f32.mrb[0].mxu0
    %v4050 = vadd.f32 %v3953, %v4049
    %v4051 = vpop.f32.mrb[0].mxu0
    %4052 = vmatprep.mubr.bf16.mxu0 0
    %4053 = vmatmul.mubr.bf16.gmra.mrb[0].mxu0 %v3880
    %v4054 = vpop.f32.mrb[0].mxu0
    %v4055 = vadd.f32 %v3958, %v4054
    %v4056 = vpop.f32.mrb[0].mxu0
    %v4057 = vpop.f32.mrb[0].mxu0
    %v4058 = vadd.f32 %v3961, %v4057
    %v4059 = vpop.f32.mrb[0].mxu0
    %4060 = vmatprep.mubr.bf16.mxu0 0
    %4061 = vmatmul.mubr.bf16.gmra.mrb[0].mxu0 %v3883
    %v4062 = vpop.f32.mrb[0].mxu0
    %v4063 = vadd.f32 %v3966, %v4062
    %v4064 = vpop.f32.mrb[0].mxu0
    %v4065 = vpop.f32.mrb[0].mxu0
    %v4066 = vadd.f32 %v3969, %v4065
    %v4067 = vpop.f32.mrb[0].mxu0
    %4068 = vmatprep.mubr.bf16.mxu0 0
    %4069 = vmatmul.mubr.bf16.gmra.mrb[0].mxu0 %v3886
    %v4070 = vpop.f32.mrb[0].mxu0
    %v4071 = vadd.f32 %v3974, %v4070
    %v4072 = vpop.f32.mrb[0].mxu0
    %v4073 = vpop.f32.mrb[0].mxu0
    %v4074 = vadd.f32 %v3977, %v4073
    %v4075 = vpop.f32.mrb[0].mxu0
    %4076 = vmatprep.mubr.bf16.mxu0 0
    %4077 = vmatmul.mubr.bf16.gmra.mrb[0].mxu0 %v3889
    %v4078 = vpop.f32.mrb[0].mxu0
    %v4079 = vadd.f32 %v3982, %v4078
    %v4080 = vpop.f32.mrb[0].mxu0
    %v4081 = vpop.f32.mrb[0].mxu0
    %v4082 = vadd.f32 %v3985, %v4081
    %v4083 = vpop.f32.mrb[0].mxu0
    %4084 = vdwg.mxu0
    %v4085 = vmax.f32 %v4023, 0.0
    %v4086 = vmax.f32 %v4026, 0.0
    %v4087 = vmax.f32 %v4031, 0.0
    %v4088 = vmax.f32 %v4034, 0.0
    %v4089 = vmax.f32 %v4039, 0.0
    %v4090 = vmax.f32 %v4042, 0.0
    %v4091 = vmax.f32 %v4047, 0.0
    %v4092 = vmax.f32 %v4050, 0.0
    %v4093 = vmax.f32 %v4055, 0.0
    %v4094 = vmax.f32 %v4058, 0.0
    %v4095 = vmax.f32 %v4063, 0.0
    %v4096 = vmax.f32 %v4066, 0.0
    %v4097 = vmax.f32 %v4071, 0.0
    %v4098 = vmax.f32 %v4074, 0.0
    %v4099 = vmax.f32 %v4079, 0.0
    %v4100 = vmax.f32 %v4082, 0.0
    %v4101 = vmax.f32 %v4085, %v4086
    %v4102 = vmax.f32 %v4087, %v4088
    %v4103 = vmax.f32 %v4089, %v4090
    %v4104 = vmax.f32 %v4091, %v4092
    %v4105 = vmax.f32 %v4093, %v4094
    %v4106 = vmax.f32 %v4095, %v4096
    %v4107 = vmax.f32 %v4097, %v4098
    %v4108 = vmax.f32 %v4099, %v4100
    %v4117 = vcombine.high %v4101, %v4101
    %v4119 = vunpack.c.l.s4 1983009808
    %v4120 = vunpack.c.0.s8 %v4119
    %v4121 = vlaneseq
    %v4122 = vshrl.u32 %v4121, 7
    %v4123 = vsub.s32 %v4120, %v4122
    %v4124 = vrot.slane %v4101, %v4123
    %v4126 = vunpack.c.l.s4 1983009808
    %v4127 = vunpack.c.0.s8 %v4126
    %v4128 = vlaneseq
    %v4129 = vshrl.u32 %v4128, 7
    %v4130 = vsub.s32 %v4127, %v4129
    %v4131 = vrot.slane %v4117, %v4130
    %v4132 = vcombine.high %v4124, %v4124
    %v4133 = vcombine.high %v4131, %v4131
    %v4134 = vcombine.high %v4102, %v4102
    %v4136 = vunpack.c.l.s4 1983009808
    %v4137 = vunpack.c.0.s8 %v4136
    %v4138 = vlaneseq
    %v4139 = vshrl.u32 %v4138, 7
    %v4140 = vsub.s32 %v4137, %v4139
    %v4141 = vrot.slane %v4102, %v4140
    %v4143 = vunpack.c.l.s4 1983009808
    %v4144 = vunpack.c.0.s8 %v4143
    %v4145 = vlaneseq
    %v4146 = vshrl.u32 %v4145, 7
    %v4147 = vsub.s32 %v4144, %v4146
    %v4148 = vrot.slane %v4134, %v4147
    %v4149 = vcombine.high %v4141, %v4141
    %v4150 = vcombine.high %v4148, %v4148
    %v4151 = vcombine.high %v4103, %v4103
    %v4153 = vunpack.c.l.s4 1983009808
    %v4154 = vunpack.c.0.s8 %v4153
    %v4155 = vlaneseq
    %v4156 = vshrl.u32 %v4155, 7
    %v4157 = vsub.s32 %v4154, %v4156
    %v4158 = vrot.slane %v4103, %v4157
    %v4160 = vunpack.c.l.s4 1983009808
    %v4161 = vunpack.c.0.s8 %v4160
    %v4162 = vlaneseq
    %v4163 = vshrl.u32 %v4162, 7
    %v4164 = vsub.s32 %v4161, %v4163
    %v4165 = vrot.slane %v4151, %v4164
    %v4166 = vcombine.high %v4158, %v4158
    %v4167 = vcombine.high %v4165, %v4165
    %v4168 = vcombine.high %v4104, %v4104
    %v4170 = vunpack.c.l.s4 1983009808
    %v4171 = vunpack.c.0.s8 %v4170
    %v4172 = vlaneseq
    %v4173 = vshrl.u32 %v4172, 7
    %v4174 = vsub.s32 %v4171, %v4173
    %v4175 = vrot.slane %v4104, %v4174
    %v4177 = vunpack.c.l.s4 1983009808
    %v4178 = vunpack.c.0.s8 %v4177
    %v4179 = vlaneseq
    %v4180 = vshrl.u32 %v4179, 7
    %v4181 = vsub.s32 %v4178, %v4180
    %v4182 = vrot.slane %v4168, %v4181
    %v4183 = vcombine.high %v4175, %v4175
    %v4184 = vcombine.high %v4182, %v4182
    %v4185 = vcombine.high %v4105, %v4105
    %v4187 = vunpack.c.l.s4 1983009808
    %v4188 = vunpack.c.0.s8 %v4187
    %v4189 = vlaneseq
    %v4190 = vshrl.u32 %v4189, 7
    %v4191 = vsub.s32 %v4188, %v4190
    %v4192 = vrot.slane %v4105, %v4191
    %v4194 = vunpack.c.l.s4 1983009808
    %v4195 = vunpack.c.0.s8 %v4194
    %v4196 = vlaneseq
    %v4197 = vshrl.u32 %v4196, 7
    %v4198 = vsub.s32 %v4195, %v4197
    %v4199 = vrot.slane %v4185, %v4198
    %v4200 = vcombine.high %v4192, %v4192
    %v4201 = vcombine.high %v4199, %v4199
    %v4202 = vcombine.high %v4106, %v4106
    %v4204 = vunpack.c.l.s4 1983009808
    %v4205 = vunpack.c.0.s8 %v4204
    %v4206 = vlaneseq
    %v4207 = vshrl.u32 %v4206, 7
    %v4208 = vsub.s32 %v4205, %v4207
    %v4209 = vrot.slane %v4106, %v4208
    %v4211 = vunpack.c.l.s4 1983009808
    %v4212 = vunpack.c.0.s8 %v4211
    %v4213 = vlaneseq
    %v4214 = vshrl.u32 %v4213, 7
    %v4215 = vsub.s32 %v4212, %v4214
    %v4216 = vrot.slane %v4202, %v4215
    %v4217 = vcombine.high %v4209, %v4209
    %v4218 = vcombine.high %v4216, %v4216
    %v4219 = vcombine.high %v4107, %v4107
    %v4221 = vunpack.c.l.s4 1983009808
    %v4222 = vunpack.c.0.s8 %v4221
    %v4223 = vlaneseq
    %v4224 = vshrl.u32 %v4223, 7
    %v4225 = vsub.s32 %v4222, %v4224
    %v4226 = vrot.slane %v4107, %v4225
    %v4228 = vunpack.c.l.s4 1983009808
    %v4229 = vunpack.c.0.s8 %v4228
    %v4230 = vlaneseq
    %v4231 = vshrl.u32 %v4230, 7
    %v4232 = vsub.s32 %v4229, %v4231
    %v4233 = vrot.slane %v4219, %v4232
    %v4234 = vcombine.high %v4226, %v4226
    %v4235 = vcombine.high %v4233, %v4233
    %v4236 = vcombine.high %v4108, %v4108
    %v4238 = vunpack.c.l.s4 1983009808
    %v4239 = vunpack.c.0.s8 %v4238
    %v4240 = vlaneseq
    %v4241 = vshrl.u32 %v4240, 7
    %v4242 = vsub.s32 %v4239, %v4241
    %v4243 = vrot.slane %v4108, %v4242
    %v4245 = vunpack.c.l.s4 1983009808
    %v4246 = vunpack.c.0.s8 %v4245
    %v4247 = vlaneseq
    %v4248 = vshrl.u32 %v4247, 7
    %v4249 = vsub.s32 %v4246, %v4248
    %v4250 = vrot.slane %v4236, %v4249
    %v4251 = vcombine.high %v4243, %v4243
    %v4252 = vcombine.high %v4250, %v4250
    %v4285 = vrot.slane %v4124, 7
    %v4286 = vrot.slane %v4285, 2
    %v4287 = vrot.slane %v4132, 7
    %v4288 = vrot.slane %v4287, 2
    %v4289 = vrot.slane %v4131, 7
    %v4290 = vrot.slane %v4289, 2
    %v4291 = vrot.slane %v4133, 7
    %v4292 = vrot.slane %v4291, 2
    %v4293 = vrot.slane %v4141, 7
    %v4294 = vrot.slane %v4293, 2
    %v4295 = vrot.slane %v4149, 7
    %v4296 = vrot.slane %v4295, 2
    %v4297 = vrot.slane %v4148, 7
    %v4298 = vrot.slane %v4297, 2
    %v4299 = vrot.slane %v4150, 7
    %v4300 = vrot.slane %v4299, 2
    %v4301 = vrot.slane %v4158, 7
    %v4302 = vrot.slane %v4301, 2
    %v4303 = vrot.slane %v4166, 7
    %v4304 = vrot.slane %v4303, 2
    %v4305 = vrot.slane %v4165, 7
    %v4306 = vrot.slane %v4305, 2
    %v4307 = vrot.slane %v4167, 7
    %v4308 = vrot.slane %v4307, 2
    %v4309 = vrot.slane %v4175, 7
    %v4310 = vrot.slane %v4309, 2
    %v4311 = vrot.slane %v4183, 7
    %v4312 = vrot.slane %v4311, 2
    %v4313 = vrot.slane %v4182, 7
    %v4314 = vrot.slane %v4313, 2
    %v4315 = vrot.slane %v4184, 7
    %v4316 = vrot.slane %v4315, 2
    %v4317 = vrot.slane %v4192, 7
    %v4318 = vrot.slane %v4317, 2
    %v4319 = vrot.slane %v4200, 7
    %v4320 = vrot.slane %v4319, 2
    %v4321 = vrot.slane %v4199, 7
    %v4322 = vrot.slane %v4321, 2
    %v4323 = vrot.slane %v4201, 7
    %v4324 = vrot.slane %v4323, 2
    %v4325 = vrot.slane %v4209, 7
    %v4326 = vrot.slane %v4325, 2
    %v4327 = vrot.slane %v4217, 7
    %v4328 = vrot.slane %v4327, 2
    %v4329 = vrot.slane %v4216, 7
    %v4330 = vrot.slane %v4329, 2
    %v4331 = vrot.slane %v4218, 7
    %v4332 = vrot.slane %v4331, 2
    %v4333 = vrot.slane %v4226, 7
    %v4334 = vrot.slane %v4333, 2
    %v4335 = vrot.slane %v4234, 7
    %v4336 = vrot.slane %v4335, 2
    %v4337 = vrot.slane %v4233, 7
    %v4338 = vrot.slane %v4337, 2
    %v4339 = vrot.slane %v4235, 7
    %v4340 = vrot.slane %v4339, 2
    %v4341 = vrot.slane %v4243, 7
    %v4342 = vrot.slane %v4341, 2
    %v4343 = vrot.slane %v4251, 7
    %v4344 = vrot.slane %v4343, 2
    %v4345 = vrot.slane %v4250, 7
    %v4346 = vrot.slane %v4345, 2
    %v4347 = vrot.slane %v4252, 7
    %v4348 = vrot.slane %v4347, 2
    %v4381 = vmax.f32 %v4124, %v4286
    %v4382 = vmax.f32 %v4132, %v4288
    %v4383 = vmax.f32 %v4131, %v4290
    %v4384 = vmax.f32 %v4133, %v4292
    %v4385 = vmax.f32 %v4141, %v4294
    %v4386 = vmax.f32 %v4149, %v4296
    %v4387 = vmax.f32 %v4148, %v4298
    %v4388 = vmax.f32 %v4150, %v4300
    %v4389 = vmax.f32 %v4158, %v4302
    %v4390 = vmax.f32 %v4166, %v4304
    %v4391 = vmax.f32 %v4165, %v4306
    %v4392 = vmax.f32 %v4167, %v4308
    %v4393 = vmax.f32 %v4175, %v4310
    %v4394 = vmax.f32 %v4183, %v4312
    %v4395 = vmax.f32 %v4182, %v4314
    %v4396 = vmax.f32 %v4184, %v4316
    %v4397 = vmax.f32 %v4192, %v4318
    %v4398 = vmax.f32 %v4200, %v4320
    %v4399 = vmax.f32 %v4199, %v4322
    %v4400 = vmax.f32 %v4201, %v4324
    %v4401 = vmax.f32 %v4209, %v4326
    %v4402 = vmax.f32 %v4217, %v4328
    %v4403 = vmax.f32 %v4216, %v4330
    %v4404 = vmax.f32 %v4218, %v4332
    %v4405 = vmax.f32 %v4226, %v4334
    %v4406 = vmax.f32 %v4234, %v4336
    %v4407 = vmax.f32 %v4233, %v4338
    %v4408 = vmax.f32 %v4235, %v4340
    %v4409 = vmax.f32 %v4243, %v4342
    %v4410 = vmax.f32 %v4251, %v4344
    %v4411 = vmax.f32 %v4250, %v4346
    %v4412 = vmax.f32 %v4252, %v4348
    %vm4413 = vcmask 519168
    %4414 = vst.msk [vmem:[#allocation3] sm:$0xf] %vm4413, 0.0
    %4415 = vst.msk [vmem:[#allocation3 + $0x50] sm:$0xf] %vm4413, 0.0
    %s4416 = scalar_lea.vmem [#allocation3], 20
    %vm4417 = vcmask 516096
    %4418 = vst.msk [vmem:[%s4416] sm:$0x1] %vm4417, 0.0
    %4419 = vst.msk [vmem:[%s4416 + $0x14] sm:$0x1] %vm4417, 0.0
    %4420 = vst.msk [vmem:[%s4416 + $0x28] sm:$0x1] %vm4417, 0.0
    %4421 = vst.msk [vmem:[%s4416 + $0x50] sm:$0x1] %vm4417, 0.0
    %4422 = vst.msk [vmem:[%s4416 + $0x64] sm:$0x1] %vm4417, 0.0
    %4423 = vst.msk [vmem:[%s4416 + $0x78] sm:$0x1] %vm4417, 0.0
    %v4443 = vunpack.c.l.s4 572653568
    %v4444 = vunpack.c.0.s8 %v4443
    %v4445 = vlaneseq
    %v4446 = vshrl.u32 %v4445, 7
    %v4447 = vsub.s32 %v4444, %v4446
    %v4448 = vrot.slane %v4381, %v4447
    %v4450 = vunpack.c.l.s4 572653568
    %v4451 = vunpack.c.0.s8 %v4450
    %v4452 = vlaneseq
    %v4453 = vshrl.u32 %v4452, 7
    %v4454 = vsub.s32 %v4451, %v4453
    %v4455 = vrot.slane %v4382, %v4454
    %v4457 = vunpack.c.l.s4 572653568
    %v4458 = vunpack.c.0.s8 %v4457
    %v4459 = vlaneseq
    %v4460 = vshrl.u32 %v4459, 7
    %v4461 = vsub.s32 %v4458, %v4460
    %v4462 = vrot.slane %v4383, %v4461
    %v4464 = vunpack.c.l.s4 572653568
    %v4465 = vunpack.c.0.s8 %v4464
    %v4466 = vlaneseq
    %v4467 = vshrl.u32 %v4466, 7
    %v4468 = vsub.s32 %v4465, %v4467
    %v4469 = vrot.slane %v4385, %v4468
    %v4471 = vunpack.c.l.s4 572653568
    %v4472 = vunpack.c.0.s8 %v4471
    %v4473 = vlaneseq
    %v4474 = vshrl.u32 %v4473, 7
    %v4475 = vsub.s32 %v4472, %v4474
    %v4476 = vrot.slane %v4386, %v4475
    %v4478 = vunpack.c.l.s4 572653568
    %v4479 = vunpack.c.0.s8 %v4478
    %v4480 = vlaneseq
    %v4481 = vshrl.u32 %v4480, 7
    %v4482 = vsub.s32 %v4479, %v4481
    %v4483 = vrot.slane %v4387, %v4482
    %v4485 = vunpack.c.l.s4 572653568
    %v4486 = vunpack.c.0.s8 %v4485
    %v4487 = vlaneseq
    %v4488 = vshrl.u32 %v4487, 7
    %v4489 = vsub.s32 %v4486, %v4488
    %v4490 = vrot.slane %v4389, %v4489
    %v4492 = vunpack.c.l.s4 572653568
    %v4493 = vunpack.c.0.s8 %v4492
    %v4494 = vlaneseq
    %v4495 = vshrl.u32 %v4494, 7
    %v4496 = vsub.s32 %v4493, %v4495
    %v4497 = vrot.slane %v4390, %v4496
    %v4499 = vunpack.c.l.s4 572653568
    %v4500 = vunpack.c.0.s8 %v4499
    %v4501 = vlaneseq
    %v4502 = vshrl.u32 %v4501, 7
    %v4503 = vsub.s32 %v4500, %v4502
    %v4504 = vrot.slane %v4391, %v4503
    %v4506 = vunpack.c.l.s4 572653568
    %v4507 = vunpack.c.0.s8 %v4506
    %v4508 = vlaneseq
    %v4509 = vshrl.u32 %v4508, 7
    %v4510 = vsub.s32 %v4507, %v4509
    %v4511 = vrot.slane %v4397, %v4510
    %v4513 = vunpack.c.l.s4 572653568
    %v4514 = vunpack.c.0.s8 %v4513
    %v4515 = vlaneseq
    %v4516 = vshrl.u32 %v4515, 7
    %v4517 = vsub.s32 %v4514, %v4516
    %v4518 = vrot.slane %v4398, %v4517
    %v4520 = vunpack.c.l.s4 572653568
    %v4521 = vunpack.c.0.s8 %v4520
    %v4522 = vlaneseq
    %v4523 = vshrl.u32 %v4522, 7
    %v4524 = vsub.s32 %v4521, %v4523
    %v4525 = vrot.slane %v4399, %v4524
    %v4527 = vunpack.c.l.s4 572653568
    %v4528 = vunpack.c.0.s8 %v4527
    %v4529 = vlaneseq
    %v4530 = vshrl.u32 %v4529, 7
    %v4531 = vsub.s32 %v4528, %v4530
    %v4532 = vrot.slane %v4401, %v4531
    %v4534 = vunpack.c.l.s4 572653568
    %v4535 = vunpack.c.0.s8 %v4534
    %v4536 = vlaneseq
    %v4537 = vshrl.u32 %v4536, 7
    %v4538 = vsub.s32 %v4535, %v4537
    %v4539 = vrot.slane %v4402, %v4538
    %v4541 = vunpack.c.l.s4 572653568
    %v4542 = vunpack.c.0.s8 %v4541
    %v4543 = vlaneseq
    %v4544 = vshrl.u32 %v4543, 7
    %v4545 = vsub.s32 %v4542, %v4544
    %v4546 = vrot.slane %v4403, %v4545
    %v4548 = vunpack.c.l.s4 572653568
    %v4549 = vunpack.c.0.s8 %v4548
    %v4550 = vlaneseq
    %v4551 = vshrl.u32 %v4550, 7
    %v4552 = vsub.s32 %v4549, %v4551
    %v4553 = vrot.slane %v4405, %v4552
    %v4555 = vunpack.c.l.s4 572653568
    %v4556 = vunpack.c.0.s8 %v4555
    %v4557 = vlaneseq
    %v4558 = vshrl.u32 %v4557, 7
    %v4559 = vsub.s32 %v4556, %v4558
    %v4560 = vrot.slane %v4406, %v4559
    %v4562 = vunpack.c.l.s4 572653568
    %v4563 = vunpack.c.0.s8 %v4562
    %v4564 = vlaneseq
    %v4565 = vshrl.u32 %v4564, 7
    %v4566 = vsub.s32 %v4563, %v4565
    %v4567 = vrot.slane %v4407, %v4566
    %v4568 = vsel %vm2646, %v4455, %v4448
    %v4569 = vsel %vm2654, %v4455, %v4568
    %v4570 = vsel %vm2648, %v4462, %v4569
    %v4571 = vsel %vm2656, %v4462, %v4570
    %v4572 = vsel %vm2646, %v4476, %v4469
    %v4573 = vsel %vm2654, %v4476, %v4572
    %v4574 = vsel %vm2648, %v4483, %v4573
    %v4575 = vsel %vm2656, %v4483, %v4574
    %v4576 = vsel %vm2646, %v4497, %v4490
    %v4577 = vsel %vm2654, %v4497, %v4576
    %v4578 = vsel %vm2648, %v4504, %v4577
    %v4579 = vsel %vm2656, %v4504, %v4578
    %v4580 = vsel %vm2646, %v4518, %v4511
    %v4581 = vsel %vm2654, %v4518, %v4580
    %v4582 = vsel %vm2648, %v4525, %v4581
    %v4583 = vsel %vm2656, %v4525, %v4582
    %v4584 = vsel %vm2646, %v4539, %v4532
    %v4585 = vsel %vm2654, %v4539, %v4584
    %v4586 = vsel %vm2648, %v4546, %v4585
    %v4587 = vsel %vm2656, %v4546, %v4586
    %v4588 = vsel %vm2646, %v4560, %v4553
    %v4589 = vsel %vm2654, %v4560, %v4588
    %v4590 = vsel %vm2648, %v4567, %v4589
    %v4591 = vsel %vm2656, %v4567, %v4590
    %vm4598 = vcmask 519169
    %4599 = vst.msk [vmem:[%s4416] sm:$0xe] %vm4598, %v4571
    %4600 = vst.msk [vmem:[%s4416 + $0x14] sm:$0xe] %vm4598, %v4575
    %4601 = vst.msk [vmem:[%s4416 + $0x28] sm:$0xe] %vm4598, %v4579
    %4602 = vst.msk [vmem:[%s4416 + $0x50] sm:$0xe] %vm4598, %v4583
    %4603 = vst.msk [vmem:[%s4416 + $0x64] sm:$0xe] %vm4598, %v4587
    %4604 = vst.msk [vmem:[%s4416 + $0x78] sm:$0xe] %vm4598, %v4591
    %vm4605 = vcmask 1043968
    %4606 = vst.msk [vmem:[#allocation3] sm:$0xf] %vm4605, 0.0
    %4607 = vst.msk [vmem:[#allocation3 + $0x50] sm:$0xf] %vm4605, 0.0
    %v4615 = vunpack.c.l.s4 572653568
    %v4616 = vunpack.c.0.s8 %v4615
    %v4617 = vlaneseq
    %v4618 = vshrl.u32 %v4617, 7
    %v4619 = vsub.s32 %v4616, %v4618
    %v4620 = vrot.slane %v4384, %v4619
    %v4622 = vunpack.c.l.s4 572653568
    %v4623 = vunpack.c.0.s8 %v4622
    %v4624 = vlaneseq
    %v4625 = vshrl.u32 %v4624, 7
    %v4626 = vsub.s32 %v4623, %v4625
    %v4627 = vrot.slane %v4388, %v4626
    %v4629 = vunpack.c.l.s4 572653568
    %v4630 = vunpack.c.0.s8 %v4629
    %v4631 = vlaneseq
    %v4632 = vshrl.u32 %v4631, 7
    %v4633 = vsub.s32 %v4630, %v4632
    %v4634 = vrot.slane %v4392, %v4633
    %v4636 = vunpack.c.l.s4 572653568
    %v4637 = vunpack.c.0.s8 %v4636
    %v4638 = vlaneseq
    %v4639 = vshrl.u32 %v4638, 7
    %v4640 = vsub.s32 %v4637, %v4639
    %v4641 = vrot.slane %v4400, %v4640
    %v4643 = vunpack.c.l.s4 572653568
    %v4644 = vunpack.c.0.s8 %v4643
    %v4645 = vlaneseq
    %v4646 = vshrl.u32 %v4645, 7
    %v4647 = vsub.s32 %v4644, %v4646
    %v4648 = vrot.slane %v4404, %v4647
    %v4650 = vunpack.c.l.s4 572653568
    %v4651 = vunpack.c.0.s8 %v4650
    %v4652 = vlaneseq
    %v4653 = vshrl.u32 %v4652, 7
    %v4654 = vsub.s32 %v4651, %v4653
    %v4655 = vrot.slane %v4408, %v4654
    %v4656 = vsel %vm2838, %v4455, %v4448
    %v4657 = vsel %vm2652, %v4455, %v4656
    %v4658 = vsel %vm2646, %v4462, %v4657
    %v4659 = vsel %vm2654, %v4462, %v4658
    %v4660 = vsel %vm2648, %v4620, %v4659
    %v4661 = vsel %vm2656, %v4620, %v4660
    %v4662 = vsel %vm2838, %v4476, %v4469
    %v4663 = vsel %vm2652, %v4476, %v4662
    %v4664 = vsel %vm2646, %v4483, %v4663
    %v4665 = vsel %vm2654, %v4483, %v4664
    %v4666 = vsel %vm2648, %v4627, %v4665
    %v4667 = vsel %vm2656, %v4627, %v4666
    %v4668 = vsel %vm2838, %v4497, %v4490
    %v4669 = vsel %vm2652, %v4497, %v4668
    %v4670 = vsel %vm2646, %v4504, %v4669
    %v4671 = vsel %vm2654, %v4504, %v4670
    %v4672 = vsel %vm2648, %v4634, %v4671
    %v4673 = vsel %vm2656, %v4634, %v4672
    %v4674 = vsel %vm2838, %v4518, %v4511
    %v4675 = vsel %vm2652, %v4518, %v4674
    %v4676 = vsel %vm2646, %v4525, %v4675
    %v4677 = vsel %vm2654, %v4525, %v4676
    %v4678 = vsel %vm2648, %v4641, %v4677
    %v4679 = vsel %vm2656, %v4641, %v4678
    %v4680 = vsel %vm2838, %v4539, %v4532
    %v4681 = vsel %vm2652, %v4539, %v4680
    %v4682 = vsel %vm2646, %v4546, %v4681
    %v4683 = vsel %vm2654, %v4546, %v4682
    %v4684 = vsel %vm2648, %v4648, %v4683
    %v4685 = vsel %vm2656, %v4648, %v4684
    %v4686 = vsel %vm2838, %v4560, %v4553
    %v4687 = vsel %vm2652, %v4560, %v4686
    %v4688 = vsel %vm2646, %v4567, %v4687
    %v4689 = vsel %vm2654, %v4567, %v4688
    %v4690 = vsel %vm2648, %v4655, %v4689
    %v4691 = vsel %vm2656, %v4655, %v4690
    %4692 = vrot.lane.b32.xlu0 %v4661, 64
    %v4693 = vpop.permute.xlu0 %4692
    %4694 = vrot.lane.b32.xlu0 %v4667, 64
    %v4695 = vpop.permute.xlu0 %4694
    %4696 = vrot.lane.b32.xlu0 %v4673, 64
    %v4697 = vpop.permute.xlu0 %4696
    %4698 = vrot.lane.b32.xlu0 %v4679, 64
    %v4699 = vpop.permute.xlu0 %4698
    %4700 = vrot.lane.b32.xlu0 %v4685, 64
    %v4701 = vpop.permute.xlu0 %4700
    %4702 = vrot.lane.b32.xlu0 %v4691, 64
    %v4703 = vpop.permute.xlu0 %4702
    %4710 = vst.msk [vmem:[%s4416] sm:$0xf] %vm4605, %v4693
    %4711 = vst.msk [vmem:[%s4416 + $0x14] sm:$0xf] %vm4605, %v4695
    %4712 = vst.msk [vmem:[%s4416 + $0x28] sm:$0xf] %vm4605, %v4697
    %4713 = vst.msk [vmem:[%s4416 + $0x50] sm:$0xf] %vm4605, %v4699
    %4714 = vst.msk [vmem:[%s4416 + $0x64] sm:$0xf] %vm4605, %v4701
    %4715 = vst.msk [vmem:[%s4416 + $0x78] sm:$0xf] %vm4605, %v4703
    %4716 = vst.msk [vmem:[#allocation3 + $0x4] sm:$0xf] %vm4413, 0.0
    %4717 = vst.msk [vmem:[#allocation3 + $0x54] sm:$0xf] %vm4413, 0.0
    %4718 = vst.msk [vmem:[%s4416 + $0x7] sm:$0x1] %vm4417, 0.0
    %4719 = vst.msk [vmem:[%s4416 + $0x1b] sm:$0x1] %vm4417, 0.0
    %4720 = vst.msk [vmem:[%s4416 + $0x2f] sm:$0x1] %vm4417, 0.0
    %4721 = vst.msk [vmem:[%s4416 + $0x57] sm:$0x1] %vm4417, 0.0
    %4722 = vst.msk [vmem:[%s4416 + $0x6b] sm:$0x1] %vm4417, 0.0
    %4723 = vst.msk [vmem:[%s4416 + $0x7f] sm:$0x1] %vm4417, 0.0
    %v4724 = vsel %vm2838, %v4462, %v4455
    %v4725 = vsel %vm2652, %v4462, %v4724
    %v4726 = vsel %vm2646, %v4620, %v4725
    %v4727 = vsel %vm2654, %v4620, %v4726
    %v4728 = vsel %vm2838, %v4483, %v4476
    %v4729 = vsel %vm2652, %v4483, %v4728
    %v4730 = vsel %vm2646, %v4627, %v4729
    %v4731 = vsel %vm2654, %v4627, %v4730
    %v4732 = vsel %vm2838, %v4504, %v4497
    %v4733 = vsel %vm2652, %v4504, %v4732
    %v4734 = vsel %vm2646, %v4634, %v4733
    %v4735 = vsel %vm2654, %v4634, %v4734
    %v4736 = vsel %vm2838, %v4525, %v4518
    %v4737 = vsel %vm2652, %v4525, %v4736
    %v4738 = vsel %vm2646, %v4641, %v4737
    %v4739 = vsel %vm2654, %v4641, %v4738
    %v4740 = vsel %vm2838, %v4546, %v4539
    %v4741 = vsel %vm2652, %v4546, %v4740
    %v4742 = vsel %vm2646, %v4648, %v4741
    %v4743 = vsel %vm2654, %v4648, %v4742
    %v4744 = vsel %vm2838, %v4567, %v4560
    %v4745 = vsel %vm2652, %v4567, %v4744
    %v4746 = vsel %vm2646, %v4655, %v4745
    %v4747 = vsel %vm2654, %v4655, %v4746
    %vm4754 = vcmask 518144
    %4755 = vst.msk [vmem:[%s4416 + $0x4] sm:$0x7] %vm4754, %v4727
    %4756 = vst.msk [vmem:[%s4416 + $0x18] sm:$0x7] %vm4754, %v4731
    %4757 = vst.msk [vmem:[%s4416 + $0x2c] sm:$0x7] %vm4754, %v4735
    %4758 = vst.msk [vmem:[%s4416 + $0x54] sm:$0x7] %vm4754, %v4739
    %4759 = vst.msk [vmem:[%s4416 + $0x68] sm:$0x7] %vm4754, %v4743
    %4760 = vst.msk [vmem:[%s4416 + $0x7c] sm:$0x7] %vm4754, %v4747
    %vm4761 = vcmask 1040896
    %4762 = vst.msk [vmem:[#allocation3 + $0x4] sm:$0x1] %vm4761, 0.0
    %4763 = vst.msk [vmem:[#allocation3 + $0x18] sm:$0x1] %vm4761, 0.0
    %4764 = vst.msk [vmem:[#allocation3 + $0x2c] sm:$0x1] %vm4761, 0.0
    %4765 = vst.msk [vmem:[#allocation3 + $0x40] sm:$0x1] %vm4761, 0.0
    %4766 = vst.msk [vmem:[#allocation3 + $0x54] sm:$0x1] %vm4761, 0.0
    %4767 = vst.msk [vmem:[#allocation3 + $0x68] sm:$0x1] %vm4761, 0.0
    %4768 = vst.msk [vmem:[#allocation3 + $0x7c] sm:$0x1] %vm4761, 0.0
    %4769 = vst.msk [vmem:[#allocation3 + $0x90] sm:$0x1] %vm4761, 0.0
    %v4777 = vunpack.c.l.s4 572653568
    %v4778 = vunpack.c.0.s8 %v4777
    %v4779 = vlaneseq
    %v4780 = vshrl.u32 %v4779, 7
    %v4781 = vsub.s32 %v4778, %v4780
    %v4782 = vrot.slane %v4393, %v4781
    %v4784 = vunpack.c.l.s4 572653568
    %v4785 = vunpack.c.0.s8 %v4784
    %v4786 = vlaneseq
    %v4787 = vshrl.u32 %v4786, 7
    %v4788 = vsub.s32 %v4785, %v4787
    %v4789 = vrot.slane %v4394, %v4788
    %v4791 = vunpack.c.l.s4 572653568
    %v4792 = vunpack.c.0.s8 %v4791
    %v4793 = vlaneseq
    %v4794 = vshrl.u32 %v4793, 7
    %v4795 = vsub.s32 %v4792, %v4794
    %v4796 = vrot.slane %v4395, %v4795
    %v4798 = vunpack.c.l.s4 572653568
    %v4799 = vunpack.c.0.s8 %v4798
    %v4800 = vlaneseq
    %v4801 = vshrl.u32 %v4800, 7
    %v4802 = vsub.s32 %v4799, %v4801
    %v4803 = vrot.slane %v4409, %v4802
    %v4805 = vunpack.c.l.s4 572653568
    %v4806 = vunpack.c.0.s8 %v4805
    %v4807 = vlaneseq
    %v4808 = vshrl.u32 %v4807, 7
    %v4809 = vsub.s32 %v4806, %v4808
    %v4810 = vrot.slane %v4410, %v4809
    %v4812 = vunpack.c.l.s4 572653568
    %v4813 = vunpack.c.0.s8 %v4812
    %v4814 = vlaneseq
    %v4815 = vshrl.u32 %v4814, 7
    %v4816 = vsub.s32 %v4813, %v4815
    %v4817 = vrot.slane %v4411, %v4816
    %v4818 = vsel %vm2646, %v4789, %v4782
    %v4819 = vsel %vm2654, %v4789, %v4818
    %v4820 = vsel %vm2648, %v4796, %v4819
    %v4821 = vsel %vm2656, %v4796, %v4820
    %v4822 = vsel %vm2646, %v4810, %v4803
    %v4823 = vsel %vm2654, %v4810, %v4822
    %v4824 = vsel %vm2648, %v4817, %v4823
    %v4825 = vsel %vm2656, %v4817, %v4824
    %4826 = vrot.lane.b32.xlu0 %v4571, 64
    %v4827 = vpop.permute.xlu0 %4826
    %4828 = vrot.lane.b32.xlu0 %v4575, 64
    %v4829 = vpop.permute.xlu0 %4828
    %4830 = vrot.lane.b32.xlu0 %v4579, 64
    %v4831 = vpop.permute.xlu0 %4830
    %4832 = vrot.lane.b32.xlu0 %v4821, 64
    %v4833 = vpop.permute.xlu0 %4832
    %4834 = vrot.lane.b32.xlu0 %v4583, 64
    %v4835 = vpop.permute.xlu0 %4834
    %4836 = vrot.lane.b32.xlu0 %v4587, 64
    %v4837 = vpop.permute.xlu0 %4836
    %4838 = vrot.lane.b32.xlu0 %v4591, 64
    %v4839 = vpop.permute.xlu0 %4838
    %4840 = vrot.lane.b32.xlu0 %v4825, 64
    %v4841 = vpop.permute.xlu0 %4840
    %vm4850 = vcmask 1043969
    %4851 = vst.msk [vmem:[#allocation3 + $0x4] sm:$0xe] %vm4850, %v4827
    %4852 = vst.msk [vmem:[#allocation3 + $0x18] sm:$0xe] %vm4850, %v4829
    %4853 = vst.msk [vmem:[#allocation3 + $0x2c] sm:$0xe] %vm4850, %v4831
    %4854 = vst.msk [vmem:[#allocation3 + $0x40] sm:$0xe] %vm4850, %v4833
    %4855 = vst.msk [vmem:[#allocation3 + $0x54] sm:$0xe] %vm4850, %v4835
    %4856 = vst.msk [vmem:[#allocation3 + $0x68] sm:$0xe] %vm4850, %v4837
    %4857 = vst.msk [vmem:[#allocation3 + $0x7c] sm:$0xe] %vm4850, %v4839
    %4858 = vst.msk [vmem:[#allocation3 + $0x90] sm:$0xe] %vm4850, %v4841
    %v4862 = vunpack.c.l.s4 572653568
    %v4863 = vunpack.c.0.s8 %v4862
    %v4864 = vlaneseq
    %v4865 = vshrl.u32 %v4864, 7
    %v4866 = vsub.s32 %v4863, %v4865
    %v4867 = vrot.slane %v4396, %v4866
    %v4869 = vunpack.c.l.s4 572653568
    %v4870 = vunpack.c.0.s8 %v4869
    %v4871 = vlaneseq
    %v4872 = vshrl.u32 %v4871, 7
    %v4873 = vsub.s32 %v4870, %v4872
    %v4874 = vrot.slane %v4412, %v4873
    %v4875 = vsel %vm2838, %v4789, %v4782
    %v4876 = vsel %vm2652, %v4789, %v4875
    %v4877 = vsel %vm2646, %v4796, %v4876
    %v4878 = vsel %vm2654, %v4796, %v4877
    %v4879 = vsel %vm2648, %v4867, %v4878
    %v4880 = vsel %vm2656, %v4867, %v4879
    %v4881 = vsel %vm2838, %v4810, %v4803
    %v4882 = vsel %vm2652, %v4810, %v4881
    %v4883 = vsel %vm2646, %v4817, %v4882
    %v4884 = vsel %vm2654, %v4817, %v4883
    %v4885 = vsel %vm2648, %v4874, %v4884
    %v4886 = vsel %vm2656, %v4874, %v4885
    %4895 = vst.msk [vmem:[#allocation3 + $0x8] sm:$0xf] %vm4413, %v4661
    %4896 = vst.msk [vmem:[#allocation3 + $0x1c] sm:$0xf] %vm4413, %v4667
    %4897 = vst.msk [vmem:[#allocation3 + $0x30] sm:$0xf] %vm4413, %v4673
    %4898 = vst.msk [vmem:[#allocation3 + $0x44] sm:$0xf] %vm4413, %v4880
    %4899 = vst.msk [vmem:[#allocation3 + $0x58] sm:$0xf] %vm4413, %v4679
    %4900 = vst.msk [vmem:[#allocation3 + $0x6c] sm:$0xf] %vm4413, %v4685
    %4901 = vst.msk [vmem:[#allocation3 + $0x80] sm:$0xf] %vm4413, %v4691
    %4902 = vst.msk [vmem:[#allocation3 + $0x94] sm:$0xf] %vm4413, %v4886
    %4903 = vst.msk [vmem:[#allocation3 + $0xb] sm:$0x1] %vm4761, 0.0
    %4904 = vst.msk [vmem:[#allocation3 + $0x1f] sm:$0x1] %vm4761, 0.0
    %4905 = vst.msk [vmem:[#allocation3 + $0x33] sm:$0x1] %vm4761, 0.0
    %4906 = vst.msk [vmem:[#allocation3 + $0x47] sm:$0x1] %vm4761, 0.0
    %4907 = vst.msk [vmem:[#allocation3 + $0x5b] sm:$0x1] %vm4761, 0.0
    %4908 = vst.msk [vmem:[#allocation3 + $0x6f] sm:$0x1] %vm4761, 0.0
    %4909 = vst.msk [vmem:[#allocation3 + $0x83] sm:$0x1] %vm4761, 0.0
    %4910 = vst.msk [vmem:[#allocation3 + $0x97] sm:$0x1] %vm4761, 0.0
    %v4911 = vsel %vm2838, %v4796, %v4789
    %v4912 = vsel %vm2652, %v4796, %v4911
    %v4913 = vsel %vm2646, %v4867, %v4912
    %v4914 = vsel %vm2654, %v4867, %v4913
    %v4915 = vsel %vm2838, %v4817, %v4810
    %v4916 = vsel %vm2652, %v4817, %v4915
    %v4917 = vsel %vm2646, %v4874, %v4916
    %v4918 = vsel %vm2654, %v4874, %v4917
    %4919 = vrot.lane.b32.xlu0 %v4727, 64
    %v4920 = vpop.permute.xlu0 %4919
    %4921 = vrot.lane.b32.xlu0 %v4731, 64
    %v4922 = vpop.permute.xlu0 %4921
    %4923 = vrot.lane.b32.xlu0 %v4735, 64
    %v4924 = vpop.permute.xlu0 %4923
    %4925 = vrot.lane.b32.xlu0 %v4914, 64
    %v4926 = vpop.permute.xlu0 %4925
    %4927 = vrot.lane.b32.xlu0 %v4739, 64
    %v4928 = vpop.permute.xlu0 %4927
    %4929 = vrot.lane.b32.xlu0 %v4743, 64
    %v4930 = vpop.permute.xlu0 %4929
    %4931 = vrot.lane.b32.xlu0 %v4747, 64
    %v4932 = vpop.permute.xlu0 %4931
    %4933 = vrot.lane.b32.xlu0 %v4918, 64
    %v4934 = vpop.permute.xlu0 %4933
    %vm4943 = vcmask 1042944
    %4944 = vst.msk [vmem:[#allocation3 + $0x8] sm:$0x7] %vm4943, %v4920
    %4945 = vst.msk [vmem:[#allocation3 + $0x1c] sm:$0x7] %vm4943, %v4922
    %4946 = vst.msk [vmem:[#allocation3 + $0x30] sm:$0x7] %vm4943, %v4924
    %4947 = vst.msk [vmem:[#allocation3 + $0x44] sm:$0x7] %vm4943, %v4926
    %4948 = vst.msk [vmem:[#allocation3 + $0x58] sm:$0x7] %vm4943, %v4928
    %4949 = vst.msk [vmem:[#allocation3 + $0x6c] sm:$0x7] %vm4943, %v4930
    %4950 = vst.msk [vmem:[#allocation3 + $0x80] sm:$0x7] %vm4943, %v4932
    %4951 = vst.msk [vmem:[#allocation3 + $0x94] sm:$0x7] %vm4943, %v4934
    %s4952 = scalar_lea.vmem [#allocation3], 60
    %4953 = vst.msk [vmem:[%s4952 + $0xc] sm:$0xf] %vm4413, 0.0
    %4954 = vst.msk [vmem:[%s4952 + $0x5c] sm:$0xf] %vm4413, 0.0
    %4955 = vst.msk [vmem:[#allocation3 + $0xc] sm:$0x1] %vm4417, 0.0
    %4956 = vst.msk [vmem:[#allocation3 + $0x20] sm:$0x1] %vm4417, 0.0
    %4957 = vst.msk [vmem:[#allocation3 + $0x34] sm:$0x1] %vm4417, 0.0
    %4958 = vst.msk [vmem:[#allocation3 + $0x5c] sm:$0x1] %vm4417, 0.0
    %4959 = vst.msk [vmem:[#allocation3 + $0x70] sm:$0x1] %vm4417, 0.0
    %4960 = vst.msk [vmem:[#allocation3 + $0x84] sm:$0x1] %vm4417, 0.0
    %4963 = vst.msk [vmem:[#allocation3 + $0xc] sm:$0xe] %vm4598, %v4575
    %4964 = vst.msk [vmem:[#allocation3 + $0x20] sm:$0xe] %vm4598, %v4579
    %4965 = vst.msk [vmem:[#allocation3 + $0x34] sm:$0xe] %vm4598, %v4821
    %4966 = vst.msk [vmem:[#allocation3 + $0x5c] sm:$0xe] %vm4598, %v4587
    %4967 = vst.msk [vmem:[#allocation3 + $0x70] sm:$0xe] %vm4598, %v4591
    %4968 = vst.msk [vmem:[#allocation3 + $0x84] sm:$0xe] %vm4598, %v4825
    %4969 = vst.msk [vmem:[%s4952 + $0xc] sm:$0xf] %vm4605, 0.0
    %4970 = vst.msk [vmem:[%s4952 + $0x5c] sm:$0xf] %vm4605, 0.0
    %4971 = vrot.lane.b32.xlu0 %v4880, 64
    %v4972 = vpop.permute.xlu0 %4971
    %4973 = vrot.lane.b32.xlu0 %v4886, 64
    %v4974 = vpop.permute.xlu0 %4973
    %4977 = vst.msk [vmem:[#allocation3 + $0xc] sm:$0xf] %vm4605, %v4695
    %4978 = vst.msk [vmem:[#allocation3 + $0x20] sm:$0xf] %vm4605, %v4697
    %4979 = vst.msk [vmem:[#allocation3 + $0x34] sm:$0xf] %vm4605, %v4972
    %4980 = vst.msk [vmem:[#allocation3 + $0x5c] sm:$0xf] %vm4605, %v4701
    %4981 = vst.msk [vmem:[#allocation3 + $0x70] sm:$0xf] %vm4605, %v4703
    %4982 = vst.msk [vmem:[#allocation3 + $0x84] sm:$0xf] %vm4605, %v4974
    %4983 = vst.msk [vmem:[%s4952 + $0x10] sm:$0xf] %vm4413, 0.0
    %4984 = vst.msk [vmem:[%s4952 + $0x60] sm:$0xf] %vm4413, 0.0
    %4985 = vst.msk [vmem:[#allocation3 + $0x13] sm:$0x1] %vm4417, 0.0
    %4986 = vst.msk [vmem:[#allocation3 + $0x27] sm:$0x1] %vm4417, 0.0
    %4987 = vst.msk [vmem:[#allocation3 + $0x3b] sm:$0x1] %vm4417, 0.0
    %4988 = vst.msk [vmem:[#allocation3 + $0x63] sm:$0x1] %vm4417, 0.0
    %4989 = vst.msk [vmem:[#allocation3 + $0x77] sm:$0x1] %vm4417, 0.0
    %4990 = vst.msk [vmem:[#allocation3 + $0x8b] sm:$0x1] %vm4417, 0.0
    %4993 = vst.msk [vmem:[#allocation3 + $0x10] sm:$0x7] %vm4754, %v4731
    %4994 = vst.msk [vmem:[#allocation3 + $0x24] sm:$0x7] %vm4754, %v4735
    %4995 = vst.msk [vmem:[#allocation3 + $0x38] sm:$0x7] %vm4754, %v4914
    %4996 = vst.msk [vmem:[#allocation3 + $0x60] sm:$0x7] %vm4754, %v4743
    %4997 = vst.msk [vmem:[#allocation3 + $0x74] sm:$0x7] %vm4754, %v4747
    %4998 = vst.msk [vmem:[#allocation3 + $0x88] sm:$0x7] %vm4754, %v4918
    %v4999 = vld [vmem:[#allocation3] sm:$0xff]
    %v5000 = vld [vmem:[#allocation3 + $0x8] sm:$0xff]
    %v5001 = vld [vmem:[#allocation3 + $0x10] sm:$0xf]
    %v5002 = vld [vmem:[#allocation3 + $0x14] sm:$0xff]
    %v5003 = vld [vmem:[#allocation3 + $0x1c] sm:$0xff]
    %v5004 = vld [vmem:[#allocation3 + $0x24] sm:$0xf]
    %v5005 = vld [vmem:[#allocation3 + $0x28] sm:$0xff]
    %v5006 = vld [vmem:[#allocation3 + $0x30] sm:$0xff]
    %v5007 = vld [vmem:[#allocation3 + $0x38] sm:$0xf]
    %v5008 = vld [vmem:[#allocation3 + $0x3c] sm:$0xff]
    %v5009 = vld [vmem:[#allocation3 + $0x44] sm:$0xff]
    %v5010 = vld [vmem:[#allocation3 + $0x4c] sm:$0xf]
    %v5011 = vld [vmem:[#allocation3 + $0x50] sm:$0xff]
    %v5012 = vld [vmem:[#allocation3 + $0x58] sm:$0xff]
    %v5013 = vld [vmem:[#allocation3 + $0x60] sm:$0xf]
    %v5014 = vld [vmem:[#allocation3 + $0x64] sm:$0xff]
    %v5015 = vld [vmem:[#allocation3 + $0x6c] sm:$0xff]
    %v5016 = vld [vmem:[#allocation3 + $0x74] sm:$0xf]
    %v5017 = vld [vmem:[#allocation3 + $0x78] sm:$0xff]
    %v5018 = vld [vmem:[#allocation3 + $0x80] sm:$0xff]
    %v5019 = vld [vmem:[#allocation3 + $0x88] sm:$0xf]
    %v5020 = vld [vmem:[#allocation3 + $0x8c] sm:$0xff]
    %v5021 = vld [vmem:[#allocation3 + $0x94] sm:$0xff]
    %v5022 = vld [vmem:[#allocation3 + $0x9c] sm:$0xf]
    %v5047 = vcombine.low %v4999, %v5002
    %v5048 = vcombine.high %v4999, %v5002
    %v5049 = vcombine.low %v5000, %v5003
    %v5050 = vcombine.high %v5000, %v5003
    %v5051 = vcombine.low %v5001, %v5004
    %v5052 = vcombine.low %v5005, %v5008
    %v5053 = vcombine.high %v5005, %v5008
    %v5054 = vcombine.low %v5006, %v5009
    %v5055 = vcombine.high %v5006, %v5009
    %v5056 = vcombine.low %v5007, %v5010
    %v5057 = vcombine.low %v5011, %v5014
    %v5058 = vcombine.high %v5011, %v5014
    %v5059 = vcombine.low %v5012, %v5015
    %v5060 = vcombine.high %v5012, %v5015
    %v5061 = vcombine.low %v5013, %v5016
    %v5062 = vcombine.low %v5017, %v5020
    %v5063 = vcombine.high %v5017, %v5020
    %v5064 = vcombine.low %v5018, %v5021
    %v5065 = vcombine.high %v5018, %v5021
    %v5066 = vcombine.low %v5019, %v5022
    %v5087 = vpack.c.bf16 %v5052, %v5047
    %v5088 = vpack.c.bf16 %v5053, %v5048
    %v5089 = vpack.c.bf16 %v5054, %v5049
    %v5090 = vpack.c.bf16 %v5055, %v5050
    %v5091 = vpack.c.bf16 %v5056, %v5051
    %v5092 = vpack.c.bf16 %v5062, %v5057
    %v5093 = vpack.c.bf16 %v5063, %v5058
    %v5094 = vpack.c.bf16 %v5064, %v5059
    %v5095 = vpack.c.bf16 %v5065, %v5060
    %v5096 = vpack.c.bf16 %v5066, %v5061
    %v5097 = vld [vmem:[#allocation16] sm:$0xf]
    %v5098 = vld [vmem:[#allocation16 + $0x4] sm:$0xf]
    %v5099 = vld [vmem:[#allocation16 + $0x8] sm:$0xf]
    %v5100 = vld [vmem:[#allocation16 + $0xc] sm:$0xf]
    %v5101 = vld [vmem:[#allocation16 + $0x10] sm:$0xf]
    %v5102 = vld [vmem:[#allocation16 + $0x14] sm:$0xf]
    %v5103 = vld [vmem:[#allocation16 + $0x18] sm:$0xf]
    %v5104 = vld [vmem:[#allocation16 + $0x1c] sm:$0xf]
    %v5105 = vld [vmem:[#allocation16 + $0x20] sm:$0xf]
    %v5106 = vld [vmem:[#allocation16 + $0x24] sm:$0xf]
    %v5107 = vld [vmem:[#allocation16 + $0x28] sm:$0xf]
    %v5108 = vld [vmem:[#allocation16 + $0x2c] sm:$0xf]
    %v5109 = vld [vmem:[#allocation16 + $0x30] sm:$0xf]
    %v5110 = vld [vmem:[#allocation16 + $0x34] sm:$0xf]
    %v5111 = vld [vmem:[#allocation16 + $0x38] sm:$0xf]
    %v5112 = vld [vmem:[#allocation16 + $0x3c] sm:$0xf]
    %v5113 = vld [vmem:[#allocation16 + $0x40] sm:$0xf]
    %v5114 = vld [vmem:[#allocation16 + $0x44] sm:$0xf]
    %v5115 = vld [vmem:[#allocation16 + $0x48] sm:$0xf]
    %v5116 = vld [vmem:[#allocation16 + $0x4c] sm:$0xf]
    %v5117 = vld [vmem:[#allocation16 + $0x50] sm:$0xf]
    %v5118 = vld [vmem:[#allocation16 + $0x54] sm:$0xf]
    %v5119 = vld [vmem:[#allocation16 + $0x58] sm:$0xf]
    %v5120 = vld [vmem:[#allocation16 + $0x5c] sm:$0xf]
    %v5121 = vld [vmem:[#allocation16 + $0x60] sm:$0xf]
    %v5122 = vld [vmem:[#allocation16 + $0x64] sm:$0xf]
    %v5123 = vld [vmem:[#allocation16 + $0x68] sm:$0xf]
    %v5124 = vld [vmem:[#allocation16 + $0x6c] sm:$0xf]
    %v5125 = vld [vmem:[#allocation16 + $0x70] sm:$0xf]
    %v5126 = vld [vmem:[#allocation16 + $0x74] sm:$0xf]
    %v5127 = vld [vmem:[#allocation16 + $0x78] sm:$0xf]
    %v5128 = vld [vmem:[#allocation16 + $0x7c] sm:$0xf]
    %v5129 = vld [vmem:[#allocation16 + $0x80] sm:$0xf]
    %v5130 = vld [vmem:[#allocation16 + $0x84] sm:$0xf]
    %v5131 = vld [vmem:[#allocation16 + $0x88] sm:$0xf]
    %v5132 = vld [vmem:[#allocation16 + $0x8c] sm:$0xf]
    %v5133 = vld [vmem:[#allocation16 + $0x90] sm:$0xf]
    %v5134 = vld [vmem:[#allocation16 + $0x94] sm:$0xf]
    %v5135 = vld [vmem:[#allocation16 + $0x98] sm:$0xf]
    %v5136 = vld [vmem:[#allocation16 + $0x9c] sm:$0xf]
    %v5137 = vld [vmem:[#allocation16 + $0xa0] sm:$0xf]
    %v5138 = vld [vmem:[#allocation16 + $0xa4] sm:$0xf]
    %v5139 = vld [vmem:[#allocation16 + $0xa8] sm:$0xf]
    %v5140 = vld [vmem:[#allocation16 + $0xac] sm:$0xf]
    %v5141 = vld [vmem:[#allocation16 + $0xb0] sm:$0xf]
    %v5142 = vld [vmem:[#allocation16 + $0xb4] sm:$0xf]
    %v5143 = vld [vmem:[#allocation16 + $0xb8] sm:$0xf]
    %v5144 = vld [vmem:[#allocation16 + $0xbc] sm:$0xf]
    %v5145 = vld [vmem:[#allocation16 + $0xc0] sm:$0xf]
    %v5146 = vld [vmem:[#allocation16 + $0xc4] sm:$0xf]
    %v5147 = vld [vmem:[#allocation16 + $0xc8] sm:$0xf]
    %v5148 = vld [vmem:[#allocation16 + $0xcc] sm:$0xf]
    %v5149 = vld [vmem:[#allocation16 + $0xd0] sm:$0xf]
    %v5150 = vld [vmem:[#allocation16 + $0xd4] sm:$0xf]
    %v5151 = vld [vmem:[#allocation16 + $0xd8] sm:$0xf]
    %v5152 = vld [vmem:[#allocation16 + $0xdc] sm:$0xf]
    %v5153 = vld [vmem:[#allocation16 + $0xe0] sm:$0xf]
    %v5154 = vld [vmem:[#allocation16 + $0xe4] sm:$0xf]
    %v5155 = vld [vmem:[#allocation16 + $0xe8] sm:$0xf]
    %v5156 = vld [vmem:[#allocation16 + $0xec] sm:$0xf]
    %v5157 = vld [vmem:[#allocation16 + $0xf0] sm:$0xf]
    %v5158 = vld [vmem:[#allocation16 + $0xf4] sm:$0xf]
    %v5159 = vld [vmem:[#allocation16 + $0xf8] sm:$0xf]
    %v5160 = vld [vmem:[#allocation16 + $0xfc] sm:$0xf]
    %v5161 = vld [vmem:[#allocation16 + $0x100] sm:$0xf]
    %v5162 = vld [vmem:[#allocation16 + $0x104] sm:$0xf]
    %v5163 = vld [vmem:[#allocation16 + $0x108] sm:$0xf]
    %v5164 = vld [vmem:[#allocation16 + $0x10c] sm:$0xf]
    %v5165 = vld [vmem:[#allocation16 + $0x110] sm:$0xf]
    %v5166 = vld [vmem:[#allocation16 + $0x114] sm:$0xf]
    %v5167 = vld [vmem:[#allocation16 + $0x118] sm:$0xf]
    %v5168 = vld [vmem:[#allocation16 + $0x11c] sm:$0xf]
    %v5169 = vld [vmem:[#allocation17] sm:$0x1]
    %v5171 = vlaneseq
    %v5172 = vshrl.u32 %v5171, 7
    %v5173 = vsub.s32 0, %v5172
    %v5174 = vrot.slane %v5169, %v5173
    %v5248 = vunpack.c.l.b16 %v5097
    %v5249 = vunpack.c.l.b16 %v5098
    %v5250 = vunpack.c.l.b16 %v5099
    %v5251 = vunpack.c.l.b16 %v5100
    %v5252 = vunpack.c.l.b16 %v5101
    %v5253 = vunpack.c.l.b16 %v5102
    %v5254 = vunpack.c.l.b16 %v5103
    %v5255 = vunpack.c.l.b16 %v5104
    %v5256 = vunpack.c.l.b16 %v5105
    %v5257 = vunpack.c.l.b16 %v5106
    %v5258 = vunpack.c.l.b16 %v5107
    %v5259 = vunpack.c.l.b16 %v5108
    %v5260 = vunpack.c.l.b16 %v5109
    %v5261 = vunpack.c.l.b16 %v5110
    %v5262 = vunpack.c.l.b16 %v5111
    %v5263 = vunpack.c.l.b16 %v5112
    %v5264 = vunpack.c.l.b16 %v5113
    %v5265 = vunpack.c.l.b16 %v5114
    %v5266 = vunpack.c.l.b16 %v5115
    %v5267 = vunpack.c.l.b16 %v5116
    %v5268 = vunpack.c.l.b16 %v5117
    %v5269 = vunpack.c.l.b16 %v5118
    %v5270 = vunpack.c.l.b16 %v5119
    %v5271 = vunpack.c.l.b16 %v5120
    %v5272 = vunpack.c.l.b16 %v5121
    %v5273 = vunpack.c.l.b16 %v5122
    %v5274 = vunpack.c.l.b16 %v5123
    %v5275 = vunpack.c.l.b16 %v5124
    %v5276 = vunpack.c.l.b16 %v5125
    %v5277 = vunpack.c.l.b16 %v5126
    %v5278 = vunpack.c.l.b16 %v5127
    %v5279 = vunpack.c.l.b16 %v5128
    %v5280 = vunpack.c.l.b16 %v5129
    %v5281 = vunpack.c.l.b16 %v5130
    %v5282 = vunpack.c.l.b16 %v5131
    %v5283 = vunpack.c.l.b16 %v5132
    %v5284 = vunpack.c.l.b16 %v5133
    %v5285 = vunpack.c.l.b16 %v5134
    %v5286 = vunpack.c.l.b16 %v5135
    %v5287 = vunpack.c.l.b16 %v5136
    %v5288 = vunpack.c.l.b16 %v5137
    %v5289 = vunpack.c.l.b16 %v5138
    %v5290 = vunpack.c.l.b16 %v5139
    %v5291 = vunpack.c.l.b16 %v5140
    %v5292 = vunpack.c.l.b16 %v5141
    %v5293 = vunpack.c.l.b16 %v5142
    %v5294 = vunpack.c.l.b16 %v5143
    %v5295 = vunpack.c.l.b16 %v5144
    %v5296 = vunpack.c.l.b16 %v5145
    %v5297 = vunpack.c.l.b16 %v5146
    %v5298 = vunpack.c.l.b16 %v5147
    %v5299 = vunpack.c.l.b16 %v5148
    %v5300 = vunpack.c.l.b16 %v5149
    %v5301 = vunpack.c.l.b16 %v5150
    %v5302 = vunpack.c.l.b16 %v5151
    %v5303 = vunpack.c.l.b16 %v5152
    %v5304 = vunpack.c.l.b16 %v5153
    %v5305 = vunpack.c.l.b16 %v5154
    %v5306 = vunpack.c.l.b16 %v5155
    %v5307 = vunpack.c.l.b16 %v5156
    %v5308 = vunpack.c.l.b16 %v5157
    %v5309 = vunpack.c.l.b16 %v5158
    %v5310 = vunpack.c.l.b16 %v5159
    %v5311 = vunpack.c.l.b16 %v5160
    %v5312 = vunpack.c.l.b16 %v5161
    %v5313 = vunpack.c.l.b16 %v5162
    %v5314 = vunpack.c.l.b16 %v5163
    %v5315 = vunpack.c.l.b16 %v5164
    %v5316 = vunpack.c.l.b16 %v5165
    %v5317 = vunpack.c.l.b16 %v5166
    %v5318 = vunpack.c.l.b16 %v5167
    %v5319 = vunpack.c.l.b16 %v5168
    %v5320 = vpack.c.b16 %v5249, %v5248
    %v5321 = vpack.c.b16 %v5251, %v5250
    %v5322 = vpack.c.b16 %v5253, %v5252
    %v5323 = vpack.c.b16 %v5255, %v5254
    %v5324 = vpack.c.b16 %v5257, %v5256
    %v5325 = vpack.c.b16 %v5259, %v5258
    %v5326 = vpack.c.b16 %v5261, %v5260
    %v5327 = vpack.c.b16 %v5263, %v5262
    %v5328 = vpack.c.b16 %v5265, %v5264
    %v5329 = vpack.c.b16 %v5267, %v5266
    %v5330 = vpack.c.b16 %v5269, %v5268
    %v5331 = vpack.c.b16 %v5271, %v5270
    %v5332 = vpack.c.b16 %v5273, %v5272
    %v5333 = vpack.c.b16 %v5275, %v5274
    %v5334 = vpack.c.b16 %v5277, %v5276
    %v5335 = vpack.c.b16 %v5279, %v5278
    %v5336 = vpack.c.b16 %v5281, %v5280
    %v5337 = vpack.c.b16 %v5283, %v5282
    %v5338 = vpack.c.b16 %v5285, %v5284
    %v5339 = vpack.c.b16 %v5287, %v5286
    %v5340 = vpack.c.b16 %v5289, %v5288
    %v5341 = vpack.c.b16 %v5291, %v5290
    %v5342 = vpack.c.b16 %v5293, %v5292
    %v5343 = vpack.c.b16 %v5295, %v5294
    %v5344 = vpack.c.b16 %v5297, %v5296
    %v5345 = vpack.c.b16 %v5299, %v5298
    %v5346 = vpack.c.b16 %v5301, %v5300
    %v5347 = vpack.c.b16 %v5303, %v5302
    %v5348 = vpack.c.b16 %v5305, %v5304
    %v5349 = vpack.c.b16 %v5307, %v5306
    %v5350 = vpack.c.b16 %v5309, %v5308
    %v5351 = vpack.c.b16 %v5311, %v5310
    %v5352 = vpack.c.b16 %v5313, %v5312
    %v5353 = vpack.c.b16 %v5315, %v5314
    %v5354 = vpack.c.b16 %v5317, %v5316
    %v5355 = vpack.c.b16 %v5319, %v5318
    %vm5392 = vcmask 523264
    %v5394 = vsel %vm5392, %v5091, 0
    %v5397 = vsel %vm5392, %v5096, 0
    %5399 = vmatprep.subr.bf16.mxu0 0
    %5400 = vmatpush1.bf16.msra.mxu0 %v5320
    %5401 = vmatprep.subr.bf16.mxu0 0
    %5402 = vmatpush1.bf16.msra.mxu0 %v5321
    %5403 = vmatprep.subr.bf16.mxu0 0
    %5404 = vmatpush1.bf16.msra.mxu0 %v5322
    %5405 = vmatprep.subr.bf16.mxu0 0
    %5406 = vmatpush1.bf16.msra.mxu0 %v5323
    %5407 = vmatprep.subr.bf16.mxu0 0
    %5408 = vmatpush1.bf16.msra.mxu0 %v5324
    %5409 = vmatprep.subr.bf16.mxu0 0
    %5410 = vmatpush1.bf16.msra.mxu0 %v5325
    %5411 = vmatprep.subr.bf16.mxu0 0
    %5412 = vmatpush1.bf16.msra.mxu0 %v5326
    %5413 = vmatprep.subr.bf16.mxu0 0
    %5414 = vmatpush1.bf16.msra.mxu0 %v5327
    %5415 = vmatprep.subr.bf16.mxu0 0
    %5416 = vmatpush1.bf16.msra.mxu0 %v5328
    %5417 = vmatprep.subr.bf16.mxu0 0
    %5418 = vmatpush1.bf16.msra.mxu0 %v5329
    %5419 = vmatprep.subr.bf16.mxu0 0
    %5420 = vmatpush1.bf16.msra.mxu0 %v5330
    %5421 = vmatprep.subr.bf16.mxu0 0
    %5422 = vmatpush1.bf16.msra.mxu0 %v5331
    %5423 = vmatprep.subr.bf16.mxu0 0
    %5424 = vmatpush1.bf16.msra.mxu0 %v5332
    %5425 = vmatprep.subr.bf16.mxu0 0
    %5426 = vmatpush1.bf16.msra.mxu0 %v5333
    %5427 = vmatprep.subr.bf16.mxu0 0
    %5428 = vmatpush1.bf16.msra.mxu0 %v5334
    %5429 = vmatprep.subr.bf16.mxu0 0
    %5430 = vmatpush1.bf16.msra.mxu0 %v5335
    %5431 = vmatprep.mubr.bf16.mxu0 %v5088
    %5432 = vmatmul.mubr.bf16.gmra.mrb[0].mxu0 %v5087
    %v5433 = vpop.f32.mrb[0].mxu0
    %v5434 = vadd.f32 %v5174, %v5433
    %v5435 = vpop.f32.mrb[0].mxu0
    %v5436 = vpop.f32.mrb[0].mxu0
    %v5437 = vadd.f32 %v5174, %v5436
    %v5438 = vpop.f32.mrb[0].mxu0
    %5439 = vmatprep.mubr.bf16.mxu0 %v5093
    %5440 = vmatmul.mubr.bf16.gmra.mrb[0].mxu0 %v5092
    %v5441 = vpop.f32.mrb[0].mxu0
    %v5442 = vadd.f32 %v5174, %v5441
    %v5443 = vpop.f32.mrb[0].mxu0
    %v5444 = vpop.f32.mrb[0].mxu0
    %v5445 = vadd.f32 %v5174, %v5444
    %v5446 = vpop.f32.mrb[0].mxu0
    %5447 = vdwg.mxu0
    %5448 = vmatprep.subr.bf16.mxu0 0
    %5449 = vmatpush1.bf16.msra.mxu0 %v5336
    %5450 = vmatprep.subr.bf16.mxu0 0
    %5451 = vmatpush1.bf16.msra.mxu0 %v5337
    %5452 = vmatprep.subr.bf16.mxu0 0
    %5453 = vmatpush1.bf16.msra.mxu0 %v5338
    %5454 = vmatprep.subr.bf16.mxu0 0
    %5455 = vmatpush1.bf16.msra.mxu0 %v5339
    %5456 = vmatprep.subr.bf16.mxu0 0
    %5457 = vmatpush1.bf16.msra.mxu0 %v5340
    %5458 = vmatprep.subr.bf16.mxu0 0
    %5459 = vmatpush1.bf16.msra.mxu0 %v5341
    %5460 = vmatprep.subr.bf16.mxu0 0
    %5461 = vmatpush1.bf16.msra.mxu0 %v5342
    %5462 = vmatprep.subr.bf16.mxu0 0
    %5463 = vmatpush1.bf16.msra.mxu0 %v5343
    %5464 = vmatprep.subr.bf16.mxu0 0
    %5465 = vmatpush1.bf16.msra.mxu0 %v5344
    %5466 = vmatprep.subr.bf16.mxu0 0
    %5467 = vmatpush1.bf16.msra.mxu0 %v5345
    %5468 = vmatprep.subr.bf16.mxu0 0
    %5469 = vmatpush1.bf16.msra.mxu0 %v5346
    %5470 = vmatprep.subr.bf16.mxu0 0
    %5471 = vmatpush1.bf16.msra.mxu0 %v5347
    %5472 = vmatprep.subr.bf16.mxu0 0
    %5473 = vmatpush1.bf16.msra.mxu0 %v5348
    %5474 = vmatprep.subr.bf16.mxu0 0
    %5475 = vmatpush1.bf16.msra.mxu0 %v5349
    %5476 = vmatprep.subr.bf16.mxu0 0
    %5477 = vmatpush1.bf16.msra.mxu0 %v5350
    %5478 = vmatprep.subr.bf16.mxu0 0
    %5479 = vmatpush1.bf16.msra.mxu0 %v5351
    %5480 = vmatprep.mubr.bf16.mxu0 %v5090
    %5481 = vmatmul.mubr.bf16.gmra.mrb[0].mxu0 %v5089
    %v5482 = vpop.f32.mrb[0].mxu0
    %v5483 = vadd.f32 %v5434, %v5482
    %v5484 = vpop.f32.mrb[0].mxu0
    %v5485 = vpop.f32.mrb[0].mxu0
    %v5486 = vadd.f32 %v5437, %v5485
    %v5487 = vpop.f32.mrb[0].mxu0
    %5488 = vmatprep.mubr.bf16.mxu0 %v5095
    %5489 = vmatmul.mubr.bf16.gmra.mrb[0].mxu0 %v5094
    %v5490 = vpop.f32.mrb[0].mxu0
    %v5491 = vadd.f32 %v5442, %v5490
    %v5492 = vpop.f32.mrb[0].mxu0
    %v5493 = vpop.f32.mrb[0].mxu0
    %v5494 = vadd.f32 %v5445, %v5493
    %v5495 = vpop.f32.mrb[0].mxu0
    %5496 = vdwg.mxu0
    %5497 = vmatprep.subr.bf16.mxu0 0
    %5498 = vmatpush1.bf16.msra.mxu0 %v5352
    %5499 = vmatprep.subr.bf16.mxu0 0
    %5500 = vmatpush1.bf16.msra.mxu0 %v5353
    %5501 = vmatprep.subr.bf16.mxu0 0
    %5502 = vmatpush1.bf16.msra.mxu0 %v5354
    %5503 = vmatprep.subr.bf16.mxu0 0
    %5504 = vmatpush1.bf16.msra.mxu0 %v5355
    %5505 = vmatprep.subr.bf16.mxu0 0
    %5506 = vmatpush1.bf16.msra.mxu0 0
    %5507 = vmatprep.subr.bf16.mxu0 0
    %5508 = vmatpush1.bf16.msra.mxu0 0
    %5509 = vmatprep.subr.bf16.mxu0 0
    %5510 = vmatpush1.bf16.msra.mxu0 0
    %5511 = vmatprep.subr.bf16.mxu0 0
    %5512 = vmatpush1.bf16.msra.mxu0 0
    %5513 = vmatprep.subr.bf16.mxu0 0
    %5514 = vmatpush1.bf16.msra.mxu0 0
    %5515 = vmatprep.subr.bf16.mxu0 0
    %5516 = vmatpush1.bf16.msra.mxu0 0
    %5517 = vmatprep.subr.bf16.mxu0 0
    %5518 = vmatpush1.bf16.msra.mxu0 0
    %5519 = vmatprep.subr.bf16.mxu0 0
    %5520 = vmatpush1.bf16.msra.mxu0 0
    %5521 = vmatprep.subr.bf16.mxu0 0
    %5522 = vmatpush1.bf16.msra.mxu0 0
    %5523 = vmatprep.subr.bf16.mxu0 0
    %5524 = vmatpush1.bf16.msra.mxu0 0
    %5525 = vmatprep.subr.bf16.mxu0 0
    %5526 = vmatpush1.bf16.msra.mxu0 0
    %5527 = vmatprep.subr.bf16.mxu0 0
    %5528 = vmatpush1.bf16.msra.mxu0 0
    %5529 = vmatprep.mubr.bf16.mxu0 0
    %5530 = vmatmul.mubr.bf16.gmra.mrb[0].mxu0 %v5394
    %v5531 = vpop.f32.mrb[0].mxu0
    %v5532 = vadd.f32 %v5483, %v5531
    %v5533 = vpop.f32.mrb[0].mxu0
    %v5534 = vpop.f32.mrb[0].mxu0
    %v5535 = vadd.f32 %v5486, %v5534
    %v5536 = vpop.f32.mrb[0].mxu0
    %5537 = vmatprep.mubr.bf16.mxu0 0
    %5538 = vmatmul.mubr.bf16.gmra.mrb[0].mxu0 %v5397
    %v5539 = vpop.f32.mrb[0].mxu0
    %v5540 = vadd.f32 %v5491, %v5539
    %v5541 = vpop.f32.mrb[0].mxu0
    %v5542 = vpop.f32.mrb[0].mxu0
    %v5543 = vadd.f32 %v5494, %v5542
    %v5544 = vpop.f32.mrb[0].mxu0
    %5545 = vdwg.mxu0
    %v5546 = vmax.f32 %v5532, 0.0
    %v5547 = vmax.f32 %v5535, 0.0
    %v5548 = vmax.f32 %v5540, 0.0
    %v5549 = vmax.f32 %v5543, 0.0
    %v5554 = vcombine.high %v5546, %v5546
    %v5555 = vcombine.high %v5547, %v5547
    %v5556 = vcombine.high %v5548, %v5548
    %v5557 = vcombine.high %v5549, %v5549
    %v5562 = vmax.f32 %v5546, %v5554
    %v5563 = vmax.f32 %v5547, %v5555
    %v5564 = vmax.f32 %v5548, %v5556
    %v5565 = vmax.f32 %v5549, %v5557
    %v5571 = vunpack.c.l.s4 1983009808
    %v5572 = vunpack.c.0.s8 %v5571
    %v5573 = vlaneseq
    %v5574 = vshrl.u32 %v5573, 7
    %v5575 = vsub.s32 %v5572, %v5574
    %v5576 = vrot.slane %v5562, %v5575
    %v5577 = vcombine.high %v5576, %v5576
    %v5579 = vunpack.c.l.s4 1983009808
    %v5580 = vunpack.c.0.s8 %v5579
    %v5581 = vlaneseq
    %v5582 = vshrl.u32 %v5581, 7
    %v5583 = vsub.s32 %v5580, %v5582
    %v5584 = vrot.slane %v5563, %v5583
    %v5585 = vcombine.high %v5584, %v5584
    %v5587 = vunpack.c.l.s4 1983009808
    %v5588 = vunpack.c.0.s8 %v5587
    %v5589 = vlaneseq
    %v5590 = vshrl.u32 %v5589, 7
    %v5591 = vsub.s32 %v5588, %v5590
    %v5592 = vrot.slane %v5564, %v5591
    %v5593 = vcombine.high %v5592, %v5592
    %v5595 = vunpack.c.l.s4 1983009808
    %v5596 = vunpack.c.0.s8 %v5595
    %v5597 = vlaneseq
    %v5598 = vshrl.u32 %v5597, 7
    %v5599 = vsub.s32 %v5596, %v5598
    %v5600 = vrot.slane %v5565, %v5599
    %v5601 = vcombine.high %v5600, %v5600
    %v5610 = vrot.slane %v5576, 7
    %v5611 = vrot.slane %v5610, 2
    %v5612 = vrot.slane %v5577, 7
    %v5613 = vrot.slane %v5612, 2
    %v5614 = vrot.slane %v5584, 7
    %v5615 = vrot.slane %v5614, 2
    %v5616 = vrot.slane %v5585, 7
    %v5617 = vrot.slane %v5616, 2
    %v5618 = vrot.slane %v5592, 7
    %v5619 = vrot.slane %v5618, 2
    %v5620 = vrot.slane %v5593, 7
    %v5621 = vrot.slane %v5620, 2
    %v5622 = vrot.slane %v5600, 7
    %v5623 = vrot.slane %v5622, 2
    %v5624 = vrot.slane %v5601, 7
    %v5625 = vrot.slane %v5624, 2
    %v5634 = vmax.f32 %v5576, %v5611
    %v5635 = vmax.f32 %v5577, %v5613
    %v5636 = vmax.f32 %v5584, %v5615
    %v5637 = vmax.f32 %v5585, %v5617
    %v5638 = vmax.f32 %v5592, %v5619
    %v5639 = vmax.f32 %v5593, %v5621
    %v5640 = vmax.f32 %v5600, %v5623
    %v5641 = vmax.f32 %v5601, %v5625
    %v5642 = vld [vmem:[#allocation8] sm:$0x3]
    %v5645 = vlaneseq
    %v5646 = vshrl.u32 %v5645, 7
    %v5647 = vsub.s32 0, %v5646
    %v5648 = vrot.slane %v5634, %v5647
    %v5649 = vlaneseq
    %v5650 = vshrl.u32 %v5649, 7
    %v5651 = vsub.s32 0, %v5650
    %v5652 = vrot.slane %v5638, %v5651
    %v5653 = vsel %vm2838, %v5652, %v5648
    %v5657 = vlaneseq
    %v5658 = vshrl.u32 %v5657, 7
    %v5659 = vsub.s32 0, %v5658
    %v5660 = vrot.slane %v5635, %v5659
    %v5661 = vlaneseq
    %v5662 = vshrl.u32 %v5661, 7
    %v5663 = vsub.s32 0, %v5662
    %v5664 = vrot.slane %v5639, %v5663
    %v5665 = vsel %vm2838, %v5664, %v5660
    %v5669 = vlaneseq
    %v5670 = vshrl.u32 %v5669, 7
    %v5671 = vsub.s32 0, %v5670
    %v5672 = vrot.slane %v5636, %v5671
    %v5673 = vlaneseq
    %v5674 = vshrl.u32 %v5673, 7
    %v5675 = vsub.s32 0, %v5674
    %v5676 = vrot.slane %v5640, %v5675
    %v5677 = vsel %vm2838, %v5676, %v5672
    %v5681 = vlaneseq
    %v5682 = vshrl.u32 %v5681, 7
    %v5683 = vsub.s32 0, %v5682
    %v5684 = vrot.slane %v5637, %v5683
    %v5685 = vlaneseq
    %v5686 = vshrl.u32 %v5685, 7
    %v5687 = vsub.s32 0, %v5686
    %v5688 = vrot.slane %v5641, %v5687
    %v5689 = vsel %vm2838, %v5688, %v5684
    %v5691 = vpack.c.bf16 %v5653, %v5653
    %v5692 = vpack.c.bf16 %v5665, %v5665
    %v5693 = vpack.c.bf16 %v5677, %v5677
    %v5694 = vpack.c.bf16 %v5689, %v5689
    %v5695 = vpack.c.bf16 %v5642, %v5642
    %v5696 = vld [vmem:[#allocation19] sm:$0xf]
    %v5697 = vld [vmem:[#allocation19 + $0x4] sm:$0xf]
    %v5698 = vld [vmem:[#allocation19 + $0x8] sm:$0xf]
    %v5699 = vld [vmem:[#allocation19 + $0xc] sm:$0xf]
    %v5700 = vld [vmem:[#allocation19 + $0x10] sm:$0xf]
    %v5701 = vld [vmem:[#allocation19 + $0x14] sm:$0xf]
    %v5702 = vld [vmem:[#allocation19 + $0x18] sm:$0xf]
    %v5703 = vld [vmem:[#allocation19 + $0x1c] sm:$0xf]
    %v5704 = vld [vmem:[#allocation19 + $0x20] sm:$0xf]
    %v5705 = vld [vmem:[#allocation19 + $0x24] sm:$0xf]
    %v5706 = vld [vmem:[#allocation19 + $0x28] sm:$0xf]
    %v5707 = vld [vmem:[#allocation19 + $0x2c] sm:$0xf]
    %v5708 = vld [vmem:[#allocation19 + $0x30] sm:$0xf]
    %v5709 = vld [vmem:[#allocation19 + $0x34] sm:$0xf]
    %v5710 = vld [vmem:[#allocation19 + $0x38] sm:$0xf]
    %v5711 = vld [vmem:[#allocation19 + $0x3c] sm:$0xf]
    %v5712 = vld [vmem:[#allocation19 + $0x40] sm:$0xf]
    %v5713 = vld [vmem:[#allocation19 + $0x44] sm:$0xf]
    %v5714 = vld [vmem:[#allocation19 + $0x48] sm:$0xf]
    %v5715 = vld [vmem:[#allocation19 + $0x4c] sm:$0xf]
    %v5716 = vld [vmem:[#allocation19 + $0x50] sm:$0xf]
    %v5717 = vld [vmem:[#allocation19 + $0x54] sm:$0xf]
    %v5718 = vld [vmem:[#allocation19 + $0x58] sm:$0xf]
    %v5719 = vld [vmem:[#allocation19 + $0x5c] sm:$0xf]
    %v5720 = vld [vmem:[#allocation19 + $0x60] sm:$0xf]
    %v5721 = vld [vmem:[#allocation19 + $0x64] sm:$0xf]
    %v5722 = vld [vmem:[#allocation19 + $0x68] sm:$0xf]
    %v5723 = vld [vmem:[#allocation19 + $0x6c] sm:$0xf]
    %v5724 = vld [vmem:[#allocation19 + $0x70] sm:$0xf]
    %v5725 = vld [vmem:[#allocation19 + $0x74] sm:$0xf]
    %v5726 = vld [vmem:[#allocation19 + $0x78] sm:$0xf]
    %v5727 = vld [vmem:[#allocation19 + $0x7c] sm:$0xf]
    %v5728 = vld [vmem:[#allocation19 + $0x80] sm:$0xf]
    %v5729 = vld [vmem:[#allocation19 + $0x84] sm:$0xf]
    %v5730 = vld [vmem:[#allocation19 + $0x88] sm:$0xf]
    %v5731 = vld [vmem:[#allocation19 + $0x8c] sm:$0xf]
    %v5732 = vld [vmem:[#allocation19 + $0x90] sm:$0xf]
    %v5733 = vld [vmem:[#allocation19 + $0x94] sm:$0xf]
    %v5734 = vld [vmem:[#allocation19 + $0x98] sm:$0xf]
    %v5735 = vld [vmem:[#allocation19 + $0x9c] sm:$0xf]
    %v5736 = vld [vmem:[#allocation19 + $0xa0] sm:$0xf]
    %v5737 = vld [vmem:[#allocation19 + $0xa4] sm:$0xf]
    %v5738 = vld [vmem:[#allocation19 + $0xa8] sm:$0xf]
    %v5739 = vld [vmem:[#allocation19 + $0xac] sm:$0xf]
    %v5740 = vld [vmem:[#allocation19 + $0xb0] sm:$0xf]
    %v5741 = vld [vmem:[#allocation19 + $0xb4] sm:$0xf]
    %v5742 = vld [vmem:[#allocation19 + $0xb8] sm:$0xf]
    %v5743 = vld [vmem:[#allocation19 + $0xbc] sm:$0xf]
    %v5744 = vld [vmem:[#allocation19 + $0xc0] sm:$0xf]
    %v5745 = vld [vmem:[#allocation19 + $0xc4] sm:$0xf]
    %v5746 = vld [vmem:[#allocation19 + $0xc8] sm:$0xf]
    %v5747 = vld [vmem:[#allocation19 + $0xcc] sm:$0xf]
    %v5748 = vld [vmem:[#allocation19 + $0xd0] sm:$0xf]
    %v5749 = vld [vmem:[#allocation19 + $0xd4] sm:$0xf]
    %v5750 = vld [vmem:[#allocation19 + $0xd8] sm:$0xf]
    %v5751 = vld [vmem:[#allocation19 + $0xdc] sm:$0xf]
    %v5752 = vld [vmem:[#allocation19 + $0xe0] sm:$0xf]
    %v5753 = vld [vmem:[#allocation19 + $0xe4] sm:$0xf]
    %v5754 = vld [vmem:[#allocation19 + $0xe8] sm:$0xf]
    %v5755 = vld [vmem:[#allocation19 + $0xec] sm:$0xf]
    %v5756 = vld [vmem:[#allocation19 + $0xf0] sm:$0xf]
    %v5757 = vld [vmem:[#allocation19 + $0xf4] sm:$0xf]
    %v5758 = vld [vmem:[#allocation19 + $0xf8] sm:$0xf]
    %v5759 = vld [vmem:[#allocation19 + $0xfc] sm:$0xf]
    %v5760 = vld [vmem:[#allocation19 + $0x100] sm:$0xf]
    %v5761 = vld [vmem:[#allocation19 + $0x104] sm:$0xf]
    %v5762 = vld [vmem:[#allocation19 + $0x108] sm:$0xf]
    %v5763 = vld [vmem:[#allocation19 + $0x10c] sm:$0xf]
    %v5764 = vld [vmem:[#allocation19 + $0x110] sm:$0xf]
    %v5765 = vld [vmem:[#allocation19 + $0x114] sm:$0xf]
    %v5766 = vld [vmem:[#allocation19 + $0x118] sm:$0xf]
    %v5767 = vld [vmem:[#allocation19 + $0x11c] sm:$0xf]
    %v5768 = vld [vmem:[#allocation19 + $0x120] sm:$0xf]
    %v5769 = vld [vmem:[#allocation19 + $0x124] sm:$0xf]
    %v5770 = vld [vmem:[#allocation19 + $0x128] sm:$0xf]
    %v5771 = vld [vmem:[#allocation19 + $0x12c] sm:$0xf]
    %v5772 = vld [vmem:[#allocation19 + $0x130] sm:$0xf]
    %v5773 = vld [vmem:[#allocation19 + $0x134] sm:$0xf]
    %v5774 = vld [vmem:[#allocation19 + $0x138] sm:$0xf]
    %v5775 = vld [vmem:[#allocation19 + $0x13c] sm:$0xf]
    %v5776 = vld [vmem:[#allocation20] sm:$0x1]
    %v5778 = vlaneseq
    %v5779 = vshrl.u32 %v5778, 7
    %v5780 = vsub.s32 0, %v5779
    %v5781 = vrot.slane %v5776, %v5780
    %v5863 = vunpack.c.l.b16 %v5696
    %v5864 = vunpack.c.l.b16 %v5697
    %v5865 = vunpack.c.l.b16 %v5698
    %v5866 = vunpack.c.l.b16 %v5699
    %v5867 = vunpack.c.l.b16 %v5700
    %v5868 = vunpack.c.l.b16 %v5701
    %v5869 = vunpack.c.l.b16 %v5702
    %v5870 = vunpack.c.l.b16 %v5703
    %v5871 = vunpack.c.l.b16 %v5704
    %v5872 = vunpack.c.l.b16 %v5705
    %v5873 = vunpack.c.l.b16 %v5706
    %v5874 = vunpack.c.l.b16 %v5707
    %v5875 = vunpack.c.l.b16 %v5708
    %v5876 = vunpack.c.l.b16 %v5709
    %v5877 = vunpack.c.l.b16 %v5710
    %v5878 = vunpack.c.l.b16 %v5711
    %v5879 = vunpack.c.l.b16 %v5712
    %v5880 = vunpack.c.l.b16 %v5713
    %v5881 = vunpack.c.l.b16 %v5714
    %v5882 = vunpack.c.l.b16 %v5715
    %v5883 = vunpack.c.l.b16 %v5716
    %v5884 = vunpack.c.l.b16 %v5717
    %v5885 = vunpack.c.l.b16 %v5718
    %v5886 = vunpack.c.l.b16 %v5719
    %v5887 = vunpack.c.l.b16 %v5720
    %v5888 = vunpack.c.l.b16 %v5721
    %v5889 = vunpack.c.l.b16 %v5722
    %v5890 = vunpack.c.l.b16 %v5723
    %v5891 = vunpack.c.l.b16 %v5724
    %v5892 = vunpack.c.l.b16 %v5725
    %v5893 = vunpack.c.l.b16 %v5726
    %v5894 = vunpack.c.l.b16 %v5727
    %v5895 = vunpack.c.l.b16 %v5728
    %v5896 = vunpack.c.l.b16 %v5729
    %v5897 = vunpack.c.l.b16 %v5730
    %v5898 = vunpack.c.l.b16 %v5731
    %v5899 = vunpack.c.l.b16 %v5732
    %v5900 = vunpack.c.l.b16 %v5733
    %v5901 = vunpack.c.l.b16 %v5734
    %v5902 = vunpack.c.l.b16 %v5735
    %v5903 = vunpack.c.l.b16 %v5736
    %v5904 = vunpack.c.l.b16 %v5737
    %v5905 = vunpack.c.l.b16 %v5738
    %v5906 = vunpack.c.l.b16 %v5739
    %v5907 = vunpack.c.l.b16 %v5740
    %v5908 = vunpack.c.l.b16 %v5741
    %v5909 = vunpack.c.l.b16 %v5742
    %v5910 = vunpack.c.l.b16 %v5743
    %v5911 = vunpack.c.l.b16 %v5744
    %v5912 = vunpack.c.l.b16 %v5745
    %v5913 = vunpack.c.l.b16 %v5746
    %v5914 = vunpack.c.l.b16 %v5747
    %v5915 = vunpack.c.l.b16 %v5748
    %v5916 = vunpack.c.l.b16 %v5749
    %v5917 = vunpack.c.l.b16 %v5750
    %v5918 = vunpack.c.l.b16 %v5751
    %v5919 = vunpack.c.l.b16 %v5752
    %v5920 = vunpack.c.l.b16 %v5753
    %v5921 = vunpack.c.l.b16 %v5754
    %v5922 = vunpack.c.l.b16 %v5755
    %v5923 = vunpack.c.l.b16 %v5756
    %v5924 = vunpack.c.l.b16 %v5757
    %v5925 = vunpack.c.l.b16 %v5758
    %v5926 = vunpack.c.l.b16 %v5759
    %v5927 = vunpack.c.l.b16 %v5760
    %v5928 = vunpack.c.l.b16 %v5761
    %v5929 = vunpack.c.l.b16 %v5762
    %v5930 = vunpack.c.l.b16 %v5763
    %v5931 = vunpack.c.l.b16 %v5764
    %v5932 = vunpack.c.l.b16 %v5765
    %v5933 = vunpack.c.l.b16 %v5766
    %v5934 = vunpack.c.l.b16 %v5767
    %v5935 = vunpack.c.l.b16 %v5768
    %v5936 = vunpack.c.l.b16 %v5769
    %v5937 = vunpack.c.l.b16 %v5770
    %v5938 = vunpack.c.l.b16 %v5771
    %v5939 = vunpack.c.l.b16 %v5772
    %v5940 = vunpack.c.l.b16 %v5773
    %v5941 = vunpack.c.l.b16 %v5774
    %v5942 = vunpack.c.l.b16 %v5775
    %v5943 = vpack.c.b16 %v5864, %v5863
    %v5944 = vpack.c.b16 %v5866, %v5865
    %v5945 = vpack.c.b16 %v5868, %v5867
    %v5946 = vpack.c.b16 %v5870, %v5869
    %v5947 = vpack.c.b16 %v5872, %v5871
    %v5948 = vpack.c.b16 %v5874, %v5873
    %v5949 = vpack.c.b16 %v5876, %v5875
    %v5950 = vpack.c.b16 %v5878, %v5877
    %v5951 = vpack.c.b16 %v5880, %v5879
    %v5952 = vpack.c.b16 %v5882, %v5881
    %v5953 = vpack.c.b16 %v5884, %v5883
    %v5954 = vpack.c.b16 %v5886, %v5885
    %v5955 = vpack.c.b16 %v5888, %v5887
    %v5956 = vpack.c.b16 %v5890, %v5889
    %v5957 = vpack.c.b16 %v5892, %v5891
    %v5958 = vpack.c.b16 %v5894, %v5893
    %v5959 = vpack.c.b16 %v5896, %v5895
    %v5960 = vpack.c.b16 %v5898, %v5897
    %v5961 = vpack.c.b16 %v5900, %v5899
    %v5962 = vpack.c.b16 %v5902, %v5901
    %v5963 = vpack.c.b16 %v5904, %v5903
    %v5964 = vpack.c.b16 %v5906, %v5905
    %v5965 = vpack.c.b16 %v5908, %v5907
    %v5966 = vpack.c.b16 %v5910, %v5909
    %v5967 = vpack.c.b16 %v5912, %v5911
    %v5968 = vpack.c.b16 %v5914, %v5913
    %v5969 = vpack.c.b16 %v5916, %v5915
    %v5970 = vpack.c.b16 %v5918, %v5917
    %v5971 = vpack.c.b16 %v5920, %v5919
    %v5972 = vpack.c.b16 %v5922, %v5921
    %v5973 = vpack.c.b16 %v5924, %v5923
    %v5974 = vpack.c.b16 %v5926, %v5925
    %v5975 = vpack.c.b16 %v5928, %v5927
    %v5976 = vpack.c.b16 %v5930, %v5929
    %v5977 = vpack.c.b16 %v5932, %v5931
    %v5978 = vpack.c.b16 %v5934, %v5933
    %v5979 = vpack.c.b16 %v5936, %v5935
    %v5980 = vpack.c.b16 %v5938, %v5937
    %v5981 = vpack.c.b16 %v5940, %v5939
    %v5982 = vpack.c.b16 %v5942, %v5941
    %6023 = vmatprep.subr.bf16.mxu0 0
    %6024 = vmatpush1.bf16.msra.mxu0 %v5943
    %6025 = vmatprep.subr.bf16.mxu0 0
    %6026 = vmatpush1.bf16.msra.mxu0 %v5944
    %6027 = vmatprep.subr.bf16.mxu0 0
    %6028 = vmatpush1.bf16.msra.mxu0 %v5945
    %6029 = vmatprep.subr.bf16.mxu0 0
    %6030 = vmatpush1.bf16.msra.mxu0 %v5946
    %6031 = vmatprep.subr.bf16.mxu0 0
    %6032 = vmatpush1.bf16.msra.mxu0 %v5947
    %6033 = vmatprep.subr.bf16.mxu0 0
    %6034 = vmatpush1.bf16.msra.mxu0 %v5948
    %6035 = vmatprep.subr.bf16.mxu0 0
    %6036 = vmatpush1.bf16.msra.mxu0 %v5949
    %6037 = vmatprep.subr.bf16.mxu0 0
    %6038 = vmatpush1.bf16.msra.mxu0 %v5950
    %6039 = vmatprep.subr.bf16.mxu0 0
    %6040 = vmatpush1.bf16.msra.mxu0 %v5951
    %6041 = vmatprep.subr.bf16.mxu0 0
    %6042 = vmatpush1.bf16.msra.mxu0 %v5952
    %6043 = vmatprep.subr.bf16.mxu0 0
    %6044 = vmatpush1.bf16.msra.mxu0 %v5953
    %6045 = vmatprep.subr.bf16.mxu0 0
    %6046 = vmatpush1.bf16.msra.mxu0 %v5954
    %6047 = vmatprep.subr.bf16.mxu0 0
    %6048 = vmatpush1.bf16.msra.mxu0 %v5955
    %6049 = vmatprep.subr.bf16.mxu0 0
    %6050 = vmatpush1.bf16.msra.mxu0 %v5956
    %6051 = vmatprep.subr.bf16.mxu0 0
    %6052 = vmatpush1.bf16.msra.mxu0 %v5957
    %6053 = vmatprep.subr.bf16.mxu0 0
    %6054 = vmatpush1.bf16.msra.mxu0 %v5958
    %6055 = vmatprep.mubr.bf16.mxu0 %v5692
    %6056 = vmatmul.mubr.bf16.gmra.mrb[0].mxu0 %v5691
    %v6057 = vpop.f32.mrb[0].mxu0
    %v6058 = vadd.f32 %v5781, %v6057
    %v6059 = vpop.f32.mrb[0].mxu0
    %v6060 = vpop.f32.mrb[0].mxu0
    %v6061 = vpop.f32.mrb[0].mxu0
    %6062 = vdwg.mxu0
    %6063 = vmatprep.subr.bf16.mxu0 0
    %6064 = vmatpush1.bf16.msra.mxu0 %v5959
    %6065 = vmatprep.subr.bf16.mxu0 0
    %6066 = vmatpush1.bf16.msra.mxu0 %v5960
    %6067 = vmatprep.subr.bf16.mxu0 0
    %6068 = vmatpush1.bf16.msra.mxu0 %v5961
    %6069 = vmatprep.subr.bf16.mxu0 0
    %6070 = vmatpush1.bf16.msra.mxu0 %v5962
    %6071 = vmatprep.subr.bf16.mxu0 0
    %6072 = vmatpush1.bf16.msra.mxu0 %v5963
    %6073 = vmatprep.subr.bf16.mxu0 0
    %6074 = vmatpush1.bf16.msra.mxu0 %v5964
    %6075 = vmatprep.subr.bf16.mxu0 0
    %6076 = vmatpush1.bf16.msra.mxu0 %v5965
    %6077 = vmatprep.subr.bf16.mxu0 0
    %6078 = vmatpush1.bf16.msra.mxu0 %v5966
    %6079 = vmatprep.subr.bf16.mxu0 0
    %6080 = vmatpush1.bf16.msra.mxu0 %v5967
    %6081 = vmatprep.subr.bf16.mxu0 0
    %6082 = vmatpush1.bf16.msra.mxu0 %v5968
    %6083 = vmatprep.subr.bf16.mxu0 0
    %6084 = vmatpush1.bf16.msra.mxu0 %v5969
    %6085 = vmatprep.subr.bf16.mxu0 0
    %6086 = vmatpush1.bf16.msra.mxu0 %v5970
    %6087 = vmatprep.subr.bf16.mxu0 0
    %6088 = vmatpush1.bf16.msra.mxu0 %v5971
    %6089 = vmatprep.subr.bf16.mxu0 0
    %6090 = vmatpush1.bf16.msra.mxu0 %v5972
    %6091 = vmatprep.subr.bf16.mxu0 0
    %6092 = vmatpush1.bf16.msra.mxu0 %v5973
    %6093 = vmatprep.subr.bf16.mxu0 0
    %6094 = vmatpush1.bf16.msra.mxu0 %v5974
    %6095 = vmatprep.mubr.bf16.mxu0 %v5694
    %6096 = vmatmul.mubr.bf16.gmra.mrb[0].mxu0 %v5693
    %v6097 = vpop.f32.mrb[0].mxu0
    %v6098 = vadd.f32 %v6058, %v6097
    %v6099 = vpop.f32.mrb[0].mxu0
    %v6100 = vpop.f32.mrb[0].mxu0
    %v6101 = vpop.f32.mrb[0].mxu0
    %6102 = vdwg.mxu0
    %6103 = vmatprep.subr.bf16.mxu0 0
    %6104 = vmatpush1.bf16.msra.mxu0 %v5975
    %6105 = vmatprep.subr.bf16.mxu0 0
    %6106 = vmatpush1.bf16.msra.mxu0 %v5976
    %6107 = vmatprep.subr.bf16.mxu0 0
    %6108 = vmatpush1.bf16.msra.mxu0 %v5977
    %6109 = vmatprep.subr.bf16.mxu0 0
    %6110 = vmatpush1.bf16.msra.mxu0 %v5978
    %6111 = vmatprep.subr.bf16.mxu0 0
    %6112 = vmatpush1.bf16.msra.mxu0 %v5979
    %6113 = vmatprep.subr.bf16.mxu0 0
    %6114 = vmatpush1.bf16.msra.mxu0 %v5980
    %6115 = vmatprep.subr.bf16.mxu0 0
    %6116 = vmatpush1.bf16.msra.mxu0 %v5981
    %6117 = vmatprep.subr.bf16.mxu0 0
    %6118 = vmatpush1.bf16.msra.mxu0 %v5982
    %6119 = vmatprep.subr.bf16.mxu0 0
    %6120 = vmatpush1.bf16.msra.mxu0 0
    %6121 = vmatprep.subr.bf16.mxu0 0
    %6122 = vmatpush1.bf16.msra.mxu0 0
    %6123 = vmatprep.subr.bf16.mxu0 0
    %6124 = vmatpush1.bf16.msra.mxu0 0
    %6125 = vmatprep.subr.bf16.mxu0 0
    %6126 = vmatpush1.bf16.msra.mxu0 0
    %6127 = vmatprep.subr.bf16.mxu0 0
    %6128 = vmatpush1.bf16.msra.mxu0 0
    %6129 = vmatprep.subr.bf16.mxu0 0
    %6130 = vmatpush1.bf16.msra.mxu0 0
    %6131 = vmatprep.subr.bf16.mxu0 0
    %6132 = vmatpush1.bf16.msra.mxu0 0
    %6133 = vmatprep.subr.bf16.mxu0 0
    %6134 = vmatpush1.bf16.msra.mxu0 0
    %6135 = vmatprep.mubr.bf16.mxu0 0
    %6136 = vmatmul.mubr.bf16.gmra.mrb[0].mxu0 %v5695
    %v6137 = vpop.f32.mrb[0].mxu0
    %v6138 = vadd.f32 %v6098, %v6137
    %v6139 = vpop.f32.mrb[0].mxu0
    %v6140 = vpop.f32.mrb[0].mxu0
    %v6141 = vpop.f32.mrb[0].mxu0
    %6142 = vdwg.mxu0
    %v6143 = vmax.f32 %v6138, 0.0
    %v6144 = vpack.c.bf16 %v6143, %v6143
    %v6145 = vld [vmem:[#allocation22] sm:$0xf]
    %v6146 = vld [vmem:[#allocation22 + $0x4] sm:$0xf]
    %v6147 = vld [vmem:[#allocation22 + $0x8] sm:$0xf]
    %v6148 = vld [vmem:[#allocation22 + $0xc] sm:$0xf]
    %v6149 = vld [vmem:[#allocation22 + $0x10] sm:$0xf]
    %v6150 = vld [vmem:[#allocation22 + $0x14] sm:$0xf]
    %v6151 = vld [vmem:[#allocation22 + $0x18] sm:$0xf]
    %v6152 = vld [vmem:[#allocation22 + $0x1c] sm:$0xf]
    %v6153 = vld [vmem:[#allocation4] sm:$0x1]
    %v6155 = vlaneseq
    %v6156 = vshrl.u32 %v6155, 7
    %v6157 = vsub.s32 0, %v6156
    %v6158 = vrot.slane %v6153, %v6157
    %v6168 = vunpack.c.l.b16 %v6145
    %v6169 = vunpack.c.l.b16 %v6146
    %v6170 = vunpack.c.l.b16 %v6147
    %v6171 = vunpack.c.l.b16 %v6148
    %v6172 = vunpack.c.l.b16 %v6149
    %v6173 = vunpack.c.l.b16 %v6150
    %v6174 = vunpack.c.l.b16 %v6151
    %v6175 = vunpack.c.l.b16 %v6152
    %v6176 = vpack.c.b16 %v6169, %v6168
    %v6177 = vpack.c.b16 %v6171, %v6170
    %v6178 = vpack.c.b16 %v6173, %v6172
    %v6179 = vpack.c.b16 %v6175, %v6174
    %v6185 = vsel %vm5392, %v6144, 0
    %6187 = vmatprep.subr.bf16.mxu0 0
    %6188 = vmatpush1.bf16.msra.mxu0 %v6176
    %6189 = vmatprep.subr.bf16.mxu0 0
    %6190 = vmatpush1.bf16.msra.mxu0 %v6177
    %6191 = vmatprep.subr.bf16.mxu0 0
    %6192 = vmatpush1.bf16.msra.mxu0 %v6178
    %6193 = vmatprep.subr.bf16.mxu0 0
    %6194 = vmatpush1.bf16.msra.mxu0 %v6179
    %6195 = vmatprep.subr.bf16.mxu0 0
    %6196 = vmatpush1.bf16.msra.mxu0 0
    %6197 = vmatprep.subr.bf16.mxu0 0
    %6198 = vmatpush1.bf16.msra.mxu0 0
    %6199 = vmatprep.subr.bf16.mxu0 0
    %6200 = vmatpush1.bf16.msra.mxu0 0
    %6201 = vmatprep.subr.bf16.mxu0 0
    %6202 = vmatpush1.bf16.msra.mxu0 0
    %6203 = vmatprep.subr.bf16.mxu0 0
    %6204 = vmatpush1.bf16.msra.mxu0 0
    %6205 = vmatprep.subr.bf16.mxu0 0
    %6206 = vmatpush1.bf16.msra.mxu0 0
    %6207 = vmatprep.subr.bf16.mxu0 0
    %6208 = vmatpush1.bf16.msra.mxu0 0
    %6209 = vmatprep.subr.bf16.mxu0 0
    %6210 = vmatpush1.bf16.msra.mxu0 0
    %6211 = vmatprep.subr.bf16.mxu0 0
    %6212 = vmatpush1.bf16.msra.mxu0 0
    %6213 = vmatprep.subr.bf16.mxu0 0
    %6214 = vmatpush1.bf16.msra.mxu0 0
    %6215 = vmatprep.subr.bf16.mxu0 0
    %6216 = vmatpush1.bf16.msra.mxu0 0
    %6217 = vmatprep.subr.bf16.mxu0 0
    %6218 = vmatpush1.bf16.msra.mxu0 0
    %6219 = vmatprep.mubr.bf16.mxu0 0
    %6220 = vmatmul.mubr.bf16.gmra.mrb[0].mxu0 %v6185
    %v6221 = vpop.f32.mrb[0].mxu0
    %v6222 = vadd.f32 %v6158, %v6221
    %v6223 = vpop.f32.mrb[0].mxu0
    %v6224 = vpop.f32.mrb[0].mxu0
    %v6225 = vpop.f32.mrb[0].mxu0
    %6226 = vdwg.mxu0
    %v6227 = vsub.f32 0.0, %v6222
    %v6228 = vmul.f32 %v6227, 1.442695
    %v6229 = vpow.pop %v6228
    %v6230 = vadd.f32 %v6229, 1.0
    %v6231 = vrcp.pop %v6230
    %v6232 = vmul.f32 1.0, %v6231
    %vm6233 = vcmask 1024
    %6234 = vst.msk [vmem:[#allocation23] sm:$0x3] %vm6233, %v6232
    // Predicated region
    $region94: #{cnn_with_scalars_forward.1} parent=1 // pred_check
      _
    $region95: #{cnn_with_scalars_forward.1} parent=1 // pred_check_branch
      %6236 = sbr.rel (0) target = $region97
    $region96: #{cnn_with_scalars_forward.1} parent=1 // pred_region
      %s6238 = ssub.s32 32, 32
      %6239 = vsyncadd [#allocation7], %s6238
      %s6241 = sshll.u32 [#allocation23], 4
      %s6242 = int_to_ptr.vmem [resolvable:$true] %s6241
      %6244 = dma.vmem_to_hbm [thread:$0]  %s6242, 32, %s12, [#allocation7]
    $region97: #{cnn_with_scalars_forward.1} parent=1 // pred_fallthru
      _
    // Predicated region
    $region98: #{cnn_with_scalars_forward.1} parent=1 // pred_check
      _
    $region99: #{cnn_with_scalars_forward.1} parent=1 // pred_check_branch
      %6246 = sbr.rel (0) target = $region101
    $region100: #{cnn_with_scalars_forward.1} parent=1 // pred_region
      %6247 = dma.done [#allocation7], 32
    $region101: #{cnn_with_scalars_forward.1} parent=1 // pred_fallthru
      _
    %6248 = vsyncpa [#allocation6], 1
    %6249 = vsyncpa [#allocation9], 1
    %6250 = vsyncpa [#allocation12], 1
    %6251 = vsyncpa [#allocation15], 1
    %6252 = vsyncpa [#allocation18], 1
    %6253 = vsyncpa [#allocation21], 1
    %6254 = vsyncpa [#allocation7], 1

</llo_original>
